<compile_context>
chip_gen: v7x
topology: tpu7x:2x2x1
jax: 0.10.0
libtpu: 0.0.40
codegen_flags: <defaults>
</compile_context>

<pallas_src>
from functools import partial

import jax
import jax.numpy as jnp
from jax import lax
from jax.experimental import pallas as pl
from jax.experimental.pallas import tpu as pltpu


def _sum_kw_slabs(r, cout, not_first_col, not_last_col):
    """Combine the three kw result slabs of r (HW, 3*cout) into (HW, cout).

    Slab kw holds, for every flattened pixel p, the contribution of kernel column
    kw evaluated at p's own image column, so the kw=0 / kw=2 slabs are read from
    the +/-1 flattened row and zeroed at the image's left / right edge columns
    (where that tap falls into the zero padding).
    """
    hw = r.shape[0]
    s0 = r[:, 0:cout]                 # kw = 0 (left tap)
    s1 = r[:, cout:2 * cout]          # kw = 1 (center tap)
    s2 = r[:, 2 * cout:3 * cout]      # kw = 2 (right tap)
    zrow = jnp.zeros((1, cout), jnp.float32)
    left = jnp.concatenate([zrow, s0[0:hw - 1, :]], axis=0)    # value from column w-1
    right = jnp.concatenate([s2[1:hw, :], zrow], axis=0)       # value from column w+1
    return (jnp.where(not_first_col, left, 0.0)
            + s1
            + jnp.where(not_last_col, right, 0.0))


def basic_block_kernel(x_ref, w1_ref, b1_ref, w2_ref, b2_ref, out_ref,
                       xs_ref, ys_ref, *, img_w):
    # x_ref  : (1, H*W, Cin)     bf16  input block (also the identity shortcut)
    # w1_ref : (3*Cin, 3*Cout)   bf16  bn1-folded conv1 weights [kh*Cin+ci, kw*Cout+co]
    # b1_ref : (1, Cout)         f32   folded bn1 bias
    # w2_ref : (3*Cout, 3*Cout)  bf16  bn2-folded conv2 weights
    # b2_ref : (1, Cout)         f32   folded bn2 bias
    # out_ref: (1, H*W, Cout)    bf16
    # xs_ref : (H*W, 3*Cin)      bf16  kh-stacked input          (VMEM scratch)
    # ys_ref : (H*W, 3*Cout)     bf16  kh-stacked intermediate   (VMEM scratch)
    hw = out_ref.shape[1]
    cin = x_ref.shape[2]
    cout = out_ref.shape[2]
    w = img_w

    x2 = x_ref[0]                                             # (HW, Cin) bf16

    # Column index of every flattened pixel; edge masks shared by both convs.
    col = lax.broadcasted_iota(jnp.int32, (hw, 1), 0) % w
    not_first_col = col > 0
    not_last_col = col < (w - 1)

    # ---- kh-stacked input scratch (bf16; stores sublane-aligned at multiples of W)
    zin = jnp.zeros((w, cin), jnp.bfloat16)
    xs_ref[:, cin:2 * cin] = x2                               # kh = 1 (same row)
    xs_ref[0:w, 0:cin] = zin                                  # kh = 0, h = 0 border
    xs_ref[w:hw, 0:cin] = x2[0:hw - w, :]                     # kh = 0 (row above)
    xs_ref[0:hw - w, 2 * cin:3 * cin] = x2[w:hw, :]           # kh = 2 (row below)
    xs_ref[hw - w:hw, 2 * cin:3 * cin] = zin                  # kh = 2, h = H-1 border

    # ---- conv1 + folded bn1 + relu: ONE MXU matmul (K = 3*Cin, N = 3*Cout) ----
    r1 = jnp.dot(xs_ref[...], w1_ref[...], preferred_element_type=jnp.float32)
    y1 = _sum_kw_slabs(r1, cout, not_first_col, not_last_col)
    y1 = jnp.maximum(y1 + b1_ref[...], 0.0)
    y1 = y1.astype(jnp.bfloat16)                              # cast once (scratch + MXU)

    # ---- kh-stacked intermediate scratch (bf16) ----
    zout = jnp.zeros((w, cout), jnp.bfloat16)
    ys_ref[:, cout:2 * cout] = y1
    ys_ref[0:w, 0:cout] = zout
    ys_ref[w:hw, 0:cout] = y1[0:hw - w, :]
    ys_ref[0:hw - w, 2 * cout:3 * cout] = y1[w:hw, :]
    ys_ref[hw - w:hw, 2 * cout:3 * cout] = zout

    # ---- conv2 + folded bn2, identity shortcut, relu ----
    r2 = jnp.dot(ys_ref[...], w2_ref[...], preferred_element_type=jnp.float32)
    o = _sum_kw_slabs(r2, cout, not_first_col, not_last_col)
    o = jnp.maximum(o + b2_ref[...] + x2.astype(jnp.float32), 0.0)
    out_ref[...] = o.astype(out_ref.dtype).reshape(1, hw, cout)


def _vmem_limit_bytes(hw, cin, cout):
    bf16, f32 = 2, 4
    need = (
        2 * hw * cin * bf16                                        # 2x input block
        + 2 * hw * cout * bf16                                     # 2x output block
        + 2 * (9 * cin * cout + 9 * cout * cout + 2 * cout) * f32  # weights + biases
        + hw * 3 * cin * bf16 + hw * 3 * cout * bf16               # bf16 scratches
        + 2 * hw * 3 * cout * f32 + 4 * hw * cout * f32            # f32 temporaries
    )
    # Generous headroom for Mosaic-internal scratch, capped so we never claim all of
    # v7x's 64 MiB/TC VMEM (still comfortable on v5e/v6e's 128 MiB).
    return int(min(48 * 1024 * 1024, max(16 * 1024 * 1024, 2 * need)))


def _pallas_basic_block(x2, w1c, b1v, w2c, b2v, *, img_w, single_buffer_weights):
    n, hw, cin = x2.shape
    cout = b1v.shape[-1]

    def wspec(shape):
        # Grid-invariant operands: double-buffering buys nothing, so request a
        # single buffer when the installed JAX supports pipeline_mode.
        if single_buffer_weights:
            return pl.BlockSpec(shape, lambda i: (0,) * len(shape),
                                pipeline_mode=pl.Buffered(1))
        return pl.BlockSpec(shape, lambda i: (0,) * len(shape))

    grid_spec = pltpu.PrefetchScalarGridSpec(
        num_scalar_prefetch=0,
        grid=(n,),
        in_specs=[
            pl.BlockSpec((1, hw, cin), lambda i: (i, 0, 0)),
            wspec((3 * cin, 3 * cout)),
            wspec((1, cout)),
            wspec((3 * cout, 3 * cout)),
            wspec((1, cout)),
        ],
        out_specs=pl.BlockSpec((1, hw, cout), lambda i: (i, 0, 0)),
        scratch_shapes=[
            pltpu.VMEM((hw, 3 * cin), jnp.bfloat16),
            pltpu.VMEM((hw, 3 * cout), jnp.bfloat16),
        ],
    )
    return pl.pallas_call(
        partial(basic_block_kernel, img_w=img_w),
        out_shape=jax.ShapeDtypeStruct((n, hw, cout), jnp.bfloat16),
        grid_spec=grid_spec,
        compiler_params=pltpu.CompilerParams(
            dimension_semantics=("parallel",),
            vmem_limit_bytes=_vmem_limit_bytes(hw, cin, cout),
        ),
    )(x2, w1c, b1v, w2c, b2v)


def _fold_and_pack(w_hwio, scale):
    """Fold the BN scale into the conv weights and pack for the kernel:
    Wcat[kh*Cin + ci, kw*Cout + co] = (w * scale)[kh, kw, ci, co]."""
    cin, cout = w_hwio.shape[2], w_hwio.shape[3]
    wf = w_hwio * scale.reshape(1, 1, 1, cout)
    return jnp.transpose(wf, (0, 2, 1, 3)).reshape(3 * cin, 3 * cout).astype(jnp.bfloat16)


def basic_block_forward_nhwc(x_nhwc, w1, s1, b1, w2, s2, b2):
    """Production entry point: NHWC activations, bf16 kernel I/O, no layout churn."""
    n, h, w, c = x_nhwc.shape
    cout = w1.shape[-1]
    assert c == cout, "identity-shortcut path requires in_planes == planes"
    # TODO(synk): stride != 1 / projection shortcut (1x1 conv + bn) branch not implemented.
    x2 = x_nhwc.astype(jnp.bfloat16).reshape(n, h * w, c)
    w1c = _fold_and_pack(w1, s1)
    w2c = _fold_and_pack(w2, s2)
    b1v = b1.reshape(1, cout).astype(jnp.float32)
    b2v = b2.reshape(1, cout).astype(jnp.float32)
    try:
        out2 = _pallas_basic_block(x2, w1c, b1v, w2c, b2v, img_w=w,
                                   single_buffer_weights=True)
    except Exception:
        # Fallback for JAX versions without BlockSpec(pipeline_mode=...) support.
        out2 = _pallas_basic_block(x2, w1c, b1v, w2c, b2v, img_w=w,
                                   single_buffer_weights=False)
    return out2.reshape(n, h, w, cout)


def basic_block_forward(x_nchw, w1, s1, b1, w2, s2, b2):
    """Module-faithful interface: (N, C, H, W) f32 -> (N, C, H, W) f32.

    Thin adapter around the NHWC/bf16 kernel; a full network should stay in
    NHWC/bf16 and call basic_block_forward_nhwc directly to avoid the transposes
    and dtype round-trips at every block.
    """
    x_nhwc = jnp.transpose(x_nchw, (0, 2, 3, 1))
    out = basic_block_forward_nhwc(x_nhwc, w1, s1, b1, w2, s2, b2)
    return jnp.transpose(out.astype(jnp.float32), (0, 3, 1, 2))


def ref_forward(x_nchw, w1, s1, b1, w2, s2, b2):
    """Pure-JAX reference mirroring the kernel's quantization (bf16 MXU inputs,
    f32 accumulation, bf16 intermediate and output)."""
    cout = w1.shape[-1]
    x = jnp.transpose(x_nchw, (0, 2, 3, 1)).astype(jnp.bfloat16)
    w1f = (w1 * s1.reshape(1, 1, 1, cout)).astype(jnp.bfloat16)
    w2f = (w2 * s2.reshape(1, 1, 1, cout)).astype(jnp.bfloat16)
    dn = ("NHWC", "HWIO", "NHWC")
    y = lax.conv_general_dilated(x, w1f, (1, 1), "SAME", dimension_numbers=dn,
                                 preferred_element_type=jnp.float32)
    y = jnp.maximum(y + b1.reshape(1, 1, 1, cout), 0.0)
    y = lax.conv_general_dilated(y.astype(jnp.bfloat16), w2f, (1, 1), "SAME",
                                 dimension_numbers=dn,
                                 preferred_element_type=jnp.float32)
    y = jnp.maximum(y + b2.reshape(1, 1, 1, cout) + x.astype(jnp.float32), 0.0)
    y = y.astype(jnp.bfloat16).astype(jnp.float32)   # mirror the kernel's bf16 output
    return jnp.transpose(y, (0, 3, 1, 2))


def make_params(key, cin, cout, eps=1e-5):
    """Deterministic synthetic params: conv weights (HWIO) + folded BN scale/bias."""
    ks = jax.random.split(key, 10)
    w1 = jax.random.normal(ks[0], (3, 3, cin, cout), jnp.float32) * 0.1
    w2 = jax.random.normal(ks[1], (3, 3, cout, cout), jnp.float32) * 0.1
    gamma1 = 1.0 + 0.1 * jax.random.normal(ks[2], (cout,), jnp.float32)
    beta1 = 0.1 * jax.random.normal(ks[3], (cout,), jnp.float32)
    mean1 = 0.1 * jax.random.normal(ks[4], (cout,), jnp.float32)
    var1 = jnp.abs(jax.random.normal(ks[5], (cout,), jnp.float32)) + 0.5
    gamma2 = 1.0 + 0.1 * jax.random.normal(ks[6], (cout,), jnp.float32)
    beta2 = 0.1 * jax.random.normal(ks[7], (cout,), jnp.float32)
    mean2 = 0.1 * jax.random.normal(ks[8], (cout,), jnp.float32)
    var2 = jnp.abs(jax.random.normal(ks[9], (cout,), jnp.float32)) + 0.5
    s1 = (gamma1 / jnp.sqrt(var1 + eps)).reshape(1, cout)
    b1 = (beta1 - mean1 * s1[0]).reshape(1, cout)
    s2 = (gamma2 / jnp.sqrt(var2 + eps)).reshape(1, cout)
    b2 = (beta2 - mean2 * s2[0]).reshape(1, cout)
    return w1, s1, b1, w2, s2, b2


if __name__ == "__main__":
    key = jax.random.PRNGKey(0)
    kx, kp = jax.random.split(key)

    # NOTE: tiny shapes for the correctness test only; production ResNet blocks
    # (C >= 64) are what the lane-dense / MXU-fill choices above are sized for.
    N, C, H, W = 2, 4, 16, 16            # in_planes = planes = 4, stride = 1
    x = jax.random.normal(kx, (N, C, H, W), jnp.float32)
    params = make_params(kp, C, C)

    out = jax.block_until_ready(basic_block_forward(x, *params))
    ref = jax.block_until_ready(ref_forward(x, *params))

    assert out.shape == (N, C, H, W)
    # bf16 MXU inputs + bf16 output -> compare against an identically quantized reference.
    assert jnp.allclose(out, ref, atol=2e-2, rtol=2e-2), (
        "Pallas output mismatch vs JAX reference")
    print("KERNEL_OK")
</pallas_src>

<mosaic_0001>
module attributes {stable_mosaic.version = 11 : i64} {
  func.func @basic_block_kernel(%arg0: i32, %arg1: memref<1x256x4xbf16, #tpu.memory_space<vmem>>, %arg2: memref<12x12xbf16, #tpu.memory_space<vmem>>, %arg3: memref<1x4xf32, #tpu.memory_space<vmem>>, %arg4: memref<12x12xbf16, #tpu.memory_space<vmem>>, %arg5: memref<1x4xf32, #tpu.memory_space<vmem>>, %arg6: memref<1x256x4xbf16, #tpu.memory_space<vmem>>, %arg7: memref<256x12xbf16, #tpu.memory_space<vmem>>, %arg8: memref<256x12xbf16, #tpu.memory_space<vmem>>) attributes {dimension_semantics = [#tpu.dimension_semantics<parallel>], iteration_bounds = array<i64: 2>, scalar_prefetch = 0 : i64, scratch_operands = 2 : i64, tpu.core_type = #tpu.core_type<tc>, window_params = [{transform_indices = @transform_0, window_bounds = array<i64: 1, 256, 4>}, {pipeline_mode = #tpu.pipeline_mode<synchronous>, transform_indices = @transform_1, window_bounds = array<i64: 12, 12>}, {pipeline_mode = #tpu.pipeline_mode<synchronous>, transform_indices = @transform_2, window_bounds = array<i64: 1, 4>}, {pipeline_mode = #tpu.pipeline_mode<synchronous>, transform_indices = @transform_3, window_bounds = array<i64: 12, 12>}, {pipeline_mode = #tpu.pipeline_mode<synchronous>, transform_indices = @transform_4, window_bounds = array<i64: 1, 4>}, {transform_indices = @transform_5, window_bounds = array<i64: 1, 256, 4>}]} {
    %c0 = arith.constant 0 : index
    %c0_0 = arith.constant 0 : index
    %c0_1 = arith.constant 0 : index
    %0 = vector.load %arg1[%c0, %c0_0, %c0_1] : memref<1x256x4xbf16, #tpu.memory_space<vmem>>, vector<1x256x4xbf16>
    %1 = vector.shape_cast %0 : vector<1x256x4xbf16> to vector<256x4xbf16>
    %2 = tpu.iota {dimensions = array<i32: 0>} : vector<256x1xi32>
    %c16_i32 = arith.constant 16 : i32
    %c0_i32 = arith.constant 0 : i32
    %3 = arith.cmpi eq, %c16_i32, %c0_i32 : i32
    %c1_i32 = arith.constant 1 : i32
    %4 = arith.select %3, %c1_i32, %c16_i32 : i32
    %5 = vector.broadcast %4 : i32 to vector<256x1xi32>
    %6 = arith.remsi %2, %5 : vector<256x1xi32>
    %c0_i32_2 = arith.constant 0 : i32
    %7 = vector.broadcast %c0_i32_2 : i32 to vector<256x1xi32>
    %8 = arith.cmpi ne, %6, %7 : vector<256x1xi32>
    %c0_i32_3 = arith.constant 0 : i32
    %9 = vector.broadcast %c0_i32_3 : i32 to vector<256x1xi32>
    %10 = arith.cmpi slt, %6, %9 : vector<256x1xi32>
    %c0_i32_4 = arith.constant 0 : i32
    %11 = arith.cmpi slt, %4, %c0_i32_4 : i32
    %12 = vector.broadcast %11 : i1 to vector<256x1xi1>
    %13 = vector.broadcast %12 : vector<256x1xi1> to vector<256x1xi1>
    %14 = arith.xori %10, %13 : vector<256x1xi1>
    %15 = arith.andi %14, %8 : vector<256x1xi1>
    %16 = vector.broadcast %4 : i32 to vector<256x1xi32>
    %17 = arith.addi %6, %16 : vector<256x1xi32>
    %18 = arith.select %15, %17, %6 : vector<256x1xi1>, vector<256x1xi32>
    %c0_i32_5 = arith.constant 0 : i32
    %19 = vector.broadcast %c0_i32_5 : i32 to vector<256x1xi32>
    %20 = arith.cmpi sgt, %18, %19 : vector<256x1xi32>
    %c15_i32 = arith.constant 15 : i32
    %21 = vector.broadcast %c15_i32 : i32 to vector<256x1xi32>
    %22 = arith.cmpi slt, %18, %21 : vector<256x1xi32>
    %cst = arith.constant 0.000000e+00 : bf16
    %23 = vector.broadcast %cst : bf16 to vector<16x4xbf16>
    %c0_6 = arith.constant 0 : index
    %c4 = arith.constant 4 : index
    %24 = vector.load %arg7[%c0_6, %c4] : memref<256x12xbf16, #tpu.memory_space<vmem>>, vector<256x4xbf16>
    tpu.vector_store %arg7[%c0_6, %c4], %1 {strides = array<i32>} : memref<256x12xbf16, #tpu.memory_space<vmem>>, vector<256x4xbf16>,
    %c0_7 = arith.constant 0 : index
    %c0_8 = arith.constant 0 : index
    %25 = vector.load %arg7[%c0_7, %c0_8] : memref<256x12xbf16, #tpu.memory_space<vmem>>, vector<16x4xbf16>
    tpu.vector_store %arg7[%c0_7, %c0_8], %23 {strides = array<i32>} : memref<256x12xbf16, #tpu.memory_space<vmem>>, vector<16x4xbf16>,
    %26 = vector.extract_strided_slice %1 {offsets = [0, 0], sizes = [240, 4], strides = [1, 1]} : vector<256x4xbf16> to vector<240x4xbf16>
    %c16 = arith.constant 16 : index
    %c0_9 = arith.constant 0 : index
    %27 = vector.load %arg7[%c16, %c0_9] : memref<256x12xbf16, #tpu.memory_space<vmem>>, vector<240x4xbf16>
    tpu.vector_store %arg7[%c16, %c0_9], %26 {strides = array<i32>} : memref<256x12xbf16, #tpu.memory_space<vmem>>, vector<240x4xbf16>,
    %28 = vector.extract_strided_slice %1 {offsets = [16, 0], sizes = [240, 4], strides = [1, 1]} : vector<256x4xbf16> to vector<240x4xbf16>
    %c0_10 = arith.constant 0 : index
    %c8 = arith.constant 8 : index
    %29 = vector.load %arg7[%c0_10, %c8] : memref<256x12xbf16, #tpu.memory_space<vmem>>, vector<240x4xbf16>
    tpu.vector_store %arg7[%c0_10, %c8], %28 {strides = array<i32>} : memref<256x12xbf16, #tpu.memory_space<vmem>>, vector<240x4xbf16>,
    %c240 = arith.constant 240 : index
    %c8_11 = arith.constant 8 : index
    %30 = vector.load %arg7[%c240, %c8_11] : memref<256x12xbf16, #tpu.memory_space<vmem>>, vector<16x4xbf16>
    tpu.vector_store %arg7[%c240, %c8_11], %23 {strides = array<i32>} : memref<256x12xbf16, #tpu.memory_space<vmem>>, vector<16x4xbf16>,
    %c0_12 = arith.constant 0 : index
    %c0_13 = arith.constant 0 : index
    %31 = vector.load %arg7[%c0_12, %c0_13] : memref<256x12xbf16, #tpu.memory_space<vmem>>, vector<256x12xbf16>
    %c0_14 = arith.constant 0 : index
    %c0_15 = arith.constant 0 : index
    %32 = vector.load %arg2[%c0_14, %c0_15] : memref<12x12xbf16, #tpu.memory_space<vmem>>, vector<12x12xbf16>
    %cst_16 = arith.constant dense<0.000000e+00> : vector<256x12xf32>
    %33 = tpu.matmul %31, %32, %cst_16 {dimension_numbers = #tpu.dot_dimension_numbers<[1], [0], [0], [1], [0, 0, 1, 1], [], []>} : vector<256x12xbf16>, vector<12x12xbf16>, vector<256x12xf32> -> vector<256x12xf32>
    %34 = vector.extract_strided_slice %33 {offsets = [0, 0], sizes = [256, 4], strides = [1, 1]} : vector<256x12xf32> to vector<256x4xf32>
    %35 = vector.extract_strided_slice %33 {offsets = [0, 4], sizes = [256, 4], strides = [1, 1]} : vector<256x12xf32> to vector<256x4xf32>
    %36 = vector.extract_strided_slice %33 {offsets = [0, 8], sizes = [256, 4], strides = [1, 1]} : vector<256x12xf32> to vector<256x4xf32>
    %cst_17 = arith.constant 0.000000e+00 : f32
    %37 = vector.broadcast %cst_17 : f32 to vector<1x4xf32>
    %38 = vector.extract_strided_slice %34 {offsets = [0, 0], sizes = [255, 4], strides = [1, 1]} : vector<256x4xf32> to vector<255x4xf32>
    %39 = tpu.concatenate %37, %38 in 0 : vector<1x4xf32>, vector<255x4xf32> -> vector<256x4xf32>
    %40 = vector.extract_strided_slice %36 {offsets = [1, 0], sizes = [255, 4], strides = [1, 1]} : vector<256x4xf32> to vector<255x4xf32>
    %41 = tpu.concatenate %40, %37 in 0 : vector<255x4xf32>, vector<1x4xf32> -> vector<256x4xf32>
    %cst_18 = arith.constant 0.000000e+00 : f32
    %42 = vector.shape_cast %20 : vector<256x1xi1> to vector<256x1xi1>
    %43 = vector.broadcast %42 : vector<256x1xi1> to vector<256x4xi1>
    %44 = vector.broadcast %cst_18 : f32 to vector<256x4xf32>
    %45 = arith.select %43, %39, %44 : vector<256x4xi1>, vector<256x4xf32>
    %46 = arith.addf %45, %35 : vector<256x4xf32>
    %cst_19 = arith.constant 0.000000e+00 : f32
    %47 = vector.shape_cast %22 : vector<256x1xi1> to vector<256x1xi1>
    %48 = vector.broadcast %47 : vector<256x1xi1> to vector<256x4xi1>
    %49 = vector.broadcast %cst_19 : f32 to vector<256x4xf32>
    %50 = arith.select %48, %41, %49 : vector<256x4xi1>, vector<256x4xf32>
    %51 = arith.addf %46, %50 : vector<256x4xf32>
    %c0_20 = arith.constant 0 : index
    %c0_21 = arith.constant 0 : index
    %52 = vector.load %arg3[%c0_20, %c0_21] : memref<1x4xf32, #tpu.memory_space<vmem>>, vector<1x4xf32>
    %53 = vector.broadcast %52 : vector<1x4xf32> to vector<256x4xf32>
    %54 = arith.addf %51, %53 : vector<256x4xf32>
    %cst_22 = arith.constant 0.000000e+00 : f32
    %55 = vector.broadcast %cst_22 : f32 to vector<256x4xf32>
    %56 = arith.maximumf %54, %55 : vector<256x4xf32>
    %57 = arith.truncf %56 : vector<256x4xf32> to vector<256x4xbf16>
    %cst_23 = arith.constant 0.000000e+00 : bf16
    %58 = vector.broadcast %cst_23 : bf16 to vector<16x4xbf16>
    %c0_24 = arith.constant 0 : index
    %c4_25 = arith.constant 4 : index
    %59 = vector.load %arg8[%c0_24, %c4_25] : memref<256x12xbf16, #tpu.memory_space<vmem>>, vector<256x4xbf16>
    tpu.vector_store %arg8[%c0_24, %c4_25], %57 {strides = array<i32>} : memref<256x12xbf16, #tpu.memory_space<vmem>>, vector<256x4xbf16>,
    %c0_26 = arith.constant 0 : index
    %c0_27 = arith.constant 0 : index
    %60 = vector.load %arg8[%c0_26, %c0_27] : memref<256x12xbf16, #tpu.memory_space<vmem>>, vector<16x4xbf16>
    tpu.vector_store %arg8[%c0_26, %c0_27], %58 {strides = array<i32>} : memref<256x12xbf16, #tpu.memory_space<vmem>>, vector<16x4xbf16>,
    %61 = vector.extract_strided_slice %57 {offsets = [0, 0], sizes = [240, 4], strides = [1, 1]} : vector<256x4xbf16> to vector<240x4xbf16>
    %c16_28 = arith.constant 16 : index
    %c0_29 = arith.constant 0 : index
    %62 = vector.load %arg8[%c16_28, %c0_29] : memref<256x12xbf16, #tpu.memory_space<vmem>>, vector<240x4xbf16>
    tpu.vector_store %arg8[%c16_28, %c0_29], %61 {strides = array<i32>} : memref<256x12xbf16, #tpu.memory_space<vmem>>, vector<240x4xbf16>,
    %63 = vector.extract_strided_slice %57 {offsets = [16, 0], sizes = [240, 4], strides = [1, 1]} : vector<256x4xbf16> to vector<240x4xbf16>
    %c0_30 = arith.constant 0 : index
    %c8_31 = arith.constant 8 : index
    %64 = vector.load %arg8[%c0_30, %c8_31] : memref<256x12xbf16, #tpu.memory_space<vmem>>, vector<240x4xbf16>
    tpu.vector_store %arg8[%c0_30, %c8_31], %63 {strides = array<i32>} : memref<256x12xbf16, #tpu.memory_space<vmem>>, vector<240x4xbf16>,
    %c240_32 = arith.constant 240 : index
    %c8_33 = arith.constant 8 : index
    %65 = vector.load %arg8[%c240_32, %c8_33] : memref<256x12xbf16, #tpu.memory_space<vmem>>, vector<16x4xbf16>
    tpu.vector_store %arg8[%c240_32, %c8_33], %58 {strides = array<i32>} : memref<256x12xbf16, #tpu.memory_space<vmem>>, vector<16x4xbf16>,
    %c0_34 = arith.constant 0 : index
    %c0_35 = arith.constant 0 : index
    %66 = vector.load %arg8[%c0_34, %c0_35] : memref<256x12xbf16, #tpu.memory_space<vmem>>, vector<256x12xbf16>
    %c0_36 = arith.constant 0 : index
    %c0_37 = arith.constant 0 : index
    %67 = vector.load %arg4[%c0_36, %c0_37] : memref<12x12xbf16, #tpu.memory_space<vmem>>, vector<12x12xbf16>
    %cst_38 = arith.constant dense<0.000000e+00> : vector<256x12xf32>
    %68 = tpu.matmul %66, %67, %cst_38 {dimension_numbers = #tpu.dot_dimension_numbers<[1], [0], [0], [1], [0, 0, 1, 1], [], []>} : vector<256x12xbf16>, vector<12x12xbf16>, vector<256x12xf32> -> vector<256x12xf32>
    %69 = vector.extract_strided_slice %68 {offsets = [0, 0], sizes = [256, 4], strides = [1, 1]} : vector<256x12xf32> to vector<256x4xf32>
    %70 = vector.extract_strided_slice %68 {offsets = [0, 4], sizes = [256, 4], strides = [1, 1]} : vector<256x12xf32> to vector<256x4xf32>
    %71 = vector.extract_strided_slice %68 {offsets = [0, 8], sizes = [256, 4], strides = [1, 1]} : vector<256x12xf32> to vector<256x4xf32>
    %cst_39 = arith.constant 0.000000e+00 : f32
    %72 = vector.broadcast %cst_39 : f32 to vector<1x4xf32>
    %73 = vector.extract_strided_slice %69 {offsets = [0, 0], sizes = [255, 4], strides = [1, 1]} : vector<256x4xf32> to vector<255x4xf32>
    %74 = tpu.concatenate %72, %73 in 0 : vector<1x4xf32>, vector<255x4xf32> -> vector<256x4xf32>
    %75 = vector.extract_strided_slice %71 {offsets = [1, 0], sizes = [255, 4], strides = [1, 1]} : vector<256x4xf32> to vector<255x4xf32>
    %76 = tpu.concatenate %75, %72 in 0 : vector<255x4xf32>, vector<1x4xf32> -> vector<256x4xf32>
    %cst_40 = arith.constant 0.000000e+00 : f32
    %77 = vector.shape_cast %20 : vector<256x1xi1> to vector<256x1xi1>
    %78 = vector.broadcast %77 : vector<256x1xi1> to vector<256x4xi1>
    %79 = vector.broadcast %cst_40 : f32 to vector<256x4xf32>
    %80 = arith.select %78, %74, %79 : vector<256x4xi1>, vector<256x4xf32>
    %81 = arith.addf %80, %70 : vector<256x4xf32>
    %cst_41 = arith.constant 0.000000e+00 : f32
    %82 = vector.shape_cast %22 : vector<256x1xi1> to vector<256x1xi1>
    %83 = vector.broadcast %82 : vector<256x1xi1> to vector<256x4xi1>
    %84 = vector.broadcast %cst_41 : f32 to vector<256x4xf32>
    %85 = arith.select %83, %76, %84 : vector<256x4xi1>, vector<256x4xf32>
    %86 = arith.addf %81, %85 : vector<256x4xf32>
    %c0_42 = arith.constant 0 : index
    %c0_43 = arith.constant 0 : index
    %87 = vector.load %arg5[%c0_42, %c0_43] : memref<1x4xf32, #tpu.memory_space<vmem>>, vector<1x4xf32>
    %88 = vector.broadcast %87 : vector<1x4xf32> to vector<256x4xf32>
    %89 = arith.addf %86, %88 : vector<256x4xf32>
    %90 = arith.extf %1 : vector<256x4xbf16> to vector<256x4xf32>
    %91 = arith.addf %89, %90 : vector<256x4xf32>
    %cst_44 = arith.constant 0.000000e+00 : f32
    %92 = vector.broadcast %cst_44 : f32 to vector<256x4xf32>
    %93 = arith.maximumf %91, %92 : vector<256x4xf32>
    %94 = arith.truncf %93 : vector<256x4xf32> to vector<256x4xbf16>
    %95 = vector.shape_cast %94 : vector<256x4xbf16> to vector<1x256x4xbf16>
    %c0_45 = arith.constant 0 : index
    %c0_46 = arith.constant 0 : index
    %c0_47 = arith.constant 0 : index
    %96 = vector.load %arg6[%c0_45, %c0_46, %c0_47] : memref<1x256x4xbf16, #tpu.memory_space<vmem>>, vector<1x256x4xbf16>
    tpu.vector_store %arg6[%c0_45, %c0_46, %c0_47], %95 {strides = array<i32>} : memref<1x256x4xbf16, #tpu.memory_space<vmem>>, vector<1x256x4xbf16>,
    return
  }
  func.func @transform_0(%arg0: i32) -> (i32, i32, i32) {
    %c0_i32 = arith.constant 0 : i32
    %c0_i32_0 = arith.constant 0 : i32
    %c0_i32_1 = arith.constant 0 : i32
    return %arg0, %c0_i32, %c0_i32_0 : i32, i32, i32
  }
  func.func @transform_1(%arg0: i32) -> (i32, i32) {
    %c0_i32 = arith.constant 0 : i32
    %c0_i32_0 = arith.constant 0 : i32
    %c0_i32_1 = arith.constant 0 : i32
    return %c0_i32, %c0_i32_0 : i32, i32
  }
  func.func @transform_2(%arg0: i32) -> (i32, i32) {
    %c0_i32 = arith.constant 0 : i32
    %c0_i32_0 = arith.constant 0 : i32
    %c0_i32_1 = arith.constant 0 : i32
    return %c0_i32, %c0_i32_0 : i32, i32
  }
  func.func @transform_3(%arg0: i32) -> (i32, i32) {
    %c0_i32 = arith.constant 0 : i32
    %c0_i32_0 = arith.constant 0 : i32
    %c0_i32_1 = arith.constant 0 : i32
    return %c0_i32, %c0_i32_0 : i32, i32
  }
  func.func @transform_4(%arg0: i32) -> (i32, i32) {
    %c0_i32 = arith.constant 0 : i32
    %c0_i32_0 = arith.constant 0 : i32
    %c0_i32_1 = arith.constant 0 : i32
    return %c0_i32, %c0_i32_0 : i32, i32
  }
  func.func @transform_5(%arg0: i32) -> (i32, i32, i32) {
    %c0_i32 = arith.constant 0 : i32
    %c0_i32_0 = arith.constant 0 : i32
    %c0_i32_1 = arith.constant 0 : i32
    return %arg0, %c0_i32, %c0_i32_0 : i32, i32, i32
  }
}

module attributes {stable_mosaic.version = 11 : i64} {
  func.func @basic_block_kernel(%arg0: i32, %arg1: memref<1x256x4xbf16, #tpu.memory_space<vmem>>, %arg2: memref<12x12xbf16, #tpu.memory_space<vmem>>, %arg3: memref<1x4xf32, #tpu.memory_space<vmem>>, %arg4: memref<12x12xbf16, #tpu.memory_space<vmem>>, %arg5: memref<1x4xf32, #tpu.memory_space<vmem>>, %arg6: memref<1x256x4xbf16, #tpu.memory_space<vmem>>, %arg7: memref<256x12xbf16, #tpu.memory_space<vmem>>, %arg8: memref<256x12xbf16, #tpu.memory_space<vmem>>) attributes {dimension_semantics = [#tpu.dimension_semantics<parallel>], iteration_bounds = array<i64: 2>, scalar_prefetch = 0 : i64, scratch_operands = 2 : i64, tpu.core_type = #tpu.core_type<tc>, window_params = [{transform_indices = @transform_0, window_bounds = array<i64: 1, 256, 4>}, {pipeline_mode = #tpu.pipeline_mode<synchronous>, transform_indices = @transform_1, window_bounds = array<i64: 12, 12>}, {pipeline_mode = #tpu.pipeline_mode<synchronous>, transform_indices = @transform_2, window_bounds = array<i64: 1, 4>}, {pipeline_mode = #tpu.pipeline_mode<synchronous>, transform_indices = @transform_3, window_bounds = array<i64: 12, 12>}, {pipeline_mode = #tpu.pipeline_mode<synchronous>, transform_indices = @transform_4, window_bounds = array<i64: 1, 4>}, {transform_indices = @transform_5, window_bounds = array<i64: 1, 256, 4>}]} {
    %c0 = arith.constant 0 : index
    %c0_0 = arith.constant 0 : index
    %c0_1 = arith.constant 0 : index
    %0 = vector.load %arg1[%c0, %c0_0, %c0_1] : memref<1x256x4xbf16, #tpu.memory_space<vmem>>, vector<1x256x4xbf16>
    %1 = vector.shape_cast %0 : vector<1x256x4xbf16> to vector<256x4xbf16>
    %2 = tpu.iota {dimensions = array<i32: 0>} : vector<256x1xi32>
    %c16_i32 = arith.constant 16 : i32
    %c0_i32 = arith.constant 0 : i32
    %3 = arith.cmpi eq, %c16_i32, %c0_i32 : i32
    %c1_i32 = arith.constant 1 : i32
    %4 = arith.select %3, %c1_i32, %c16_i32 : i32
    %5 = vector.broadcast %4 : i32 to vector<256x1xi32>
    %6 = arith.remsi %2, %5 : vector<256x1xi32>
    %c0_i32_2 = arith.constant 0 : i32
    %7 = vector.broadcast %c0_i32_2 : i32 to vector<256x1xi32>
    %8 = arith.cmpi ne, %6, %7 : vector<256x1xi32>
    %c0_i32_3 = arith.constant 0 : i32
    %9 = vector.broadcast %c0_i32_3 : i32 to vector<256x1xi32>
    %10 = arith.cmpi slt, %6, %9 : vector<256x1xi32>
    %c0_i32_4 = arith.constant 0 : i32
    %11 = arith.cmpi slt, %4, %c0_i32_4 : i32
    %12 = vector.broadcast %11 : i1 to vector<256x1xi1>
    %13 = vector.broadcast %12 : vector<256x1xi1> to vector<256x1xi1>
    %14 = arith.xori %10, %13 : vector<256x1xi1>
    %15 = arith.andi %14, %8 : vector<256x1xi1>
    %16 = vector.broadcast %4 : i32 to vector<256x1xi32>
    %17 = arith.addi %6, %16 : vector<256x1xi32>
    %18 = arith.select %15, %17, %6 : vector<256x1xi1>, vector<256x1xi32>
    %c0_i32_5 = arith.constant 0 : i32
    %19 = vector.broadcast %c0_i32_5 : i32 to vector<256x1xi32>
    %20 = arith.cmpi sgt, %18, %19 : vector<256x1xi32>
    %c15_i32 = arith.constant 15 : i32
    %21 = vector.broadcast %c15_i32 : i32 to vector<256x1xi32>
    %22 = arith.cmpi slt, %18, %21 : vector<256x1xi32>
    %cst = arith.constant 0.000000e+00 : bf16
    %23 = vector.broadcast %cst : bf16 to vector<16x4xbf16>
    %c0_6 = arith.constant 0 : index
    %c4 = arith.constant 4 : index
    %24 = vector.load %arg7[%c0_6, %c4] : memref<256x12xbf16, #tpu.memory_space<vmem>>, vector<256x4xbf16>
    tpu.vector_store %arg7[%c0_6, %c4], %1 {strides = array<i32>} : memref<256x12xbf16, #tpu.memory_space<vmem>>, vector<256x4xbf16>,
    %c0_7 = arith.constant 0 : index
    %c0_8 = arith.constant 0 : index
    %25 = vector.load %arg7[%c0_7, %c0_8] : memref<256x12xbf16, #tpu.memory_space<vmem>>, vector<16x4xbf16>
    tpu.vector_store %arg7[%c0_7, %c0_8], %23 {strides = array<i32>} : memref<256x12xbf16, #tpu.memory_space<vmem>>, vector<16x4xbf16>,
    %26 = vector.extract_strided_slice %1 {offsets = [0, 0], sizes = [240, 4], strides = [1, 1]} : vector<256x4xbf16> to vector<240x4xbf16>
    %c16 = arith.constant 16 : index
    %c0_9 = arith.constant 0 : index
    %27 = vector.load %arg7[%c16, %c0_9] : memref<256x12xbf16, #tpu.memory_space<vmem>>, vector<240x4xbf16>
    tpu.vector_store %arg7[%c16, %c0_9], %26 {strides = array<i32>} : memref<256x12xbf16, #tpu.memory_space<vmem>>, vector<240x4xbf16>,
    %28 = vector.extract_strided_slice %1 {offsets = [16, 0], sizes = [240, 4], strides = [1, 1]} : vector<256x4xbf16> to vector<240x4xbf16>
    %c0_10 = arith.constant 0 : index
    %c8 = arith.constant 8 : index
    %29 = vector.load %arg7[%c0_10, %c8] : memref<256x12xbf16, #tpu.memory_space<vmem>>, vector<240x4xbf16>
    tpu.vector_store %arg7[%c0_10, %c8], %28 {strides = array<i32>} : memref<256x12xbf16, #tpu.memory_space<vmem>>, vector<240x4xbf16>,
    %c240 = arith.constant 240 : index
    %c8_11 = arith.constant 8 : index
    %30 = vector.load %arg7[%c240, %c8_11] : memref<256x12xbf16, #tpu.memory_space<vmem>>, vector<16x4xbf16>
    tpu.vector_store %arg7[%c240, %c8_11], %23 {strides = array<i32>} : memref<256x12xbf16, #tpu.memory_space<vmem>>, vector<16x4xbf16>,
    %c0_12 = arith.constant 0 : index
    %c0_13 = arith.constant 0 : index
    %31 = vector.load %arg7[%c0_12, %c0_13] : memref<256x12xbf16, #tpu.memory_space<vmem>>, vector<256x12xbf16>
    %c0_14 = arith.constant 0 : index
    %c0_15 = arith.constant 0 : index
    %32 = vector.load %arg2[%c0_14, %c0_15] : memref<12x12xbf16, #tpu.memory_space<vmem>>, vector<12x12xbf16>
    %cst_16 = arith.constant dense<0.000000e+00> : vector<256x12xf32>
    %33 = tpu.matmul %31, %32, %cst_16 {dimension_numbers = #tpu.dot_dimension_numbers<[1], [0], [0], [1], [0, 0, 1, 1], [], []>} : vector<256x12xbf16>, vector<12x12xbf16>, vector<256x12xf32> -> vector<256x12xf32>
    %34 = vector.extract_strided_slice %33 {offsets = [0, 0], sizes = [256, 4], strides = [1, 1]} : vector<256x12xf32> to vector<256x4xf32>
    %35 = vector.extract_strided_slice %33 {offsets = [0, 4], sizes = [256, 4], strides = [1, 1]} : vector<256x12xf32> to vector<256x4xf32>
    %36 = vector.extract_strided_slice %33 {offsets = [0, 8], sizes = [256, 4], strides = [1, 1]} : vector<256x12xf32> to vector<256x4xf32>
    %cst_17 = arith.constant 0.000000e+00 : f32
    %37 = vector.broadcast %cst_17 : f32 to vector<1x4xf32>
    %38 = vector.extract_strided_slice %34 {offsets = [0, 0], sizes = [255, 4], strides = [1, 1]} : vector<256x4xf32> to vector<255x4xf32>
    %39 = tpu.concatenate %37, %38 in 0 : vector<1x4xf32>, vector<255x4xf32> -> vector<256x4xf32>
    %40 = vector.extract_strided_slice %36 {offsets = [1, 0], sizes = [255, 4], strides = [1, 1]} : vector<256x4xf32> to vector<255x4xf32>
    %41 = tpu.concatenate %40, %37 in 0 : vector<255x4xf32>, vector<1x4xf32> -> vector<256x4xf32>
    %cst_18 = arith.constant 0.000000e+00 : f32
    %42 = vector.shape_cast %20 : vector<256x1xi1> to vector<256x1xi1>
    %43 = vector.broadcast %42 : vector<256x1xi1> to vector<256x4xi1>
    %44 = vector.broadcast %cst_18 : f32 to vector<256x4xf32>
    %45 = arith.select %43, %39, %44 : vector<256x4xi1>, vector<256x4xf32>
    %46 = arith.addf %45, %35 : vector<256x4xf32>
    %cst_19 = arith.constant 0.000000e+00 : f32
    %47 = vector.shape_cast %22 : vector<256x1xi1> to vector<256x1xi1>
    %48 = vector.broadcast %47 : vector<256x1xi1> to vector<256x4xi1>
    %49 = vector.broadcast %cst_19 : f32 to vector<256x4xf32>
    %50 = arith.select %48, %41, %49 : vector<256x4xi1>, vector<256x4xf32>
    %51 = arith.addf %46, %50 : vector<256x4xf32>
    %c0_20 = arith.constant 0 : index
    %c0_21 = arith.constant 0 : index
    %52 = vector.load %arg3[%c0_20, %c0_21] : memref<1x4xf32, #tpu.memory_space<vmem>>, vector<1x4xf32>
    %53 = vector.broadcast %52 : vector<1x4xf32> to vector<256x4xf32>
    %54 = arith.addf %51, %53 : vector<256x4xf32>
    %cst_22 = arith.constant 0.000000e+00 : f32
    %55 = vector.broadcast %cst_22 : f32 to vector<256x4xf32>
    %56 = arith.maximumf %54, %55 : vector<256x4xf32>
    %57 = arith.truncf %56 : vector<256x4xf32> to vector<256x4xbf16>
    %cst_23 = arith.constant 0.000000e+00 : bf16
    %58 = vector.broadcast %cst_23 : bf16 to vector<16x4xbf16>
    %c0_24 = arith.constant 0 : index
    %c4_25 = arith.constant 4 : index
    %59 = vector.load %arg8[%c0_24, %c4_25] : memref<256x12xbf16, #tpu.memory_space<vmem>>, vector<256x4xbf16>
    tpu.vector_store %arg8[%c0_24, %c4_25], %57 {strides = array<i32>} : memref<256x12xbf16, #tpu.memory_space<vmem>>, vector<256x4xbf16>,
    %c0_26 = arith.constant 0 : index
    %c0_27 = arith.constant 0 : index
    %60 = vector.load %arg8[%c0_26, %c0_27] : memref<256x12xbf16, #tpu.memory_space<vmem>>, vector<16x4xbf16>
    tpu.vector_store %arg8[%c0_26, %c0_27], %58 {strides = array<i32>} : memref<256x12xbf16, #tpu.memory_space<vmem>>, vector<16x4xbf16>,
    %61 = vector.extract_strided_slice %57 {offsets = [0, 0], sizes = [240, 4], strides = [1, 1]} : vector<256x4xbf16> to vector<240x4xbf16>
    %c16_28 = arith.constant 16 : index
    %c0_29 = arith.constant 0 : index
    %62 = vector.load %arg8[%c16_28, %c0_29] : memref<256x12xbf16, #tpu.memory_space<vmem>>, vector<240x4xbf16>
    tpu.vector_store %arg8[%c16_28, %c0_29], %61 {strides = array<i32>} : memref<256x12xbf16, #tpu.memory_space<vmem>>, vector<240x4xbf16>,
    %63 = vector.extract_strided_slice %57 {offsets = [16, 0], sizes = [240, 4], strides = [1, 1]} : vector<256x4xbf16> to vector<240x4xbf16>
    %c0_30 = arith.constant 0 : index
    %c8_31 = arith.constant 8 : index
    %64 = vector.load %arg8[%c0_30, %c8_31] : memref<256x12xbf16, #tpu.memory_space<vmem>>, vector<240x4xbf16>
    tpu.vector_store %arg8[%c0_30, %c8_31], %63 {strides = array<i32>} : memref<256x12xbf16, #tpu.memory_space<vmem>>, vector<240x4xbf16>,
    %c240_32 = arith.constant 240 : index
    %c8_33 = arith.constant 8 : index
    %65 = vector.load %arg8[%c240_32, %c8_33] : memref<256x12xbf16, #tpu.memory_space<vmem>>, vector<16x4xbf16>
    tpu.vector_store %arg8[%c240_32, %c8_33], %58 {strides = array<i32>} : memref<256x12xbf16, #tpu.memory_space<vmem>>, vector<16x4xbf16>,
    %c0_34 = arith.constant 0 : index
    %c0_35 = arith.constant 0 : index
    %66 = vector.load %arg8[%c0_34, %c0_35] : memref<256x12xbf16, #tpu.memory_space<vmem>>, vector<256x12xbf16>
    %c0_36 = arith.constant 0 : index
    %c0_37 = arith.constant 0 : index
    %67 = vector.load %arg4[%c0_36, %c0_37] : memref<12x12xbf16, #tpu.memory_space<vmem>>, vector<12x12xbf16>
    %cst_38 = arith.constant dense<0.000000e+00> : vector<256x12xf32>
    %68 = tpu.matmul %66, %67, %cst_38 {dimension_numbers = #tpu.dot_dimension_numbers<[1], [0], [0], [1], [0, 0, 1, 1], [], []>} : vector<256x12xbf16>, vector<12x12xbf16>, vector<256x12xf32> -> vector<256x12xf32>
    %69 = vector.extract_strided_slice %68 {offsets = [0, 0], sizes = [256, 4], strides = [1, 1]} : vector<256x12xf32> to vector<256x4xf32>
    %70 = vector.extract_strided_slice %68 {offsets = [0, 4], sizes = [256, 4], strides = [1, 1]} : vector<256x12xf32> to vector<256x4xf32>
    %71 = vector.extract_strided_slice %68 {offsets = [0, 8], sizes = [256, 4], strides = [1, 1]} : vector<256x12xf32> to vector<256x4xf32>
    %cst_39 = arith.constant 0.000000e+00 : f32
    %72 = vector.broadcast %cst_39 : f32 to vector<1x4xf32>
    %73 = vector.extract_strided_slice %69 {offsets = [0, 0], sizes = [255, 4], strides = [1, 1]} : vector<256x4xf32> to vector<255x4xf32>
    %74 = tpu.concatenate %72, %73 in 0 : vector<1x4xf32>, vector<255x4xf32> -> vector<256x4xf32>
    %75 = vector.extract_strided_slice %71 {offsets = [1, 0], sizes = [255, 4], strides = [1, 1]} : vector<256x4xf32> to vector<255x4xf32>
    %76 = tpu.concatenate %75, %72 in 0 : vector<255x4xf32>, vector<1x4xf32> -> vector<256x4xf32>
    %cst_40 = arith.constant 0.000000e+00 : f32
    %77 = vector.shape_cast %20 : vector<256x1xi1> to vector<256x1xi1>
    %78 = vector.broadcast %77 : vector<256x1xi1> to vector<256x4xi1>
    %79 = vector.broadcast %cst_40 : f32 to vector<256x4xf32>
    %80 = arith.select %78, %74, %79 : vector<256x4xi1>, vector<256x4xf32>
    %81 = arith.addf %80, %70 : vector<256x4xf32>
    %cst_41 = arith.constant 0.000000e+00 : f32
    %82 = vector.shape_cast %22 : vector<256x1xi1> to vector<256x1xi1>
    %83 = vector.broadcast %82 : vector<256x1xi1> to vector<256x4xi1>
    %84 = vector.broadcast %cst_41 : f32 to vector<256x4xf32>
    %85 = arith.select %83, %76, %84 : vector<256x4xi1>, vector<256x4xf32>
    %86 = arith.addf %81, %85 : vector<256x4xf32>
    %c0_42 = arith.constant 0 : index
    %c0_43 = arith.constant 0 : index
    %87 = vector.load %arg5[%c0_42, %c0_43] : memref<1x4xf32, #tpu.memory_space<vmem>>, vector<1x4xf32>
    %88 = vector.broadcast %87 : vector<1x4xf32> to vector<256x4xf32>
    %89 = arith.addf %86, %88 : vector<256x4xf32>
    %90 = arith.extf %1 : vector<256x4xbf16> to vector<256x4xf32>
    %91 = arith.addf %89, %90 : vector<256x4xf32>
    %cst_44 = arith.constant 0.000000e+00 : f32
    %92 = vector.broadcast %cst_44 : f32 to vector<256x4xf32>
    %93 = arith.maximumf %91, %92 : vector<256x4xf32>
    %94 = arith.truncf %93 : vector<256x4xf32> to vector<256x4xbf16>
    %95 = vector.shape_cast %94 : vector<256x4xbf16> to vector<1x256x4xbf16>
    %c0_45 = arith.constant 0 : index
    %c0_46 = arith.constant 0 : index
    %c0_47 = arith.constant 0 : index
    %96 = vector.load %arg6[%c0_45, %c0_46, %c0_47] : memref<1x256x4xbf16, #tpu.memory_space<vmem>>, vector<1x256x4xbf16>
    tpu.vector_store %arg6[%c0_45, %c0_46, %c0_47], %95 {strides = array<i32>} : memref<1x256x4xbf16, #tpu.memory_space<vmem>>, vector<1x256x4xbf16>,
    return
  }
  func.func @transform_0(%arg0: i32) -> (i32, i32, i32) {
    %c0_i32 = arith.constant 0 : i32
    %c0_i32_0 = arith.constant 0 : i32
    %c0_i32_1 = arith.constant 0 : i32
    return %arg0, %c0_i32, %c0_i32_0 : i32, i32, i32
  }
  func.func @transform_1(%arg0: i32) -> (i32, i32) {
    %c0_i32 = arith.constant 0 : i32
    %c0_i32_0 = arith.constant 0 : i32
    %c0_i32_1 = arith.constant 0 : i32
    return %c0_i32, %c0_i32_0 : i32, i32
  }
  func.func @transform_2(%arg0: i32) -> (i32, i32) {
    %c0_i32 = arith.constant 0 : i32
    %c0_i32_0 = arith.constant 0 : i32
    %c0_i32_1 = arith.constant 0 : i32
    return %c0_i32, %c0_i32_0 : i32, i32
  }
  func.func @transform_3(%arg0: i32) -> (i32, i32) {
    %c0_i32 = arith.constant 0 : i32
    %c0_i32_0 = arith.constant 0 : i32
    %c0_i32_1 = arith.constant 0 : i32
    return %c0_i32, %c0_i32_0 : i32, i32
  }
  func.func @transform_4(%arg0: i32) -> (i32, i32) {
    %c0_i32 = arith.constant 0 : i32
    %c0_i32_0 = arith.constant 0 : i32
    %c0_i32_1 = arith.constant 0 : i32
    return %c0_i32, %c0_i32_0 : i32, i32
  }
  func.func @transform_5(%arg0: i32) -> (i32, i32, i32) {
    %c0_i32 = arith.constant 0 : i32
    %c0_i32_0 = arith.constant 0 : i32
    %c0_i32_1 = arith.constant 0 : i32
    return %arg0, %c0_i32, %c0_i32_0 : i32, i32, i32
  }
}

</mosaic_0001>

<llo_original>
// kernel: tpu_custom_call.1
$region0: #{tpu_custom_call.1}
  #allocation0 [shape = 'u32[]', space=smem, size = 0x4, offset = 0x4, fixed_abs, tag = 'smem constant byte address 0x4 - core index']
  #allocation1 [shape = 'u32[144,128]{1,0:T(1,128)}', space=vmem, size = 0x12000, scoped, tag = 'internal scratch']
  #allocation2 [shape = 'bf16[256,12]{1,0:T(16,128)(2,1)}', space=vmem, size = 0x10000, scoped, tag = 'scratch operand']
  #allocation3 [shape = 'bf16[256,12]{1,0:T(16,128)(2,1)}', space=vmem, size = 0x10000, scoped, tag = 'scratch operand']
  %s0 = inlined_call_operand.vmem [shape: bf16[2,256,4], index: 0, kind: input, shape index: {}]
  %s1 = inlined_call_operand.vmem [shape: bf16[12,12], index: 1, kind: input, shape index: {}]
  %s2 = inlined_call_operand.vmem [shape: f32[1,4], index: 2, kind: input, shape index: {}]
  %s3 = inlined_call_operand.vmem [shape: bf16[12,12], index: 3, kind: input, shape index: {}]
  %s4 = inlined_call_operand.vmem [shape: f32[1,4], index: 4, kind: input, shape index: {}]
  %s5 = inlined_call_operand.vmem [shape: bf16[2,256,4], index: 5, kind: output, shape index: {}]
  %s6 = sld [smem:[#allocation0]]
  $region53: #{tpu_custom_call.1} parent=0
    _
  %s8 = ssub.s32 1, %s6
  %s9 = scalar_select 0, %s8, %s6
  loop: start=0, step=1, limit=4
  $region2: #{tpu_custom_call.1} parent=0 // loop_pre_header
    _
  $region3: #{tpu_custom_call.1} parent=0 // loop_header
    %s11 = sphi 0, %s15
    %p12 = scmp.ge.s32.totalorder %s11, 4
    %s21 = sphi 0, %s23
    %s24 = sphi 0, %s21
    %s25 = sphi 0, %s24
    %s41 = sphi 0, %s25
    %s45 = sphi 0, %s45
    %s47 = sphi 0, %s45
    %s48 = sphi 0, %s47
    %s62 = sphi 0, %s48
    %s66 = sphi 0, %s66
    %s68 = sphi 0, %s66
    %s69 = sphi 0, %s68
    %s83 = sphi 0, %s69
    %s87 = sphi 0, %s87
    %s89 = sphi 0, %s87
    %s90 = sphi 0, %s89
    %s104 = sphi 0, %s90
    %s108 = sphi 0, %s108
    %s110 = sphi 0, %s108
    %s111 = sphi 0, %s110
    %s125 = sphi 0, %s111
    %s131 = sphi 0, %s133
    %s134 = sphi 0, %s131
    %s135 = sphi 0, %s134
    %s151 = sphi 0, %s135
  $region4: #{tpu_custom_call.1} parent=0 // loop_header_branch
    %14 = sbr.rel (%p12) target = $region8
  $region5: #{tpu_custom_call.1} parent=0 // loop_body
    %s16 = ssub.s32 %s11, 1
    %s17 = ssub.s32 %s11, 2
    %s18 = sadd.s32 %s11, 1
    %s19 = ssub.s32 %s11, %s18
    %p20 = scmp.eq.s32.totalorder %s19, 0
    %s22 = sadd.s32 %s21, 1
    %s23 = scalar_select %p20, %s21, %s22
    %p26 = pneg %p20
    %p27 = scmp.eq.s32.totalorder %s11, 1
    %p28 = por %p26, %p27
    %p29 = scmp.ne.s32.totalorder %s21, %s24
    %p30 = scmp.eq.s32.totalorder %s11, 0
    %p31 = por %p29, %p30
    %p32 = scmp.ne.s32.totalorder %s21, %s24
    %p33 = scmp.eq.s32.totalorder %s16, 1
    %p34 = por %p32, %p33
    %p35 = scmp.ne.s32.totalorder %s24, %s25
    %p36 = scmp.eq.s32.totalorder %s16, 0
    %p37 = por %p35, %p36
    %p38 = scmp.ne.s32.totalorder %s24, %s25
    %p39 = scmp.eq.s32.totalorder %s17, 1
    %p40 = por %p38, %p39
    %p42 = scmp.ne.s32.totalorder %s25, %s41
    %p43 = scmp.eq.s32.totalorder %s17, 0
    %p44 = por %p42, %p43
    %s46 = sadd.s32 %s45, 1
    %p49 = scmp.eq.s32.totalorder %s11, 1
    %p50 = scmp.ne.s32.totalorder %s45, %s47
    %p51 = scmp.eq.s32.totalorder %s11, 0
    %p52 = por %p50, %p51
    %p53 = scmp.ne.s32.totalorder %s45, %s47
    %p54 = scmp.eq.s32.totalorder %s16, 1
    %p55 = por %p53, %p54
    %p56 = scmp.ne.s32.totalorder %s47, %s48
    %p57 = scmp.eq.s32.totalorder %s16, 0
    %p58 = por %p56, %p57
    %p59 = scmp.ne.s32.totalorder %s47, %s48
    %p60 = scmp.eq.s32.totalorder %s17, 1
    %p61 = por %p59, %p60
    %p63 = scmp.ne.s32.totalorder %s48, %s62
    %p64 = scmp.eq.s32.totalorder %s17, 0
    %p65 = por %p63, %p64
    %s67 = sadd.s32 %s66, 1
    %p70 = scmp.eq.s32.totalorder %s11, 1
    %p71 = scmp.ne.s32.totalorder %s66, %s68
    %p72 = scmp.eq.s32.totalorder %s11, 0
    %p73 = por %p71, %p72
    %p74 = scmp.ne.s32.totalorder %s66, %s68
    %p75 = scmp.eq.s32.totalorder %s16, 1
    %p76 = por %p74, %p75
    %p77 = scmp.ne.s32.totalorder %s68, %s69
    %p78 = scmp.eq.s32.totalorder %s16, 0
    %p79 = por %p77, %p78
    %p80 = scmp.ne.s32.totalorder %s68, %s69
    %p81 = scmp.eq.s32.totalorder %s17, 1
    %p82 = por %p80, %p81
    %p84 = scmp.ne.s32.totalorder %s69, %s83
    %p85 = scmp.eq.s32.totalorder %s17, 0
    %p86 = por %p84, %p85
    %s88 = sadd.s32 %s87, 1
    %p91 = scmp.eq.s32.totalorder %s11, 1
    %p92 = scmp.ne.s32.totalorder %s87, %s89
    %p93 = scmp.eq.s32.totalorder %s11, 0
    %p94 = por %p92, %p93
    %p95 = scmp.ne.s32.totalorder %s87, %s89
    %p96 = scmp.eq.s32.totalorder %s16, 1
    %p97 = por %p95, %p96
    %p98 = scmp.ne.s32.totalorder %s89, %s90
    %p99 = scmp.eq.s32.totalorder %s16, 0
    %p100 = por %p98, %p99
    %p101 = scmp.ne.s32.totalorder %s89, %s90
    %p102 = scmp.eq.s32.totalorder %s17, 1
    %p103 = por %p101, %p102
    %p105 = scmp.ne.s32.totalorder %s90, %s104
    %p106 = scmp.eq.s32.totalorder %s17, 0
    %p107 = por %p105, %p106
    %s109 = sadd.s32 %s108, 1
    %p112 = scmp.eq.s32.totalorder %s11, 1
    %p113 = scmp.ne.s32.totalorder %s108, %s110
    %p114 = scmp.eq.s32.totalorder %s11, 0
    %p115 = por %p113, %p114
    %p116 = scmp.ne.s32.totalorder %s108, %s110
    %p117 = scmp.eq.s32.totalorder %s16, 1
    %p118 = por %p116, %p117
    %p119 = scmp.ne.s32.totalorder %s110, %s111
    %p120 = scmp.eq.s32.totalorder %s16, 0
    %p121 = por %p119, %p120
    %p122 = scmp.ne.s32.totalorder %s110, %s111
    %p123 = scmp.eq.s32.totalorder %s17, 1
    %p124 = por %p122, %p123
    %p126 = scmp.ne.s32.totalorder %s111, %s125
    %p127 = scmp.eq.s32.totalorder %s17, 0
    %p128 = por %p126, %p127
    %s129 = ssub.s32 %s11, %s18
    %p130 = scmp.eq.s32.totalorder %s129, 0
    %s132 = sadd.s32 %s131, 1
    %s133 = scalar_select %p130, %s131, %s132
    %p136 = pneg %p130
    %p137 = scmp.eq.s32.totalorder %s11, 1
    %p138 = por %p136, %p137
    %p139 = scmp.ne.s32.totalorder %s131, %s134
    %p140 = scmp.eq.s32.totalorder %s11, 0
    %p141 = por %p139, %p140
    %p142 = scmp.ne.s32.totalorder %s131, %s134
    %p143 = scmp.eq.s32.totalorder %s16, 1
    %p144 = por %p142, %p143
    %p145 = scmp.ne.s32.totalorder %s134, %s135
    %p146 = scmp.eq.s32.totalorder %s16, 0
    %p147 = por %p145, %p146
    %p148 = scmp.ne.s32.totalorder %s134, %s135
    %p149 = scmp.eq.s32.totalorder %s17, 1
    %p150 = por %p148, %p149
    %p152 = scmp.ne.s32.totalorder %s135, %s151
    %p153 = scmp.eq.s32.totalorder %s17, 0
    %p154 = por %p152, %p153
    %p155 = scmp.le.s32.totalorder 1, %s11
    %p156 = scmp.lt.s32.totalorder %s11, 3
    %p157 = pnand %p155, %p156
    %p158 = pneg %p157
    // Predicated region
    $region9: #{tpu_custom_call.1} parent=5 // pred_check
      _
    $region10: #{tpu_custom_call.1} parent=5 // pred_check_branch
      %160 = sbr.rel (%p157) target = $region12
    $region11: #{tpu_custom_call.1} parent=5 // pred_region
      %s161 = ssub.s32 %s11, 1
      // Predicated region
      $region13: #{tpu_custom_call.1} parent=11 // pred_check
        %p162 = pneg %p58
      $region14: #{tpu_custom_call.1} parent=11 // pred_check_branch
        %164 = sbr.rel (%p162) target = $region16
      $region15: #{tpu_custom_call.1} parent=11 // pred_region
        _
      $region16: #{tpu_custom_call.1} parent=11 // pred_fallthru
        _
      // Predicated region
      $region17: #{tpu_custom_call.1} parent=11 // pred_check
        %p165 = pneg %p79
      $region18: #{tpu_custom_call.1} parent=11 // pred_check_branch
        %167 = sbr.rel (%p165) target = $region20
      $region19: #{tpu_custom_call.1} parent=11 // pred_region
        _
      $region20: #{tpu_custom_call.1} parent=11 // pred_fallthru
        _
      // Predicated region
      $region21: #{tpu_custom_call.1} parent=11 // pred_check
        %p168 = pneg %p100
      $region22: #{tpu_custom_call.1} parent=11 // pred_check_branch
        %170 = sbr.rel (%p168) target = $region24
      $region23: #{tpu_custom_call.1} parent=11 // pred_region
        _
      $region24: #{tpu_custom_call.1} parent=11 // pred_fallthru
        _
      // Predicated region
      $region25: #{tpu_custom_call.1} parent=11 // pred_check
        %p171 = pneg %p121
      $region26: #{tpu_custom_call.1} parent=11 // pred_check_branch
        %173 = sbr.rel (%p171) target = $region28
      $region27: #{tpu_custom_call.1} parent=11 // pred_region
        _
      $region28: #{tpu_custom_call.1} parent=11 // pred_fallthru
        _
    $region12: #{tpu_custom_call.1} parent=5 // pred_fallthru
      _
    %p174 = scmp.lt.s32.totalorder %s11, 2
    // Predicated region
    $region29: #{tpu_custom_call.1} parent=5 // pred_check
      %p175 = pneg %p174
    $region30: #{tpu_custom_call.1} parent=5 // pred_check_branch
      %177 = sbr.rel (%p175) target = $region32
    $region31: #{tpu_custom_call.1} parent=5 // pred_region
      // Predicated region
      $region33: #{tpu_custom_call.1} parent=31 // pred_check
        %p178 = pneg %p31
      $region34: #{tpu_custom_call.1} parent=31 // pred_check_branch
        %180 = sbr.rel (%p178) target = $region36
      $region35: #{tpu_custom_call.1} parent=31 // pred_region
        %p181 = scmp.lt.s32.totalorder %s11, 1
        %s182 = scalar_select %p181, %s11, 1
        %s183 = smul.addr %s182, 32
        %s184 = smul.addr %s183, 4
        %s185 = scalar_lea.vmem %s0, %s184
      $region36: #{tpu_custom_call.1} parent=31 // pred_fallthru
        _
    $region32: #{tpu_custom_call.1} parent=5 // pred_fallthru
      _
    %p186 = scmp.le.s32.totalorder 1, %s11
    %p187 = scmp.lt.s32.totalorder %s11, 3
    %p188 = pnand %p186, %p187
    %p189 = pneg %p188
    // Predicated region
    $region37: #{tpu_custom_call.1} parent=5 // pred_check
      _
    $region38: #{tpu_custom_call.1} parent=5 // pred_check_branch
      %191 = sbr.rel (%p188) target = $region40
    $region39: #{tpu_custom_call.1} parent=5 // pred_region
      %s192 = ssub.s32 %s11, 1
      %p193 = scmp.lt.s32.totalorder %s16, 1
      %s194 = scalar_select %p193, %s16, 1
      %s195 = smul.addr %s194, 32
      %s196 = smul.addr %s195, 4
      %s197 = scalar_lea.vmem %s0, %s196
      %p198 = pneg %p37
      %p199 = pneg %p34
      %p200 = pneg %p58
      %p201 = pneg %p55
      %p202 = pneg %p79
      %p203 = pneg %p76
      %p204 = pneg %p100
      %p205 = pneg %p97
      %p206 = pneg %p121
      %p207 = pneg %p118
      %p208 = pneg %p147
      %p209 = pneg %p144
      %p210 = scmp.lt.s32.totalorder %s16, 1
      %s211 = scalar_select %p210, %s16, 1
      %s212 = smul.addr %s211, 32
      %s213 = smul.addr %s212, 4
      %s214 = scalar_lea.vmem %s5, %s213
      %p215 = scmp.lt.s32.totalorder %s16, 1
      %s216 = scalar_select %p215, %s16, 1
      %s217 = smul.addr %s216, 32
      %s218 = smul.addr %s217, 4
      %s219 = scalar_lea.vmem %s0, %s218
      %p220 = scmp.lt.s32.totalorder %s16, 1
      %s221 = scalar_select %p220, %s16, 1
      %s222 = smul.addr %s221, 32
      %s223 = smul.addr %s222, 4
      %s224 = scalar_lea.vmem %s5, %s223
      %v226 = vld [vmem:[%s219] sm:$0xf]
      %v227 = vld [vmem:[%s219 + $0x4] sm:$0xf]
      %v228 = vld [vmem:[%s219 + $0x8] sm:$0xf]
      %v229 = vld [vmem:[%s219 + $0xc] sm:$0xf]
      %v230 = vld [vmem:[%s219 + $0x10] sm:$0xf]
      %v231 = vld [vmem:[%s219 + $0x14] sm:$0xf]
      %v232 = vld [vmem:[%s219 + $0x18] sm:$0xf]
      %v233 = vld [vmem:[%s219 + $0x1c] sm:$0xf]
      %v234 = vld [vmem:[%s219 + $0x20] sm:$0xf]
      %v235 = vld [vmem:[%s219 + $0x24] sm:$0xf]
      %v236 = vld [vmem:[%s219 + $0x28] sm:$0xf]
      %v237 = vld [vmem:[%s219 + $0x2c] sm:$0xf]
      %v238 = vld [vmem:[%s219 + $0x30] sm:$0xf]
      %v239 = vld [vmem:[%s219 + $0x34] sm:$0xf]
      %v240 = vld [vmem:[%s219 + $0x38] sm:$0xf]
      %v241 = vld [vmem:[%s219 + $0x3c] sm:$0xf]
      %v242 = vld [vmem:[%s219 + $0x40] sm:$0xf]
      %v243 = vld [vmem:[%s219 + $0x44] sm:$0xf]
      %v244 = vld [vmem:[%s219 + $0x48] sm:$0xf]
      %v245 = vld [vmem:[%s219 + $0x4c] sm:$0xf]
      %v246 = vld [vmem:[%s219 + $0x50] sm:$0xf]
      %v247 = vld [vmem:[%s219 + $0x54] sm:$0xf]
      %v248 = vld [vmem:[%s219 + $0x58] sm:$0xf]
      %v249 = vld [vmem:[%s219 + $0x5c] sm:$0xf]
      %v250 = vld [vmem:[%s219 + $0x60] sm:$0xf]
      %v251 = vld [vmem:[%s219 + $0x64] sm:$0xf]
      %v252 = vld [vmem:[%s219 + $0x68] sm:$0xf]
      %v253 = vld [vmem:[%s219 + $0x6c] sm:$0xf]
      %v254 = vld [vmem:[%s219 + $0x70] sm:$0xf]
      %v255 = vld [vmem:[%s219 + $0x74] sm:$0xf]
      %v256 = vld [vmem:[%s219 + $0x78] sm:$0xf]
      %v257 = vld [vmem:[%s219 + $0x7c] sm:$0xf]
      %v258 = vlaneseq
      %v259 = vshrl.u32 %v258, 7
      %v260 = vadd.s32 %v259, 8
      %v261 = vadd.s32 %v259, 16
      %v262 = vadd.s32 %v259, 24
      %v263 = vadd.s32 %v259, 32
      %v264 = vadd.s32 %v259, 40
      %v265 = vadd.s32 %v259, 48
      %v266 = vadd.s32 %v259, 56
      %v267 = vadd.s32 %v259, 64
      %v268 = vadd.s32 %v259, 72
      %v269 = vadd.s32 %v259, 80
      %v270 = vadd.s32 %v259, 88
      %v271 = vadd.s32 %v259, 96
      %v272 = vadd.s32 %v259, 104
      %v273 = vadd.s32 %v259, 112
      %v274 = vadd.s32 %v259, 120
      %v275 = vadd.s32 %v259, 128
      %v276 = vadd.s32 %v259, 136
      %v277 = vadd.s32 %v259, 144
      %v278 = vadd.s32 %v259, 152
      %v279 = vadd.s32 %v259, 160
      %v280 = vadd.s32 %v259, 168
      %v281 = vadd.s32 %v259, 176
      %v282 = vadd.s32 %v259, 184
      %v283 = vadd.s32 %v259, 192
      %v284 = vadd.s32 %v259, 200
      %v285 = vadd.s32 %v259, 208
      %v286 = vadd.s32 %v259, 216
      %v287 = vadd.s32 %v259, 224
      %v288 = vadd.s32 %v259, 232
      %v289 = vadd.s32 %v259, 240
      %v290 = vadd.s32 %v259, 248
      %vm291 = vcmp.lt.s32.totalorder %v259, 0
      %v292 = vsub.s32 0, %v259
      %v293 = vsel %vm291, %v292, %v259
      %v294 = vshrl.u32 %v293, 4
      %v295 = vand.u32 %v293, 15
      %v296 = vsub.s32 0, %v295
      %v297 = vsel %vm291, %v296, %v295
      %vm298 = vcmp.lt.s32.totalorder %v260, 0
      %v299 = vsub.s32 0, %v260
      %v300 = vsel %vm298, %v299, %v260
      %v301 = vshrl.u32 %v300, 4
      %v302 = vand.u32 %v300, 15
      %v303 = vsub.s32 0, %v302
      %v304 = vsel %vm298, %v303, %v302
      %vm305 = vcmp.lt.s32.totalorder %v261, 0
      %v306 = vsub.s32 0, %v261
      %v307 = vsel %vm305, %v306, %v261
      %v308 = vshrl.u32 %v307, 4
      %v309 = vand.u32 %v307, 15
      %v310 = vsub.s32 0, %v309
      %v311 = vsel %vm305, %v310, %v309
      %vm312 = vcmp.lt.s32.totalorder %v262, 0
      %v313 = vsub.s32 0, %v262
      %v314 = vsel %vm312, %v313, %v262
      %v315 = vshrl.u32 %v314, 4
      %v316 = vand.u32 %v314, 15
      %v317 = vsub.s32 0, %v316
      %v318 = vsel %vm312, %v317, %v316
      %vm319 = vcmp.lt.s32.totalorder %v263, 0
      %v320 = vsub.s32 0, %v263
      %v321 = vsel %vm319, %v320, %v263
      %v322 = vshrl.u32 %v321, 4
      %v323 = vand.u32 %v321, 15
      %v324 = vsub.s32 0, %v323
      %v325 = vsel %vm319, %v324, %v323
      %vm326 = vcmp.lt.s32.totalorder %v264, 0
      %v327 = vsub.s32 0, %v264
      %v328 = vsel %vm326, %v327, %v264
      %v329 = vshrl.u32 %v328, 4
      %v330 = vand.u32 %v328, 15
      %v331 = vsub.s32 0, %v330
      %v332 = vsel %vm326, %v331, %v330
      %vm333 = vcmp.lt.s32.totalorder %v265, 0
      %v334 = vsub.s32 0, %v265
      %v335 = vsel %vm333, %v334, %v265
      %v336 = vshrl.u32 %v335, 4
      %v337 = vand.u32 %v335, 15
      %v338 = vsub.s32 0, %v337
      %v339 = vsel %vm333, %v338, %v337
      %vm340 = vcmp.lt.s32.totalorder %v266, 0
      %v341 = vsub.s32 0, %v266
      %v342 = vsel %vm340, %v341, %v266
      %v343 = vshrl.u32 %v342, 4
      %v344 = vand.u32 %v342, 15
      %v345 = vsub.s32 0, %v344
      %v346 = vsel %vm340, %v345, %v344
      %vm347 = vcmp.lt.s32.totalorder %v267, 0
      %v348 = vsub.s32 0, %v267
      %v349 = vsel %vm347, %v348, %v267
      %v350 = vshrl.u32 %v349, 4
      %v351 = vand.u32 %v349, 15
      %v352 = vsub.s32 0, %v351
      %v353 = vsel %vm347, %v352, %v351
      %vm354 = vcmp.lt.s32.totalorder %v268, 0
      %v355 = vsub.s32 0, %v268
      %v356 = vsel %vm354, %v355, %v268
      %v357 = vshrl.u32 %v356, 4
      %v358 = vand.u32 %v356, 15
      %v359 = vsub.s32 0, %v358
      %v360 = vsel %vm354, %v359, %v358
      %vm361 = vcmp.lt.s32.totalorder %v269, 0
      %v362 = vsub.s32 0, %v269
      %v363 = vsel %vm361, %v362, %v269
      %v364 = vshrl.u32 %v363, 4
      %v365 = vand.u32 %v363, 15
      %v366 = vsub.s32 0, %v365
      %v367 = vsel %vm361, %v366, %v365
      %vm368 = vcmp.lt.s32.totalorder %v270, 0
      %v369 = vsub.s32 0, %v270
      %v370 = vsel %vm368, %v369, %v270
      %v371 = vshrl.u32 %v370, 4
      %v372 = vand.u32 %v370, 15
      %v373 = vsub.s32 0, %v372
      %v374 = vsel %vm368, %v373, %v372
      %vm375 = vcmp.lt.s32.totalorder %v271, 0
      %v376 = vsub.s32 0, %v271
      %v377 = vsel %vm375, %v376, %v271
      %v378 = vshrl.u32 %v377, 4
      %v379 = vand.u32 %v377, 15
      %v380 = vsub.s32 0, %v379
      %v381 = vsel %vm375, %v380, %v379
      %vm382 = vcmp.lt.s32.totalorder %v272, 0
      %v383 = vsub.s32 0, %v272
      %v384 = vsel %vm382, %v383, %v272
      %v385 = vshrl.u32 %v384, 4
      %v386 = vand.u32 %v384, 15
      %v387 = vsub.s32 0, %v386
      %v388 = vsel %vm382, %v387, %v386
      %vm389 = vcmp.lt.s32.totalorder %v273, 0
      %v390 = vsub.s32 0, %v273
      %v391 = vsel %vm389, %v390, %v273
      %v392 = vshrl.u32 %v391, 4
      %v393 = vand.u32 %v391, 15
      %v394 = vsub.s32 0, %v393
      %v395 = vsel %vm389, %v394, %v393
      %vm396 = vcmp.lt.s32.totalorder %v274, 0
      %v397 = vsub.s32 0, %v274
      %v398 = vsel %vm396, %v397, %v274
      %v399 = vshrl.u32 %v398, 4
      %v400 = vand.u32 %v398, 15
      %v401 = vsub.s32 0, %v400
      %v402 = vsel %vm396, %v401, %v400
      %vm403 = vcmp.lt.s32.totalorder %v275, 0
      %v404 = vsub.s32 0, %v275
      %v405 = vsel %vm403, %v404, %v275
      %v406 = vshrl.u32 %v405, 4
      %v407 = vand.u32 %v405, 15
      %v408 = vsub.s32 0, %v407
      %v409 = vsel %vm403, %v408, %v407
      %vm410 = vcmp.lt.s32.totalorder %v276, 0
      %v411 = vsub.s32 0, %v276
      %v412 = vsel %vm410, %v411, %v276
      %v413 = vshrl.u32 %v412, 4
      %v414 = vand.u32 %v412, 15
      %v415 = vsub.s32 0, %v414
      %v416 = vsel %vm410, %v415, %v414
      %vm417 = vcmp.lt.s32.totalorder %v277, 0
      %v418 = vsub.s32 0, %v277
      %v419 = vsel %vm417, %v418, %v277
      %v420 = vshrl.u32 %v419, 4
      %v421 = vand.u32 %v419, 15
      %v422 = vsub.s32 0, %v421
      %v423 = vsel %vm417, %v422, %v421
      %vm424 = vcmp.lt.s32.totalorder %v278, 0
      %v425 = vsub.s32 0, %v278
      %v426 = vsel %vm424, %v425, %v278
      %v427 = vshrl.u32 %v426, 4
      %v428 = vand.u32 %v426, 15
      %v429 = vsub.s32 0, %v428
      %v430 = vsel %vm424, %v429, %v428
      %vm431 = vcmp.lt.s32.totalorder %v279, 0
      %v432 = vsub.s32 0, %v279
      %v433 = vsel %vm431, %v432, %v279
      %v434 = vshrl.u32 %v433, 4
      %v435 = vand.u32 %v433, 15
      %v436 = vsub.s32 0, %v435
      %v437 = vsel %vm431, %v436, %v435
      %vm438 = vcmp.lt.s32.totalorder %v280, 0
      %v439 = vsub.s32 0, %v280
      %v440 = vsel %vm438, %v439, %v280
      %v441 = vshrl.u32 %v440, 4
      %v442 = vand.u32 %v440, 15
      %v443 = vsub.s32 0, %v442
      %v444 = vsel %vm438, %v443, %v442
      %vm445 = vcmp.lt.s32.totalorder %v281, 0
      %v446 = vsub.s32 0, %v281
      %v447 = vsel %vm445, %v446, %v281
      %v448 = vshrl.u32 %v447, 4
      %v449 = vand.u32 %v447, 15
      %v450 = vsub.s32 0, %v449
      %v451 = vsel %vm445, %v450, %v449
      %vm452 = vcmp.lt.s32.totalorder %v282, 0
      %v453 = vsub.s32 0, %v282
      %v454 = vsel %vm452, %v453, %v282
      %v455 = vshrl.u32 %v454, 4
      %v456 = vand.u32 %v454, 15
      %v457 = vsub.s32 0, %v456
      %v458 = vsel %vm452, %v457, %v456
      %vm459 = vcmp.lt.s32.totalorder %v283, 0
      %v460 = vsub.s32 0, %v283
      %v461 = vsel %vm459, %v460, %v283
      %v462 = vshrl.u32 %v461, 4
      %v463 = vand.u32 %v461, 15
      %v464 = vsub.s32 0, %v463
      %v465 = vsel %vm459, %v464, %v463
      %vm466 = vcmp.lt.s32.totalorder %v284, 0
      %v467 = vsub.s32 0, %v284
      %v468 = vsel %vm466, %v467, %v284
      %v469 = vshrl.u32 %v468, 4
      %v470 = vand.u32 %v468, 15
      %v471 = vsub.s32 0, %v470
      %v472 = vsel %vm466, %v471, %v470
      %vm473 = vcmp.lt.s32.totalorder %v285, 0
      %v474 = vsub.s32 0, %v285
      %v475 = vsel %vm473, %v474, %v285
      %v476 = vshrl.u32 %v475, 4
      %v477 = vand.u32 %v475, 15
      %v478 = vsub.s32 0, %v477
      %v479 = vsel %vm473, %v478, %v477
      %vm480 = vcmp.lt.s32.totalorder %v286, 0
      %v481 = vsub.s32 0, %v286
      %v482 = vsel %vm480, %v481, %v286
      %v483 = vshrl.u32 %v482, 4
      %v484 = vand.u32 %v482, 15
      %v485 = vsub.s32 0, %v484
      %v486 = vsel %vm480, %v485, %v484
      %vm487 = vcmp.lt.s32.totalorder %v287, 0
      %v488 = vsub.s32 0, %v287
      %v489 = vsel %vm487, %v488, %v287
      %v490 = vshrl.u32 %v489, 4
      %v491 = vand.u32 %v489, 15
      %v492 = vsub.s32 0, %v491
      %v493 = vsel %vm487, %v492, %v491
      %vm494 = vcmp.lt.s32.totalorder %v288, 0
      %v495 = vsub.s32 0, %v288
      %v496 = vsel %vm494, %v495, %v288
      %v497 = vshrl.u32 %v496, 4
      %v498 = vand.u32 %v496, 15
      %v499 = vsub.s32 0, %v498
      %v500 = vsel %vm494, %v499, %v498
      %vm501 = vcmp.lt.s32.totalorder %v289, 0
      %v502 = vsub.s32 0, %v289
      %v503 = vsel %vm501, %v502, %v289
      %v504 = vshrl.u32 %v503, 4
      %v505 = vand.u32 %v503, 15
      %v506 = vsub.s32 0, %v505
      %v507 = vsel %vm501, %v506, %v505
      %vm508 = vcmp.lt.s32.totalorder %v290, 0
      %v509 = vsub.s32 0, %v290
      %v510 = vsel %vm508, %v509, %v290
      %v511 = vshrl.u32 %v510, 4
      %v512 = vand.u32 %v510, 15
      %v513 = vsub.s32 0, %v512
      %v514 = vsel %vm508, %v513, %v512
      %vm515 = vcmp.ne.s32.totalorder %v297, 0
      %vm516 = vcmp.ne.s32.totalorder %v304, 0
      %vm517 = vcmp.ne.s32.totalorder %v311, 0
      %vm518 = vcmp.ne.s32.totalorder %v318, 0
      %vm519 = vcmp.ne.s32.totalorder %v325, 0
      %vm520 = vcmp.ne.s32.totalorder %v332, 0
      %vm521 = vcmp.ne.s32.totalorder %v339, 0
      %vm522 = vcmp.ne.s32.totalorder %v346, 0
      %vm523 = vcmp.ne.s32.totalorder %v353, 0
      %vm524 = vcmp.ne.s32.totalorder %v360, 0
      %vm525 = vcmp.ne.s32.totalorder %v367, 0
      %vm526 = vcmp.ne.s32.totalorder %v374, 0
      %vm527 = vcmp.ne.s32.totalorder %v381, 0
      %vm528 = vcmp.ne.s32.totalorder %v388, 0
      %vm529 = vcmp.ne.s32.totalorder %v395, 0
      %vm530 = vcmp.ne.s32.totalorder %v402, 0
      %vm531 = vcmp.ne.s32.totalorder %v409, 0
      %vm532 = vcmp.ne.s32.totalorder %v416, 0
      %vm533 = vcmp.ne.s32.totalorder %v423, 0
      %vm534 = vcmp.ne.s32.totalorder %v430, 0
      %vm535 = vcmp.ne.s32.totalorder %v437, 0
      %vm536 = vcmp.ne.s32.totalorder %v444, 0
      %vm537 = vcmp.ne.s32.totalorder %v451, 0
      %vm538 = vcmp.ne.s32.totalorder %v458, 0
      %vm539 = vcmp.ne.s32.totalorder %v465, 0
      %vm540 = vcmp.ne.s32.totalorder %v472, 0
      %vm541 = vcmp.ne.s32.totalorder %v479, 0
      %vm542 = vcmp.ne.s32.totalorder %v486, 0
      %vm543 = vcmp.ne.s32.totalorder %v493, 0
      %vm544 = vcmp.ne.s32.totalorder %v500, 0
      %vm545 = vcmp.ne.s32.totalorder %v507, 0
      %vm546 = vcmp.ne.s32.totalorder %v514, 0
      %vm547 = vcmp.lt.s32.totalorder %v297, 0
      %vm548 = vcmp.lt.s32.totalorder %v304, 0
      %vm549 = vcmp.lt.s32.totalorder %v311, 0
      %vm550 = vcmp.lt.s32.totalorder %v318, 0
      %vm551 = vcmp.lt.s32.totalorder %v325, 0
      %vm552 = vcmp.lt.s32.totalorder %v332, 0
      %vm553 = vcmp.lt.s32.totalorder %v339, 0
      %vm554 = vcmp.lt.s32.totalorder %v346, 0
      %vm555 = vcmp.lt.s32.totalorder %v353, 0
      %vm556 = vcmp.lt.s32.totalorder %v360, 0
      %vm557 = vcmp.lt.s32.totalorder %v367, 0
      %vm558 = vcmp.lt.s32.totalorder %v374, 0
      %vm559 = vcmp.lt.s32.totalorder %v381, 0
      %vm560 = vcmp.lt.s32.totalorder %v388, 0
      %vm561 = vcmp.lt.s32.totalorder %v395, 0
      %vm562 = vcmp.lt.s32.totalorder %v402, 0
      %vm563 = vcmp.lt.s32.totalorder %v409, 0
      %vm564 = vcmp.lt.s32.totalorder %v416, 0
      %vm565 = vcmp.lt.s32.totalorder %v423, 0
      %vm566 = vcmp.lt.s32.totalorder %v430, 0
      %vm567 = vcmp.lt.s32.totalorder %v437, 0
      %vm568 = vcmp.lt.s32.totalorder %v444, 0
      %vm569 = vcmp.lt.s32.totalorder %v451, 0
      %vm570 = vcmp.lt.s32.totalorder %v458, 0
      %vm571 = vcmp.lt.s32.totalorder %v465, 0
      %vm572 = vcmp.lt.s32.totalorder %v472, 0
      %vm573 = vcmp.lt.s32.totalorder %v479, 0
      %vm574 = vcmp.lt.s32.totalorder %v486, 0
      %vm575 = vcmp.lt.s32.totalorder %v493, 0
      %vm576 = vcmp.lt.s32.totalorder %v500, 0
      %vm577 = vcmp.lt.s32.totalorder %v507, 0
      %vm578 = vcmp.lt.s32.totalorder %v514, 0
      %vm579 = vmand %vm547, %vm515
      %vm580 = vmand %vm548, %vm516
      %vm581 = vmand %vm549, %vm517
      %vm582 = vmand %vm550, %vm518
      %vm583 = vmand %vm551, %vm519
      %vm584 = vmand %vm552, %vm520
      %vm585 = vmand %vm553, %vm521
      %vm586 = vmand %vm554, %vm522
      %vm587 = vmand %vm555, %vm523
      %vm588 = vmand %vm556, %vm524
      %vm589 = vmand %vm557, %vm525
      %vm590 = vmand %vm558, %vm526
      %vm591 = vmand %vm559, %vm527
      %vm592 = vmand %vm560, %vm528
      %vm593 = vmand %vm561, %vm529
      %vm594 = vmand %vm562, %vm530
      %vm595 = vmand %vm563, %vm531
      %vm596 = vmand %vm564, %vm532
      %vm597 = vmand %vm565, %vm533
      %vm598 = vmand %vm566, %vm534
      %vm599 = vmand %vm567, %vm535
      %vm600 = vmand %vm568, %vm536
      %vm601 = vmand %vm569, %vm537
      %vm602 = vmand %vm570, %vm538
      %vm603 = vmand %vm571, %vm539
      %vm604 = vmand %vm572, %vm540
      %vm605 = vmand %vm573, %vm541
      %vm606 = vmand %vm574, %vm542
      %vm607 = vmand %vm575, %vm543
      %vm608 = vmand %vm576, %vm544
      %vm609 = vmand %vm577, %vm545
      %vm610 = vmand %vm578, %vm546
      %v611 = vadd.s32 %v297, 16
      %v612 = vadd.s32 %v304, 16
      %v613 = vadd.s32 %v311, 16
      %v614 = vadd.s32 %v318, 16
      %v615 = vadd.s32 %v325, 16
      %v616 = vadd.s32 %v332, 16
      %v617 = vadd.s32 %v339, 16
      %v618 = vadd.s32 %v346, 16
      %v619 = vadd.s32 %v353, 16
      %v620 = vadd.s32 %v360, 16
      %v621 = vadd.s32 %v367, 16
      %v622 = vadd.s32 %v374, 16
      %v623 = vadd.s32 %v381, 16
      %v624 = vadd.s32 %v388, 16
      %v625 = vadd.s32 %v395, 16
      %v626 = vadd.s32 %v402, 16
      %v627 = vadd.s32 %v409, 16
      %v628 = vadd.s32 %v416, 16
      %v629 = vadd.s32 %v423, 16
      %v630 = vadd.s32 %v430, 16
      %v631 = vadd.s32 %v437, 16
      %v632 = vadd.s32 %v444, 16
      %v633 = vadd.s32 %v451, 16
      %v634 = vadd.s32 %v458, 16
      %v635 = vadd.s32 %v465, 16
      %v636 = vadd.s32 %v472, 16
      %v637 = vadd.s32 %v479, 16
      %v638 = vadd.s32 %v486, 16
      %v639 = vadd.s32 %v493, 16
      %v640 = vadd.s32 %v500, 16
      %v641 = vadd.s32 %v507, 16
      %v642 = vadd.s32 %v514, 16
      %v643 = vsel %vm579, %v611, %v297
      %v644 = vsel %vm580, %v612, %v304
      %v645 = vsel %vm581, %v613, %v311
      %v646 = vsel %vm582, %v614, %v318
      %v647 = vsel %vm583, %v615, %v325
      %v648 = vsel %vm584, %v616, %v332
      %v649 = vsel %vm585, %v617, %v339
      %v650 = vsel %vm586, %v618, %v346
      %v651 = vsel %vm587, %v619, %v353
      %v652 = vsel %vm588, %v620, %v360
      %v653 = vsel %vm589, %v621, %v367
      %v654 = vsel %vm590, %v622, %v374
      %v655 = vsel %vm591, %v623, %v381
      %v656 = vsel %vm592, %v624, %v388
      %v657 = vsel %vm593, %v625, %v395
      %v658 = vsel %vm594, %v626, %v402
      %v659 = vsel %vm595, %v627, %v409
      %v660 = vsel %vm596, %v628, %v416
      %v661 = vsel %vm597, %v629, %v423
      %v662 = vsel %vm598, %v630, %v430
      %v663 = vsel %vm599, %v631, %v437
      %v664 = vsel %vm600, %v632, %v444
      %v665 = vsel %vm601, %v633, %v451
      %v666 = vsel %vm602, %v634, %v458
      %v667 = vsel %vm603, %v635, %v465
      %v668 = vsel %vm604, %v636, %v472
      %v669 = vsel %vm605, %v637, %v479
      %v670 = vsel %vm606, %v638, %v486
      %v671 = vsel %vm607, %v639, %v493
      %v672 = vsel %vm608, %v640, %v500
      %v673 = vsel %vm609, %v641, %v507
      %v674 = vsel %vm610, %v642, %v514
      %vm675 = vcmp.gt.s32.totalorder %v643, 0
      %vm676 = vcmp.gt.s32.totalorder %v644, 0
      %vm677 = vcmp.gt.s32.totalorder %v645, 0
      %vm678 = vcmp.gt.s32.totalorder %v646, 0
      %vm679 = vcmp.gt.s32.totalorder %v647, 0
      %vm680 = vcmp.gt.s32.totalorder %v648, 0
      %vm681 = vcmp.gt.s32.totalorder %v649, 0
      %vm682 = vcmp.gt.s32.totalorder %v650, 0
      %vm683 = vcmp.gt.s32.totalorder %v651, 0
      %vm684 = vcmp.gt.s32.totalorder %v652, 0
      %vm685 = vcmp.gt.s32.totalorder %v653, 0
      %vm686 = vcmp.gt.s32.totalorder %v654, 0
      %vm687 = vcmp.gt.s32.totalorder %v655, 0
      %vm688 = vcmp.gt.s32.totalorder %v656, 0
      %vm689 = vcmp.gt.s32.totalorder %v657, 0
      %vm690 = vcmp.gt.s32.totalorder %v658, 0
      %vm691 = vcmp.gt.s32.totalorder %v659, 0
      %vm692 = vcmp.gt.s32.totalorder %v660, 0
      %vm693 = vcmp.gt.s32.totalorder %v661, 0
      %vm694 = vcmp.gt.s32.totalorder %v662, 0
      %vm695 = vcmp.gt.s32.totalorder %v663, 0
      %vm696 = vcmp.gt.s32.totalorder %v664, 0
      %vm697 = vcmp.gt.s32.totalorder %v665, 0
      %vm698 = vcmp.gt.s32.totalorder %v666, 0
      %vm699 = vcmp.gt.s32.totalorder %v667, 0
      %vm700 = vcmp.gt.s32.totalorder %v668, 0
      %vm701 = vcmp.gt.s32.totalorder %v669, 0
      %vm702 = vcmp.gt.s32.totalorder %v670, 0
      %vm703 = vcmp.gt.s32.totalorder %v671, 0
      %vm704 = vcmp.gt.s32.totalorder %v672, 0
      %vm705 = vcmp.gt.s32.totalorder %v673, 0
      %vm706 = vcmp.gt.s32.totalorder %v674, 0
      %vm707 = vcmp.lt.s32.totalorder %v643, 15
      %vm708 = vcmp.lt.s32.totalorder %v644, 15
      %vm709 = vcmp.lt.s32.totalorder %v645, 15
      %vm710 = vcmp.lt.s32.totalorder %v646, 15
      %vm711 = vcmp.lt.s32.totalorder %v647, 15
      %vm712 = vcmp.lt.s32.totalorder %v648, 15
      %vm713 = vcmp.lt.s32.totalorder %v649, 15
      %vm714 = vcmp.lt.s32.totalorder %v650, 15
      %vm715 = vcmp.lt.s32.totalorder %v651, 15
      %vm716 = vcmp.lt.s32.totalorder %v652, 15
      %vm717 = vcmp.lt.s32.totalorder %v653, 15
      %vm718 = vcmp.lt.s32.totalorder %v654, 15
      %vm719 = vcmp.lt.s32.totalorder %v655, 15
      %vm720 = vcmp.lt.s32.totalorder %v656, 15
      %vm721 = vcmp.lt.s32.totalorder %v657, 15
      %vm722 = vcmp.lt.s32.totalorder %v658, 15
      %vm723 = vcmp.lt.s32.totalorder %v659, 15
      %vm724 = vcmp.lt.s32.totalorder %v660, 15
      %vm725 = vcmp.lt.s32.totalorder %v661, 15
      %vm726 = vcmp.lt.s32.totalorder %v662, 15
      %vm727 = vcmp.lt.s32.totalorder %v663, 15
      %vm728 = vcmp.lt.s32.totalorder %v664, 15
      %vm729 = vcmp.lt.s32.totalorder %v665, 15
      %vm730 = vcmp.lt.s32.totalorder %v666, 15
      %vm731 = vcmp.lt.s32.totalorder %v667, 15
      %vm732 = vcmp.lt.s32.totalorder %v668, 15
      %vm733 = vcmp.lt.s32.totalorder %v669, 15
      %vm734 = vcmp.lt.s32.totalorder %v670, 15
      %vm735 = vcmp.lt.s32.totalorder %v671, 15
      %vm736 = vcmp.lt.s32.totalorder %v672, 15
      %vm737 = vcmp.lt.s32.totalorder %v673, 15
      %vm738 = vcmp.lt.s32.totalorder %v674, 15
      %v771 = vunpack.c.l.b16 %v226
      %v772 = vunpack.c.l.b16 %v227
      %v773 = vunpack.c.l.b16 %v228
      %v774 = vunpack.c.l.b16 %v229
      %v775 = vunpack.c.l.b16 %v230
      %v776 = vunpack.c.l.b16 %v231
      %v777 = vunpack.c.l.b16 %v232
      %v778 = vunpack.c.l.b16 %v233
      %v779 = vunpack.c.l.b16 %v234
      %v780 = vunpack.c.l.b16 %v235
      %v781 = vunpack.c.l.b16 %v236
      %v782 = vunpack.c.l.b16 %v237
      %v783 = vunpack.c.l.b16 %v238
      %v784 = vunpack.c.l.b16 %v239
      %v785 = vunpack.c.l.b16 %v240
      %v786 = vunpack.c.l.b16 %v241
      %v787 = vunpack.c.l.b16 %v242
      %v788 = vunpack.c.l.b16 %v243
      %v789 = vunpack.c.l.b16 %v244
      %v790 = vunpack.c.l.b16 %v245
      %v791 = vunpack.c.l.b16 %v246
      %v792 = vunpack.c.l.b16 %v247
      %v793 = vunpack.c.l.b16 %v248
      %v794 = vunpack.c.l.b16 %v249
      %v795 = vunpack.c.l.b16 %v250
      %v796 = vunpack.c.l.b16 %v251
      %v797 = vunpack.c.l.b16 %v252
      %v798 = vunpack.c.l.b16 %v253
      %v799 = vunpack.c.l.b16 %v254
      %v800 = vunpack.c.l.b16 %v255
      %v801 = vunpack.c.l.b16 %v256
      %v802 = vunpack.c.l.b16 %v257
      %v803 = vpack.c.b16 %v772, %v771
      %v804 = vpack.c.b16 %v774, %v773
      %v805 = vpack.c.b16 %v776, %v775
      %v806 = vpack.c.b16 %v778, %v777
      %v807 = vpack.c.b16 %v780, %v779
      %v808 = vpack.c.b16 %v782, %v781
      %v809 = vpack.c.b16 %v784, %v783
      %v810 = vpack.c.b16 %v786, %v785
      %v811 = vpack.c.b16 %v788, %v787
      %v812 = vpack.c.b16 %v790, %v789
      %v813 = vpack.c.b16 %v792, %v791
      %v814 = vpack.c.b16 %v794, %v793
      %v815 = vpack.c.b16 %v796, %v795
      %v816 = vpack.c.b16 %v798, %v797
      %v817 = vpack.c.b16 %v800, %v799
      %v818 = vpack.c.b16 %v802, %v801
      %819 = vrot.lane.b32.xlu0 %v803, 4
      %v820 = vpop.permute.xlu0 %819
      %821 = vrot.lane.b32.xlu0 %v804, 4
      %v822 = vpop.permute.xlu0 %821
      %823 = vrot.lane.b32.xlu0 %v805, 4
      %v824 = vpop.permute.xlu0 %823
      %825 = vrot.lane.b32.xlu0 %v806, 4
      %v826 = vpop.permute.xlu0 %825
      %827 = vrot.lane.b32.xlu0 %v807, 4
      %v828 = vpop.permute.xlu0 %827
      %829 = vrot.lane.b32.xlu0 %v808, 4
      %v830 = vpop.permute.xlu0 %829
      %831 = vrot.lane.b32.xlu0 %v809, 4
      %v832 = vpop.permute.xlu0 %831
      %833 = vrot.lane.b32.xlu0 %v810, 4
      %v834 = vpop.permute.xlu0 %833
      %835 = vrot.lane.b32.xlu0 %v811, 4
      %v836 = vpop.permute.xlu0 %835
      %837 = vrot.lane.b32.xlu0 %v812, 4
      %v838 = vpop.permute.xlu0 %837
      %839 = vrot.lane.b32.xlu0 %v813, 4
      %v840 = vpop.permute.xlu0 %839
      %841 = vrot.lane.b32.xlu0 %v814, 4
      %v842 = vpop.permute.xlu0 %841
      %843 = vrot.lane.b32.xlu0 %v815, 4
      %v844 = vpop.permute.xlu0 %843
      %845 = vrot.lane.b32.xlu0 %v816, 4
      %v846 = vpop.permute.xlu0 %845
      %847 = vrot.lane.b32.xlu0 %v817, 4
      %v848 = vpop.permute.xlu0 %847
      %849 = vrot.lane.b32.xlu0 %v818, 4
      %v850 = vpop.permute.xlu0 %849
      %vm867 = vcmask 64544
      %868 = vst.msk [vmem:[#allocation2] sm:$0xff] %vm867, %v820
      %869 = vst.msk [vmem:[#allocation2 + $0x8] sm:$0xff] %vm867, %v822
      %870 = vst.msk [vmem:[#allocation2 + $0x10] sm:$0xff] %vm867, %v824
      %871 = vst.msk [vmem:[#allocation2 + $0x18] sm:$0xff] %vm867, %v826
      %872 = vst.msk [vmem:[#allocation2 + $0x20] sm:$0xff] %vm867, %v828
      %873 = vst.msk [vmem:[#allocation2 + $0x28] sm:$0xff] %vm867, %v830
      %874 = vst.msk [vmem:[#allocation2 + $0x30] sm:$0xff] %vm867, %v832
      %875 = vst.msk [vmem:[#allocation2 + $0x38] sm:$0xff] %vm867, %v834
      %876 = vst.msk [vmem:[#allocation2 + $0x40] sm:$0xff] %vm867, %v836
      %877 = vst.msk [vmem:[#allocation2 + $0x48] sm:$0xff] %vm867, %v838
      %878 = vst.msk [vmem:[#allocation2 + $0x50] sm:$0xff] %vm867, %v840
      %879 = vst.msk [vmem:[#allocation2 + $0x58] sm:$0xff] %vm867, %v842
      %880 = vst.msk [vmem:[#allocation2 + $0x60] sm:$0xff] %vm867, %v844
      %881 = vst.msk [vmem:[#allocation2 + $0x68] sm:$0xff] %vm867, %v846
      %882 = vst.msk [vmem:[#allocation2 + $0x70] sm:$0xff] %vm867, %v848
      %883 = vst.msk [vmem:[#allocation2 + $0x78] sm:$0xff] %vm867, %v850
      %vm884 = vcmask 31744
      %885 = vst.msk [vmem:[#allocation2] sm:$0xff] %vm884, 0
      %901 = vst.msk [vmem:[#allocation2 + $0x8] sm:$0xff] %vm884, %v803
      %902 = vst.msk [vmem:[#allocation2 + $0x10] sm:$0xff] %vm884, %v804
      %903 = vst.msk [vmem:[#allocation2 + $0x18] sm:$0xff] %vm884, %v805
      %904 = vst.msk [vmem:[#allocation2 + $0x20] sm:$0xff] %vm884, %v806
      %905 = vst.msk [vmem:[#allocation2 + $0x28] sm:$0xff] %vm884, %v807
      %906 = vst.msk [vmem:[#allocation2 + $0x30] sm:$0xff] %vm884, %v808
      %907 = vst.msk [vmem:[#allocation2 + $0x38] sm:$0xff] %vm884, %v809
      %908 = vst.msk [vmem:[#allocation2 + $0x40] sm:$0xff] %vm884, %v810
      %909 = vst.msk [vmem:[#allocation2 + $0x48] sm:$0xff] %vm884, %v811
      %910 = vst.msk [vmem:[#allocation2 + $0x50] sm:$0xff] %vm884, %v812
      %911 = vst.msk [vmem:[#allocation2 + $0x58] sm:$0xff] %vm884, %v813
      %912 = vst.msk [vmem:[#allocation2 + $0x60] sm:$0xff] %vm884, %v814
      %913 = vst.msk [vmem:[#allocation2 + $0x68] sm:$0xff] %vm884, %v815
      %914 = vst.msk [vmem:[#allocation2 + $0x70] sm:$0xff] %vm884, %v816
      %915 = vst.msk [vmem:[#allocation2 + $0x78] sm:$0xff] %vm884, %v817
      %916 = vrot.lane.b32.xlu0 %v804, 8
      %v917 = vpop.permute.xlu0 %916
      %918 = vrot.lane.b32.xlu0 %v805, 8
      %v919 = vpop.permute.xlu0 %918
      %920 = vrot.lane.b32.xlu0 %v806, 8
      %v921 = vpop.permute.xlu0 %920
      %922 = vrot.lane.b32.xlu0 %v807, 8
      %v923 = vpop.permute.xlu0 %922
      %924 = vrot.lane.b32.xlu0 %v808, 8
      %v925 = vpop.permute.xlu0 %924
      %926 = vrot.lane.b32.xlu0 %v809, 8
      %v927 = vpop.permute.xlu0 %926
      %928 = vrot.lane.b32.xlu0 %v810, 8
      %v929 = vpop.permute.xlu0 %928
      %930 = vrot.lane.b32.xlu0 %v811, 8
      %v931 = vpop.permute.xlu0 %930
      %932 = vrot.lane.b32.xlu0 %v812, 8
      %v933 = vpop.permute.xlu0 %932
      %934 = vrot.lane.b32.xlu0 %v813, 8
      %v935 = vpop.permute.xlu0 %934
      %936 = vrot.lane.b32.xlu0 %v814, 8
      %v937 = vpop.permute.xlu0 %936
      %938 = vrot.lane.b32.xlu0 %v815, 8
      %v939 = vpop.permute.xlu0 %938
      %940 = vrot.lane.b32.xlu0 %v816, 8
      %v941 = vpop.permute.xlu0 %940
      %942 = vrot.lane.b32.xlu0 %v817, 8
      %v943 = vpop.permute.xlu0 %942
      %944 = vrot.lane.b32.xlu0 %v818, 8
      %v945 = vpop.permute.xlu0 %944
      %vm961 = vcmask 97344
      %962 = vst.msk [vmem:[#allocation2] sm:$0xff] %vm961, %v917
      %963 = vst.msk [vmem:[#allocation2 + $0x8] sm:$0xff] %vm961, %v919
      %964 = vst.msk [vmem:[#allocation2 + $0x10] sm:$0xff] %vm961, %v921
      %965 = vst.msk [vmem:[#allocation2 + $0x18] sm:$0xff] %vm961, %v923
      %966 = vst.msk [vmem:[#allocation2 + $0x20] sm:$0xff] %vm961, %v925
      %967 = vst.msk [vmem:[#allocation2 + $0x28] sm:$0xff] %vm961, %v927
      %968 = vst.msk [vmem:[#allocation2 + $0x30] sm:$0xff] %vm961, %v929
      %969 = vst.msk [vmem:[#allocation2 + $0x38] sm:$0xff] %vm961, %v931
      %970 = vst.msk [vmem:[#allocation2 + $0x40] sm:$0xff] %vm961, %v933
      %971 = vst.msk [vmem:[#allocation2 + $0x48] sm:$0xff] %vm961, %v935
      %972 = vst.msk [vmem:[#allocation2 + $0x50] sm:$0xff] %vm961, %v937
      %973 = vst.msk [vmem:[#allocation2 + $0x58] sm:$0xff] %vm961, %v939
      %974 = vst.msk [vmem:[#allocation2 + $0x60] sm:$0xff] %vm961, %v941
      %975 = vst.msk [vmem:[#allocation2 + $0x68] sm:$0xff] %vm961, %v943
      %976 = vst.msk [vmem:[#allocation2 + $0x70] sm:$0xff] %vm961, %v945
      %977 = vst.msk [vmem:[#allocation2 + $0x78] sm:$0xff] %vm961, 0
      %v978 = vld [vmem:[#allocation2] sm:$0xff]
      %v979 = vld [vmem:[#allocation2 + $0x8] sm:$0xff]
      %v980 = vld [vmem:[#allocation2 + $0x10] sm:$0xff]
      %v981 = vld [vmem:[#allocation2 + $0x18] sm:$0xff]
      %v982 = vld [vmem:[#allocation2 + $0x20] sm:$0xff]
      %v983 = vld [vmem:[#allocation2 + $0x28] sm:$0xff]
      %v984 = vld [vmem:[#allocation2 + $0x30] sm:$0xff]
      %v985 = vld [vmem:[#allocation2 + $0x38] sm:$0xff]
      %v986 = vld [vmem:[#allocation2 + $0x40] sm:$0xff]
      %v987 = vld [vmem:[#allocation2 + $0x48] sm:$0xff]
      %v988 = vld [vmem:[#allocation2 + $0x50] sm:$0xff]
      %v989 = vld [vmem:[#allocation2 + $0x58] sm:$0xff]
      %v990 = vld [vmem:[#allocation2 + $0x60] sm:$0xff]
      %v991 = vld [vmem:[#allocation2 + $0x68] sm:$0xff]
      %v992 = vld [vmem:[#allocation2 + $0x70] sm:$0xff]
      %v993 = vld [vmem:[#allocation2 + $0x78] sm:$0xff]
      %v994 = vld [vmem:[%s1] sm:$0xf]
      %v995 = vld [vmem:[%s1 + $0x4] sm:$0x3]
      %v998 = vunpack.c.l.b16 %v994
      %v999 = vunpack.c.l.b16 %v995
      %v1000 = vpack.c.b16 %v999, %v998
      %vm1001 = vcmask 97280
      %v1003 = vsel %vm1001, %v978, 0
      %v1006 = vsel %vm1001, %v979, 0
      %v1009 = vsel %vm1001, %v980, 0
      %v1012 = vsel %vm1001, %v981, 0
      %v1015 = vsel %vm1001, %v982, 0
      %v1018 = vsel %vm1001, %v983, 0
      %v1021 = vsel %vm1001, %v984, 0
      %v1024 = vsel %vm1001, %v985, 0
      %v1027 = vsel %vm1001, %v986, 0
      %v1030 = vsel %vm1001, %v987, 0
      %v1033 = vsel %vm1001, %v988, 0
      %v1036 = vsel %vm1001, %v989, 0
      %v1039 = vsel %vm1001, %v990, 0
      %v1042 = vsel %vm1001, %v991, 0
      %v1045 = vsel %vm1001, %v992, 0
      %v1048 = vsel %vm1001, %v993, 0
      %vm1050 = vcmask 1045504
      %v1052 = vsel %vm1050, %v1000, 0
      %1054 = vmatprep.subr.bf16.mxu0 0
      %1055 = vmatpush1.bf16.msra.mxu0 %v1052
      %1056 = vmatprep.subr.bf16.mxu0 0
      %1057 = vmatpush1.bf16.msra.mxu0 0
      %1058 = vmatprep.subr.bf16.mxu0 0
      %1059 = vmatpush1.bf16.msra.mxu0 0
      %1060 = vmatprep.subr.bf16.mxu0 0
      %1061 = vmatpush1.bf16.msra.mxu0 0
      %1062 = vmatprep.subr.bf16.mxu0 0
      %1063 = vmatpush1.bf16.msra.mxu0 0
      %1064 = vmatprep.subr.bf16.mxu0 0
      %1065 = vmatpush1.bf16.msra.mxu0 0
      %1066 = vmatprep.subr.bf16.mxu0 0
      %1067 = vmatpush1.bf16.msra.mxu0 0
      %1068 = vmatprep.subr.bf16.mxu0 0
      %1069 = vmatpush1.bf16.msra.mxu0 0
      %1070 = vmatprep.subr.bf16.mxu0 0
      %1071 = vmatpush1.bf16.msra.mxu0 0
      %1072 = vmatprep.subr.bf16.mxu0 0
      %1073 = vmatpush1.bf16.msra.mxu0 0
      %1074 = vmatprep.subr.bf16.mxu0 0
      %1075 = vmatpush1.bf16.msra.mxu0 0
      %1076 = vmatprep.subr.bf16.mxu0 0
      %1077 = vmatpush1.bf16.msra.mxu0 0
      %1078 = vmatprep.subr.bf16.mxu0 0
      %1079 = vmatpush1.bf16.msra.mxu0 0
      %1080 = vmatprep.subr.bf16.mxu0 0
      %1081 = vmatpush1.bf16.msra.mxu0 0
      %1082 = vmatprep.subr.bf16.mxu0 0
      %1083 = vmatpush1.bf16.msra.mxu0 0
      %1084 = vmatprep.subr.bf16.mxu0 0
      %1085 = vmatpush1.bf16.msra.mxu0 0
      %1086 = vmatprep.mubr.bf16.mxu0 0
      %1087 = vmatmul.mubr.bf16.gmra.mrb[0].mxu0 %v1003
      %v1088 = vpop.f32.mrb[0].mxu0
      %v1089 = vadd.f32 0.0, %v1088
      %v1090 = vpop.f32.mrb[0].mxu0
      %v1091 = vpop.f32.mrb[0].mxu0
      %v1092 = vadd.f32 0.0, %v1091
      %v1093 = vpop.f32.mrb[0].mxu0
      %1094 = vmatprep.mubr.bf16.mxu0 0
      %1095 = vmatmul.mubr.bf16.gmra.mrb[0].mxu0 %v1006
      %v1096 = vpop.f32.mrb[0].mxu0
      %v1097 = vadd.f32 0.0, %v1096
      %v1098 = vpop.f32.mrb[0].mxu0
      %v1099 = vpop.f32.mrb[0].mxu0
      %v1100 = vadd.f32 0.0, %v1099
      %v1101 = vpop.f32.mrb[0].mxu0
      %1102 = vmatprep.mubr.bf16.mxu0 0
      %1103 = vmatmul.mubr.bf16.gmra.mrb[0].mxu0 %v1009
      %v1104 = vpop.f32.mrb[0].mxu0
      %v1105 = vadd.f32 0.0, %v1104
      %v1106 = vpop.f32.mrb[0].mxu0
      %v1107 = vpop.f32.mrb[0].mxu0
      %v1108 = vadd.f32 0.0, %v1107
      %v1109 = vpop.f32.mrb[0].mxu0
      %1110 = vmatprep.mubr.bf16.mxu0 0
      %1111 = vmatmul.mubr.bf16.gmra.mrb[0].mxu0 %v1012
      %v1112 = vpop.f32.mrb[0].mxu0
      %v1113 = vadd.f32 0.0, %v1112
      %v1114 = vpop.f32.mrb[0].mxu0
      %v1115 = vpop.f32.mrb[0].mxu0
      %v1116 = vadd.f32 0.0, %v1115
      %v1117 = vpop.f32.mrb[0].mxu0
      %1118 = vmatprep.mubr.bf16.mxu0 0
      %1119 = vmatmul.mubr.bf16.gmra.mrb[0].mxu0 %v1015
      %v1120 = vpop.f32.mrb[0].mxu0
      %v1121 = vadd.f32 0.0, %v1120
      %v1122 = vpop.f32.mrb[0].mxu0
      %v1123 = vpop.f32.mrb[0].mxu0
      %v1124 = vadd.f32 0.0, %v1123
      %v1125 = vpop.f32.mrb[0].mxu0
      %1126 = vmatprep.mubr.bf16.mxu0 0
      %1127 = vmatmul.mubr.bf16.gmra.mrb[0].mxu0 %v1018
      %v1128 = vpop.f32.mrb[0].mxu0
      %v1129 = vadd.f32 0.0, %v1128
      %v1130 = vpop.f32.mrb[0].mxu0
      %v1131 = vpop.f32.mrb[0].mxu0
      %v1132 = vadd.f32 0.0, %v1131
      %v1133 = vpop.f32.mrb[0].mxu0
      %1134 = vmatprep.mubr.bf16.mxu0 0
      %1135 = vmatmul.mubr.bf16.gmra.mrb[0].mxu0 %v1021
      %v1136 = vpop.f32.mrb[0].mxu0
      %v1137 = vadd.f32 0.0, %v1136
      %v1138 = vpop.f32.mrb[0].mxu0
      %v1139 = vpop.f32.mrb[0].mxu0
      %v1140 = vadd.f32 0.0, %v1139
      %v1141 = vpop.f32.mrb[0].mxu0
      %1142 = vmatprep.mubr.bf16.mxu0 0
      %1143 = vmatmul.mubr.bf16.gmra.mrb[0].mxu0 %v1024
      %v1144 = vpop.f32.mrb[0].mxu0
      %v1145 = vadd.f32 0.0, %v1144
      %v1146 = vpop.f32.mrb[0].mxu0
      %v1147 = vpop.f32.mrb[0].mxu0
      %v1148 = vadd.f32 0.0, %v1147
      %v1149 = vpop.f32.mrb[0].mxu0
      %1150 = vmatprep.mubr.bf16.mxu0 0
      %1151 = vmatmul.mubr.bf16.gmra.mrb[0].mxu0 %v1027
      %v1152 = vpop.f32.mrb[0].mxu0
      %v1153 = vadd.f32 0.0, %v1152
      %v1154 = vpop.f32.mrb[0].mxu0
      %v1155 = vpop.f32.mrb[0].mxu0
      %v1156 = vadd.f32 0.0, %v1155
      %v1157 = vpop.f32.mrb[0].mxu0
      %1158 = vmatprep.mubr.bf16.mxu0 0
      %1159 = vmatmul.mubr.bf16.gmra.mrb[0].mxu0 %v1030
      %v1160 = vpop.f32.mrb[0].mxu0
      %v1161 = vadd.f32 0.0, %v1160
      %v1162 = vpop.f32.mrb[0].mxu0
      %v1163 = vpop.f32.mrb[0].mxu0
      %v1164 = vadd.f32 0.0, %v1163
      %v1165 = vpop.f32.mrb[0].mxu0
      %1166 = vmatprep.mubr.bf16.mxu0 0
      %1167 = vmatmul.mubr.bf16.gmra.mrb[0].mxu0 %v1033
      %v1168 = vpop.f32.mrb[0].mxu0
      %v1169 = vadd.f32 0.0, %v1168
      %v1170 = vpop.f32.mrb[0].mxu0
      %v1171 = vpop.f32.mrb[0].mxu0
      %v1172 = vadd.f32 0.0, %v1171
      %v1173 = vpop.f32.mrb[0].mxu0
      %1174 = vmatprep.mubr.bf16.mxu0 0
      %1175 = vmatmul.mubr.bf16.gmra.mrb[0].mxu0 %v1036
      %v1176 = vpop.f32.mrb[0].mxu0
      %v1177 = vadd.f32 0.0, %v1176
      %v1178 = vpop.f32.mrb[0].mxu0
      %v1179 = vpop.f32.mrb[0].mxu0
      %v1180 = vadd.f32 0.0, %v1179
      %v1181 = vpop.f32.mrb[0].mxu0
      %1182 = vmatprep.mubr.bf16.mxu0 0
      %1183 = vmatmul.mubr.bf16.gmra.mrb[0].mxu0 %v1039
      %v1184 = vpop.f32.mrb[0].mxu0
      %v1185 = vadd.f32 0.0, %v1184
      %v1186 = vpop.f32.mrb[0].mxu0
      %v1187 = vpop.f32.mrb[0].mxu0
      %v1188 = vadd.f32 0.0, %v1187
      %v1189 = vpop.f32.mrb[0].mxu0
      %1190 = vmatprep.mubr.bf16.mxu0 0
      %1191 = vmatmul.mubr.bf16.gmra.mrb[0].mxu0 %v1042
      %v1192 = vpop.f32.mrb[0].mxu0
      %v1193 = vadd.f32 0.0, %v1192
      %v1194 = vpop.f32.mrb[0].mxu0
      %v1195 = vpop.f32.mrb[0].mxu0
      %v1196 = vadd.f32 0.0, %v1195
      %v1197 = vpop.f32.mrb[0].mxu0
      %1198 = vmatprep.mubr.bf16.mxu0 0
      %1199 = vmatmul.mubr.bf16.gmra.mrb[0].mxu0 %v1045
      %v1200 = vpop.f32.mrb[0].mxu0
      %v1201 = vadd.f32 0.0, %v1200
      %v1202 = vpop.f32.mrb[0].mxu0
      %v1203 = vpop.f32.mrb[0].mxu0
      %v1204 = vadd.f32 0.0, %v1203
      %v1205 = vpop.f32.mrb[0].mxu0
      %1206 = vmatprep.mubr.bf16.mxu0 0
      %1207 = vmatmul.mubr.bf16.gmra.mrb[0].mxu0 %v1048
      %v1208 = vpop.f32.mrb[0].mxu0
      %v1209 = vadd.f32 0.0, %v1208
      %v1210 = vpop.f32.mrb[0].mxu0
      %v1211 = vpop.f32.mrb[0].mxu0
      %v1212 = vadd.f32 0.0, %v1211
      %v1213 = vpop.f32.mrb[0].mxu0
      %1214 = vdwg.mxu0
      %vm1247 = vcmask 1040384
      %v1248 = vrot.slane %v1089, 7
      %v1249 = vrot.slane %v1092, 7
      %v1250 = vsel %vm1247, %v1248, %v1249
      %v1251 = vrot.slane %v1097, 7
      %v1252 = vsel %vm1247, %v1249, %v1251
      %v1253 = vrot.slane %v1100, 7
      %v1254 = vsel %vm1247, %v1251, %v1253
      %v1255 = vrot.slane %v1105, 7
      %v1256 = vsel %vm1247, %v1253, %v1255
      %v1257 = vrot.slane %v1108, 7
      %v1258 = vsel %vm1247, %v1255, %v1257
      %v1259 = vrot.slane %v1113, 7
      %v1260 = vsel %vm1247, %v1257, %v1259
      %v1261 = vrot.slane %v1116, 7
      %v1262 = vsel %vm1247, %v1259, %v1261
      %v1263 = vrot.slane %v1121, 7
      %v1264 = vsel %vm1247, %v1261, %v1263
      %v1265 = vrot.slane %v1124, 7
      %v1266 = vsel %vm1247, %v1263, %v1265
      %v1267 = vrot.slane %v1129, 7
      %v1268 = vsel %vm1247, %v1265, %v1267
      %v1269 = vrot.slane %v1132, 7
      %v1270 = vsel %vm1247, %v1267, %v1269
      %v1271 = vrot.slane %v1137, 7
      %v1272 = vsel %vm1247, %v1269, %v1271
      %v1273 = vrot.slane %v1140, 7
      %v1274 = vsel %vm1247, %v1271, %v1273
      %v1275 = vrot.slane %v1145, 7
      %v1276 = vsel %vm1247, %v1273, %v1275
      %v1277 = vrot.slane %v1148, 7
      %v1278 = vsel %vm1247, %v1275, %v1277
      %v1279 = vrot.slane %v1153, 7
      %v1280 = vsel %vm1247, %v1277, %v1279
      %v1281 = vrot.slane %v1156, 7
      %v1282 = vsel %vm1247, %v1279, %v1281
      %v1283 = vrot.slane %v1161, 7
      %v1284 = vsel %vm1247, %v1281, %v1283
      %v1285 = vrot.slane %v1164, 7
      %v1286 = vsel %vm1247, %v1283, %v1285
      %v1287 = vrot.slane %v1169, 7
      %v1288 = vsel %vm1247, %v1285, %v1287
      %v1289 = vrot.slane %v1172, 7
      %v1290 = vsel %vm1247, %v1287, %v1289
      %v1291 = vrot.slane %v1177, 7
      %v1292 = vsel %vm1247, %v1289, %v1291
      %v1293 = vrot.slane %v1180, 7
      %v1294 = vsel %vm1247, %v1291, %v1293
      %v1295 = vrot.slane %v1185, 7
      %v1296 = vsel %vm1247, %v1293, %v1295
      %v1297 = vrot.slane %v1188, 7
      %v1298 = vsel %vm1247, %v1295, %v1297
      %v1299 = vrot.slane %v1193, 7
      %v1300 = vsel %vm1247, %v1297, %v1299
      %v1301 = vrot.slane %v1196, 7
      %v1302 = vsel %vm1247, %v1299, %v1301
      %v1303 = vrot.slane %v1201, 7
      %v1304 = vsel %vm1247, %v1301, %v1303
      %v1305 = vrot.slane %v1204, 7
      %v1306 = vsel %vm1247, %v1303, %v1305
      %v1307 = vrot.slane %v1209, 7
      %v1308 = vsel %vm1247, %v1305, %v1307
      %v1309 = vrot.slane %v1212, 7
      %v1310 = vsel %vm1247, %v1307, %v1309
      %v1343 = vsel %vm1247, 0.0, %v1248
      %vm1344 = vcmask 1046528
      %v1345 = vrot.slane %v1089, 1
      %v1346 = vrot.slane %v1092, 1
      %v1347 = vsel %vm1344, %v1345, %v1346
      %v1348 = vrot.slane %v1097, 1
      %v1349 = vsel %vm1344, %v1346, %v1348
      %v1350 = vrot.slane %v1100, 1
      %v1351 = vsel %vm1344, %v1348, %v1350
      %v1352 = vrot.slane %v1105, 1
      %v1353 = vsel %vm1344, %v1350, %v1352
      %v1354 = vrot.slane %v1108, 1
      %v1355 = vsel %vm1344, %v1352, %v1354
      %v1356 = vrot.slane %v1113, 1
      %v1357 = vsel %vm1344, %v1354, %v1356
      %v1358 = vrot.slane %v1116, 1
      %v1359 = vsel %vm1344, %v1356, %v1358
      %v1360 = vrot.slane %v1121, 1
      %v1361 = vsel %vm1344, %v1358, %v1360
      %v1362 = vrot.slane %v1124, 1
      %v1363 = vsel %vm1344, %v1360, %v1362
      %v1364 = vrot.slane %v1129, 1
      %v1365 = vsel %vm1344, %v1362, %v1364
      %v1366 = vrot.slane %v1132, 1
      %v1367 = vsel %vm1344, %v1364, %v1366
      %v1368 = vrot.slane %v1137, 1
      %v1369 = vsel %vm1344, %v1366, %v1368
      %v1370 = vrot.slane %v1140, 1
      %v1371 = vsel %vm1344, %v1368, %v1370
      %v1372 = vrot.slane %v1145, 1
      %v1373 = vsel %vm1344, %v1370, %v1372
      %v1374 = vrot.slane %v1148, 1
      %v1375 = vsel %vm1344, %v1372, %v1374
      %v1376 = vrot.slane %v1153, 1
      %v1377 = vsel %vm1344, %v1374, %v1376
      %v1378 = vrot.slane %v1156, 1
      %v1379 = vsel %vm1344, %v1376, %v1378
      %v1380 = vrot.slane %v1161, 1
      %v1381 = vsel %vm1344, %v1378, %v1380
      %v1382 = vrot.slane %v1164, 1
      %v1383 = vsel %vm1344, %v1380, %v1382
      %v1384 = vrot.slane %v1169, 1
      %v1385 = vsel %vm1344, %v1382, %v1384
      %v1386 = vrot.slane %v1172, 1
      %v1387 = vsel %vm1344, %v1384, %v1386
      %v1388 = vrot.slane %v1177, 1
      %v1389 = vsel %vm1344, %v1386, %v1388
      %v1390 = vrot.slane %v1180, 1
      %v1391 = vsel %vm1344, %v1388, %v1390
      %v1392 = vrot.slane %v1185, 1
      %v1393 = vsel %vm1344, %v1390, %v1392
      %v1394 = vrot.slane %v1188, 1
      %v1395 = vsel %vm1344, %v1392, %v1394
      %v1396 = vrot.slane %v1193, 1
      %v1397 = vsel %vm1344, %v1394, %v1396
      %v1398 = vrot.slane %v1196, 1
      %v1399 = vsel %vm1344, %v1396, %v1398
      %v1400 = vrot.slane %v1201, 1
      %v1401 = vsel %vm1344, %v1398, %v1400
      %v1402 = vrot.slane %v1204, 1
      %v1403 = vsel %vm1344, %v1400, %v1402
      %v1404 = vrot.slane %v1209, 1
      %v1405 = vsel %vm1344, %v1402, %v1404
      %v1406 = vrot.slane %v1212, 1
      %v1407 = vsel %vm1344, %v1404, %v1406
      %v1440 = vsel %vm1344, %v1406, 0.0
      %v1441 = vsel %vm675, 1, 0
      %v1442 = vsel %vm676, 1, 0
      %v1443 = vsel %vm677, 1, 0
      %v1444 = vsel %vm678, 1, 0
      %v1445 = vsel %vm679, 1, 0
      %v1446 = vsel %vm680, 1, 0
      %v1447 = vsel %vm681, 1, 0
      %v1448 = vsel %vm682, 1, 0
      %v1449 = vsel %vm683, 1, 0
      %v1450 = vsel %vm684, 1, 0
      %v1451 = vsel %vm685, 1, 0
      %v1452 = vsel %vm686, 1, 0
      %v1453 = vsel %vm687, 1, 0
      %v1454 = vsel %vm688, 1, 0
      %v1455 = vsel %vm689, 1, 0
      %v1456 = vsel %vm690, 1, 0
      %v1457 = vsel %vm691, 1, 0
      %v1458 = vsel %vm692, 1, 0
      %v1459 = vsel %vm693, 1, 0
      %v1460 = vsel %vm694, 1, 0
      %v1461 = vsel %vm695, 1, 0
      %v1462 = vsel %vm696, 1, 0
      %v1463 = vsel %vm697, 1, 0
      %v1464 = vsel %vm698, 1, 0
      %v1465 = vsel %vm699, 1, 0
      %v1466 = vsel %vm700, 1, 0
      %v1467 = vsel %vm701, 1, 0
      %v1468 = vsel %vm702, 1, 0
      %v1469 = vsel %vm703, 1, 0
      %v1470 = vsel %vm704, 1, 0
      %v1471 = vsel %vm705, 1, 0
      %v1472 = vsel %vm706, 1, 0
      %vm1473 = vcmp.eq.s32.totalorder %v1441, 1
      %vm1474 = vcmp.eq.s32.totalorder %v1442, 1
      %vm1475 = vcmp.eq.s32.totalorder %v1443, 1
      %vm1476 = vcmp.eq.s32.totalorder %v1444, 1
      %vm1477 = vcmp.eq.s32.totalorder %v1445, 1
      %vm1478 = vcmp.eq.s32.totalorder %v1446, 1
      %vm1479 = vcmp.eq.s32.totalorder %v1447, 1
      %vm1480 = vcmp.eq.s32.totalorder %v1448, 1
      %vm1481 = vcmp.eq.s32.totalorder %v1449, 1
      %vm1482 = vcmp.eq.s32.totalorder %v1450, 1
      %vm1483 = vcmp.eq.s32.totalorder %v1451, 1
      %vm1484 = vcmp.eq.s32.totalorder %v1452, 1
      %vm1485 = vcmp.eq.s32.totalorder %v1453, 1
      %vm1486 = vcmp.eq.s32.totalorder %v1454, 1
      %vm1487 = vcmp.eq.s32.totalorder %v1455, 1
      %vm1488 = vcmp.eq.s32.totalorder %v1456, 1
      %vm1489 = vcmp.eq.s32.totalorder %v1457, 1
      %vm1490 = vcmp.eq.s32.totalorder %v1458, 1
      %vm1491 = vcmp.eq.s32.totalorder %v1459, 1
      %vm1492 = vcmp.eq.s32.totalorder %v1460, 1
      %vm1493 = vcmp.eq.s32.totalorder %v1461, 1
      %vm1494 = vcmp.eq.s32.totalorder %v1462, 1
      %vm1495 = vcmp.eq.s32.totalorder %v1463, 1
      %vm1496 = vcmp.eq.s32.totalorder %v1464, 1
      %vm1497 = vcmp.eq.s32.totalorder %v1465, 1
      %vm1498 = vcmp.eq.s32.totalorder %v1466, 1
      %vm1499 = vcmp.eq.s32.totalorder %v1467, 1
      %vm1500 = vcmp.eq.s32.totalorder %v1468, 1
      %vm1501 = vcmp.eq.s32.totalorder %v1469, 1
      %vm1502 = vcmp.eq.s32.totalorder %v1470, 1
      %vm1503 = vcmp.eq.s32.totalorder %v1471, 1
      %vm1504 = vcmp.eq.s32.totalorder %v1472, 1
      %v1505 = vsel %vm1473, %v1343, 0.0
      %v1506 = vsel %vm1474, %v1250, 0.0
      %v1507 = vsel %vm1475, %v1252, 0.0
      %v1508 = vsel %vm1476, %v1254, 0.0
      %v1509 = vsel %vm1477, %v1256, 0.0
      %v1510 = vsel %vm1478, %v1258, 0.0
      %v1511 = vsel %vm1479, %v1260, 0.0
      %v1512 = vsel %vm1480, %v1262, 0.0
      %v1513 = vsel %vm1481, %v1264, 0.0
      %v1514 = vsel %vm1482, %v1266, 0.0
      %v1515 = vsel %vm1483, %v1268, 0.0
      %v1516 = vsel %vm1484, %v1270, 0.0
      %v1517 = vsel %vm1485, %v1272, 0.0
      %v1518 = vsel %vm1486, %v1274, 0.0
      %v1519 = vsel %vm1487, %v1276, 0.0
      %v1520 = vsel %vm1488, %v1278, 0.0
      %v1521 = vsel %vm1489, %v1280, 0.0
      %v1522 = vsel %vm1490, %v1282, 0.0
      %v1523 = vsel %vm1491, %v1284, 0.0
      %v1524 = vsel %vm1492, %v1286, 0.0
      %v1525 = vsel %vm1493, %v1288, 0.0
      %v1526 = vsel %vm1494, %v1290, 0.0
      %v1527 = vsel %vm1495, %v1292, 0.0
      %v1528 = vsel %vm1496, %v1294, 0.0
      %v1529 = vsel %vm1497, %v1296, 0.0
      %v1530 = vsel %vm1498, %v1298, 0.0
      %v1531 = vsel %vm1499, %v1300, 0.0
      %v1532 = vsel %vm1500, %v1302, 0.0
      %v1533 = vsel %vm1501, %v1304, 0.0
      %v1534 = vsel %vm1502, %v1306, 0.0
      %v1535 = vsel %vm1503, %v1308, 0.0
      %v1536 = vsel %vm1504, %v1310, 0.0
      %1537 = vrot.lane.b32.xlu0 %v1089, 124
      %v1538 = vpop.permute.xlu0 %1537
      %1539 = vrot.lane.b32.xlu0 %v1092, 124
      %v1540 = vpop.permute.xlu0 %1539
      %1541 = vrot.lane.b32.xlu0 %v1097, 124
      %v1542 = vpop.permute.xlu0 %1541
      %1543 = vrot.lane.b32.xlu0 %v1100, 124
      %v1544 = vpop.permute.xlu0 %1543
      %1545 = vrot.lane.b32.xlu0 %v1105, 124
      %v1546 = vpop.permute.xlu0 %1545
      %1547 = vrot.lane.b32.xlu0 %v1108, 124
      %v1548 = vpop.permute.xlu0 %1547
      %1549 = vrot.lane.b32.xlu0 %v1113, 124
      %v1550 = vpop.permute.xlu0 %1549
      %1551 = vrot.lane.b32.xlu0 %v1116, 124
      %v1552 = vpop.permute.xlu0 %1551
      %1553 = vrot.lane.b32.xlu0 %v1121, 124
      %v1554 = vpop.permute.xlu0 %1553
      %1555 = vrot.lane.b32.xlu0 %v1124, 124
      %v1556 = vpop.permute.xlu0 %1555
      %1557 = vrot.lane.b32.xlu0 %v1129, 124
      %v1558 = vpop.permute.xlu0 %1557
      %1559 = vrot.lane.b32.xlu0 %v1132, 124
      %v1560 = vpop.permute.xlu0 %1559
      %1561 = vrot.lane.b32.xlu0 %v1137, 124
      %v1562 = vpop.permute.xlu0 %1561
      %1563 = vrot.lane.b32.xlu0 %v1140, 124
      %v1564 = vpop.permute.xlu0 %1563
      %1565 = vrot.lane.b32.xlu0 %v1145, 124
      %v1566 = vpop.permute.xlu0 %1565
      %1567 = vrot.lane.b32.xlu0 %v1148, 124
      %v1568 = vpop.permute.xlu0 %1567
      %1569 = vrot.lane.b32.xlu0 %v1153, 124
      %v1570 = vpop.permute.xlu0 %1569
      %1571 = vrot.lane.b32.xlu0 %v1156, 124
      %v1572 = vpop.permute.xlu0 %1571
      %1573 = vrot.lane.b32.xlu0 %v1161, 124
      %v1574 = vpop.permute.xlu0 %1573
      %1575 = vrot.lane.b32.xlu0 %v1164, 124
      %v1576 = vpop.permute.xlu0 %1575
      %1577 = vrot.lane.b32.xlu0 %v1169, 124
      %v1578 = vpop.permute.xlu0 %1577
      %1579 = vrot.lane.b32.xlu0 %v1172, 124
      %v1580 = vpop.permute.xlu0 %1579
      %1581 = vrot.lane.b32.xlu0 %v1177, 124
      %v1582 = vpop.permute.xlu0 %1581
      %1583 = vrot.lane.b32.xlu0 %v1180, 124
      %v1584 = vpop.permute.xlu0 %1583
      %1585 = vrot.lane.b32.xlu0 %v1185, 124
      %v1586 = vpop.permute.xlu0 %1585
      %1587 = vrot.lane.b32.xlu0 %v1188, 124
      %v1588 = vpop.permute.xlu0 %1587
      %1589 = vrot.lane.b32.xlu0 %v1193, 124
      %v1590 = vpop.permute.xlu0 %1589
      %1591 = vrot.lane.b32.xlu0 %v1196, 124
      %v1592 = vpop.permute.xlu0 %1591
      %1593 = vrot.lane.b32.xlu0 %v1201, 124
      %v1594 = vpop.permute.xlu0 %1593
      %1595 = vrot.lane.b32.xlu0 %v1204, 124
      %v1596 = vpop.permute.xlu0 %1595
      %1597 = vrot.lane.b32.xlu0 %v1209, 124
      %v1598 = vpop.permute.xlu0 %1597
      %1599 = vrot.lane.b32.xlu0 %v1212, 124
      %v1600 = vpop.permute.xlu0 %1599
      %v1633 = vadd.f32 %v1505, %v1538
      %v1634 = vadd.f32 %v1506, %v1540
      %v1635 = vadd.f32 %v1507, %v1542
      %v1636 = vadd.f32 %v1508, %v1544
      %v1637 = vadd.f32 %v1509, %v1546
      %v1638 = vadd.f32 %v1510, %v1548
      %v1639 = vadd.f32 %v1511, %v1550
      %v1640 = vadd.f32 %v1512, %v1552
      %v1641 = vadd.f32 %v1513, %v1554
      %v1642 = vadd.f32 %v1514, %v1556
      %v1643 = vadd.f32 %v1515, %v1558
      %v1644 = vadd.f32 %v1516, %v1560
      %v1645 = vadd.f32 %v1517, %v1562
      %v1646 = vadd.f32 %v1518, %v1564
      %v1647 = vadd.f32 %v1519, %v1566
      %v1648 = vadd.f32 %v1520, %v1568
      %v1649 = vadd.f32 %v1521, %v1570
      %v1650 = vadd.f32 %v1522, %v1572
      %v1651 = vadd.f32 %v1523, %v1574
      %v1652 = vadd.f32 %v1524, %v1576
      %v1653 = vadd.f32 %v1525, %v1578
      %v1654 = vadd.f32 %v1526, %v1580
      %v1655 = vadd.f32 %v1527, %v1582
      %v1656 = vadd.f32 %v1528, %v1584
      %v1657 = vadd.f32 %v1529, %v1586
      %v1658 = vadd.f32 %v1530, %v1588
      %v1659 = vadd.f32 %v1531, %v1590
      %v1660 = vadd.f32 %v1532, %v1592
      %v1661 = vadd.f32 %v1533, %v1594
      %v1662 = vadd.f32 %v1534, %v1596
      %v1663 = vadd.f32 %v1535, %v1598
      %v1664 = vadd.f32 %v1536, %v1600
      %v1665 = vsel %vm707, 1, 0
      %v1666 = vsel %vm708, 1, 0
      %v1667 = vsel %vm709, 1, 0
      %v1668 = vsel %vm710, 1, 0
      %v1669 = vsel %vm711, 1, 0
      %v1670 = vsel %vm712, 1, 0
      %v1671 = vsel %vm713, 1, 0
      %v1672 = vsel %vm714, 1, 0
      %v1673 = vsel %vm715, 1, 0
      %v1674 = vsel %vm716, 1, 0
      %v1675 = vsel %vm717, 1, 0
      %v1676 = vsel %vm718, 1, 0
      %v1677 = vsel %vm719, 1, 0
      %v1678 = vsel %vm720, 1, 0
      %v1679 = vsel %vm721, 1, 0
      %v1680 = vsel %vm722, 1, 0
      %v1681 = vsel %vm723, 1, 0
      %v1682 = vsel %vm724, 1, 0
      %v1683 = vsel %vm725, 1, 0
      %v1684 = vsel %vm726, 1, 0
      %v1685 = vsel %vm727, 1, 0
      %v1686 = vsel %vm728, 1, 0
      %v1687 = vsel %vm729, 1, 0
      %v1688 = vsel %vm730, 1, 0
      %v1689 = vsel %vm731, 1, 0
      %v1690 = vsel %vm732, 1, 0
      %v1691 = vsel %vm733, 1, 0
      %v1692 = vsel %vm734, 1, 0
      %v1693 = vsel %vm735, 1, 0
      %v1694 = vsel %vm736, 1, 0
      %v1695 = vsel %vm737, 1, 0
      %v1696 = vsel %vm738, 1, 0
      %vm1697 = vcmp.eq.s32.totalorder %v1665, 1
      %vm1698 = vcmp.eq.s32.totalorder %v1666, 1
      %vm1699 = vcmp.eq.s32.totalorder %v1667, 1
      %vm1700 = vcmp.eq.s32.totalorder %v1668, 1
      %vm1701 = vcmp.eq.s32.totalorder %v1669, 1
      %vm1702 = vcmp.eq.s32.totalorder %v1670, 1
      %vm1703 = vcmp.eq.s32.totalorder %v1671, 1
      %vm1704 = vcmp.eq.s32.totalorder %v1672, 1
      %vm1705 = vcmp.eq.s32.totalorder %v1673, 1
      %vm1706 = vcmp.eq.s32.totalorder %v1674, 1
      %vm1707 = vcmp.eq.s32.totalorder %v1675, 1
      %vm1708 = vcmp.eq.s32.totalorder %v1676, 1
      %vm1709 = vcmp.eq.s32.totalorder %v1677, 1
      %vm1710 = vcmp.eq.s32.totalorder %v1678, 1
      %vm1711 = vcmp.eq.s32.totalorder %v1679, 1
      %vm1712 = vcmp.eq.s32.totalorder %v1680, 1
      %vm1713 = vcmp.eq.s32.totalorder %v1681, 1
      %vm1714 = vcmp.eq.s32.totalorder %v1682, 1
      %vm1715 = vcmp.eq.s32.totalorder %v1683, 1
      %vm1716 = vcmp.eq.s32.totalorder %v1684, 1
      %vm1717 = vcmp.eq.s32.totalorder %v1685, 1
      %vm1718 = vcmp.eq.s32.totalorder %v1686, 1
      %vm1719 = vcmp.eq.s32.totalorder %v1687, 1
      %vm1720 = vcmp.eq.s32.totalorder %v1688, 1
      %vm1721 = vcmp.eq.s32.totalorder %v1689, 1
      %vm1722 = vcmp.eq.s32.totalorder %v1690, 1
      %vm1723 = vcmp.eq.s32.totalorder %v1691, 1
      %vm1724 = vcmp.eq.s32.totalorder %v1692, 1
      %vm1725 = vcmp.eq.s32.totalorder %v1693, 1
      %vm1726 = vcmp.eq.s32.totalorder %v1694, 1
      %vm1727 = vcmp.eq.s32.totalorder %v1695, 1
      %vm1728 = vcmp.eq.s32.totalorder %v1696, 1
      %v1729 = vsel %vm1697, %v1347, 0.0
      %v1730 = vsel %vm1698, %v1349, 0.0
      %v1731 = vsel %vm1699, %v1351, 0.0
      %v1732 = vsel %vm1700, %v1353, 0.0
      %v1733 = vsel %vm1701, %v1355, 0.0
      %v1734 = vsel %vm1702, %v1357, 0.0
      %v1735 = vsel %vm1703, %v1359, 0.0
      %v1736 = vsel %vm1704, %v1361, 0.0
      %v1737 = vsel %vm1705, %v1363, 0.0
      %v1738 = vsel %vm1706, %v1365, 0.0
      %v1739 = vsel %vm1707, %v1367, 0.0
      %v1740 = vsel %vm1708, %v1369, 0.0
      %v1741 = vsel %vm1709, %v1371, 0.0
      %v1742 = vsel %vm1710, %v1373, 0.0
      %v1743 = vsel %vm1711, %v1375, 0.0
      %v1744 = vsel %vm1712, %v1377, 0.0
      %v1745 = vsel %vm1713, %v1379, 0.0
      %v1746 = vsel %vm1714, %v1381, 0.0
      %v1747 = vsel %vm1715, %v1383, 0.0
      %v1748 = vsel %vm1716, %v1385, 0.0
      %v1749 = vsel %vm1717, %v1387, 0.0
      %v1750 = vsel %vm1718, %v1389, 0.0
      %v1751 = vsel %vm1719, %v1391, 0.0
      %v1752 = vsel %vm1720, %v1393, 0.0
      %v1753 = vsel %vm1721, %v1395, 0.0
      %v1754 = vsel %vm1722, %v1397, 0.0
      %v1755 = vsel %vm1723, %v1399, 0.0
      %v1756 = vsel %vm1724, %v1401, 0.0
      %v1757 = vsel %vm1725, %v1403, 0.0
      %v1758 = vsel %vm1726, %v1405, 0.0
      %v1759 = vsel %vm1727, %v1407, 0.0
      %v1760 = vsel %vm1728, %v1440, 0.0
      %1793 = vrot.lane.b32.xlu0 %v1729, 120
      %v1794 = vpop.permute.xlu0 %1793
      %1795 = vrot.lane.b32.xlu0 %v1730, 120
      %v1796 = vpop.permute.xlu0 %1795
      %1797 = vrot.lane.b32.xlu0 %v1731, 120
      %v1798 = vpop.permute.xlu0 %1797
      %1799 = vrot.lane.b32.xlu0 %v1732, 120
      %v1800 = vpop.permute.xlu0 %1799
      %1801 = vrot.lane.b32.xlu0 %v1733, 120
      %v1802 = vpop.permute.xlu0 %1801
      %1803 = vrot.lane.b32.xlu0 %v1734, 120
      %v1804 = vpop.permute.xlu0 %1803
      %1805 = vrot.lane.b32.xlu0 %v1735, 120
      %v1806 = vpop.permute.xlu0 %1805
      %1807 = vrot.lane.b32.xlu0 %v1736, 120
      %v1808 = vpop.permute.xlu0 %1807
      %1809 = vrot.lane.b32.xlu0 %v1737, 120
      %v1810 = vpop.permute.xlu0 %1809
      %1811 = vrot.lane.b32.xlu0 %v1738, 120
      %v1812 = vpop.permute.xlu0 %1811
      %1813 = vrot.lane.b32.xlu0 %v1739, 120
      %v1814 = vpop.permute.xlu0 %1813
      %1815 = vrot.lane.b32.xlu0 %v1740, 120
      %v1816 = vpop.permute.xlu0 %1815
      %1817 = vrot.lane.b32.xlu0 %v1741, 120
      %v1818 = vpop.permute.xlu0 %1817
      %1819 = vrot.lane.b32.xlu0 %v1742, 120
      %v1820 = vpop.permute.xlu0 %1819
      %1821 = vrot.lane.b32.xlu0 %v1743, 120
      %v1822 = vpop.permute.xlu0 %1821
      %1823 = vrot.lane.b32.xlu0 %v1744, 120
      %v1824 = vpop.permute.xlu0 %1823
      %1825 = vrot.lane.b32.xlu0 %v1745, 120
      %v1826 = vpop.permute.xlu0 %1825
      %1827 = vrot.lane.b32.xlu0 %v1746, 120
      %v1828 = vpop.permute.xlu0 %1827
      %1829 = vrot.lane.b32.xlu0 %v1747, 120
      %v1830 = vpop.permute.xlu0 %1829
      %1831 = vrot.lane.b32.xlu0 %v1748, 120
      %v1832 = vpop.permute.xlu0 %1831
      %1833 = vrot.lane.b32.xlu0 %v1749, 120
      %v1834 = vpop.permute.xlu0 %1833
      %1835 = vrot.lane.b32.xlu0 %v1750, 120
      %v1836 = vpop.permute.xlu0 %1835
      %1837 = vrot.lane.b32.xlu0 %v1751, 120
      %v1838 = vpop.permute.xlu0 %1837
      %1839 = vrot.lane.b32.xlu0 %v1752, 120
      %v1840 = vpop.permute.xlu0 %1839
      %1841 = vrot.lane.b32.xlu0 %v1753, 120
      %v1842 = vpop.permute.xlu0 %1841
      %1843 = vrot.lane.b32.xlu0 %v1754, 120
      %v1844 = vpop.permute.xlu0 %1843
      %1845 = vrot.lane.b32.xlu0 %v1755, 120
      %v1846 = vpop.permute.xlu0 %1845
      %1847 = vrot.lane.b32.xlu0 %v1756, 120
      %v1848 = vpop.permute.xlu0 %1847
      %1849 = vrot.lane.b32.xlu0 %v1757, 120
      %v1850 = vpop.permute.xlu0 %1849
      %1851 = vrot.lane.b32.xlu0 %v1758, 120
      %v1852 = vpop.permute.xlu0 %1851
      %1853 = vrot.lane.b32.xlu0 %v1759, 120
      %v1854 = vpop.permute.xlu0 %1853
      %1855 = vrot.lane.b32.xlu0 %v1760, 120
      %v1856 = vpop.permute.xlu0 %1855
      %v1889 = vadd.f32 %v1633, %v1794
      %v1890 = vadd.f32 %v1634, %v1796
      %v1891 = vadd.f32 %v1635, %v1798
      %v1892 = vadd.f32 %v1636, %v1800
      %v1893 = vadd.f32 %v1637, %v1802
      %v1894 = vadd.f32 %v1638, %v1804
      %v1895 = vadd.f32 %v1639, %v1806
      %v1896 = vadd.f32 %v1640, %v1808
      %v1897 = vadd.f32 %v1641, %v1810
      %v1898 = vadd.f32 %v1642, %v1812
      %v1899 = vadd.f32 %v1643, %v1814
      %v1900 = vadd.f32 %v1644, %v1816
      %v1901 = vadd.f32 %v1645, %v1818
      %v1902 = vadd.f32 %v1646, %v1820
      %v1903 = vadd.f32 %v1647, %v1822
      %v1904 = vadd.f32 %v1648, %v1824
      %v1905 = vadd.f32 %v1649, %v1826
      %v1906 = vadd.f32 %v1650, %v1828
      %v1907 = vadd.f32 %v1651, %v1830
      %v1908 = vadd.f32 %v1652, %v1832
      %v1909 = vadd.f32 %v1653, %v1834
      %v1910 = vadd.f32 %v1654, %v1836
      %v1911 = vadd.f32 %v1655, %v1838
      %v1912 = vadd.f32 %v1656, %v1840
      %v1913 = vadd.f32 %v1657, %v1842
      %v1914 = vadd.f32 %v1658, %v1844
      %v1915 = vadd.f32 %v1659, %v1846
      %v1916 = vadd.f32 %v1660, %v1848
      %v1917 = vadd.f32 %v1661, %v1850
      %v1918 = vadd.f32 %v1662, %v1852
      %v1919 = vadd.f32 %v1663, %v1854
      %v1920 = vadd.f32 %v1664, %v1856
      %v1921 = vld [vmem:[%s2] sm:$0x1]
      %v1923 = vlaneseq
      %v1924 = vshrl.u32 %v1923, 7
      %v1925 = vsub.s32 0, %v1924
      %v1926 = vrot.slane %v1921, %v1925
      %v1928 = vadd.f32 %v1889, %v1926
      %v1929 = vadd.f32 %v1890, %v1926
      %v1930 = vadd.f32 %v1891, %v1926
      %v1931 = vadd.f32 %v1892, %v1926
      %v1932 = vadd.f32 %v1893, %v1926
      %v1933 = vadd.f32 %v1894, %v1926
      %v1934 = vadd.f32 %v1895, %v1926
      %v1935 = vadd.f32 %v1896, %v1926
      %v1936 = vadd.f32 %v1897, %v1926
      %v1937 = vadd.f32 %v1898, %v1926
      %v1938 = vadd.f32 %v1899, %v1926
      %v1939 = vadd.f32 %v1900, %v1926
      %v1940 = vadd.f32 %v1901, %v1926
      %v1941 = vadd.f32 %v1902, %v1926
      %v1942 = vadd.f32 %v1903, %v1926
      %v1943 = vadd.f32 %v1904, %v1926
      %v1944 = vadd.f32 %v1905, %v1926
      %v1945 = vadd.f32 %v1906, %v1926
      %v1946 = vadd.f32 %v1907, %v1926
      %v1947 = vadd.f32 %v1908, %v1926
      %v1948 = vadd.f32 %v1909, %v1926
      %v1949 = vadd.f32 %v1910, %v1926
      %v1950 = vadd.f32 %v1911, %v1926
      %v1951 = vadd.f32 %v1912, %v1926
      %v1952 = vadd.f32 %v1913, %v1926
      %v1953 = vadd.f32 %v1914, %v1926
      %v1954 = vadd.f32 %v1915, %v1926
      %v1955 = vadd.f32 %v1916, %v1926
      %v1956 = vadd.f32 %v1917, %v1926
      %v1957 = vadd.f32 %v1918, %v1926
      %v1958 = vadd.f32 %v1919, %v1926
      %v1959 = vadd.f32 %v1920, %v1926
      %v1960 = vmax.f32 %v1928, 0.0
      %v1961 = vmax.f32 %v1929, 0.0
      %v1962 = vmax.f32 %v1930, 0.0
      %v1963 = vmax.f32 %v1931, 0.0
      %v1964 = vmax.f32 %v1932, 0.0
      %v1965 = vmax.f32 %v1933, 0.0
      %v1966 = vmax.f32 %v1934, 0.0
      %v1967 = vmax.f32 %v1935, 0.0
      %v1968 = vmax.f32 %v1936, 0.0
      %v1969 = vmax.f32 %v1937, 0.0
      %v1970 = vmax.f32 %v1938, 0.0
      %v1971 = vmax.f32 %v1939, 0.0
      %v1972 = vmax.f32 %v1940, 0.0
      %v1973 = vmax.f32 %v1941, 0.0
      %v1974 = vmax.f32 %v1942, 0.0
      %v1975 = vmax.f32 %v1943, 0.0
      %v1976 = vmax.f32 %v1944, 0.0
      %v1977 = vmax.f32 %v1945, 0.0
      %v1978 = vmax.f32 %v1946, 0.0
      %v1979 = vmax.f32 %v1947, 0.0
      %v1980 = vmax.f32 %v1948, 0.0
      %v1981 = vmax.f32 %v1949, 0.0
      %v1982 = vmax.f32 %v1950, 0.0
      %v1983 = vmax.f32 %v1951, 0.0
      %v1984 = vmax.f32 %v1952, 0.0
      %v1985 = vmax.f32 %v1953, 0.0
      %v1986 = vmax.f32 %v1954, 0.0
      %v1987 = vmax.f32 %v1955, 0.0
      %v1988 = vmax.f32 %v1956, 0.0
      %v1989 = vmax.f32 %v1957, 0.0
      %v1990 = vmax.f32 %v1958, 0.0
      %v1991 = vmax.f32 %v1959, 0.0
      %v1992 = vpack.c.bf16 %v1961, %v1960
      %v1993 = vpack.c.bf16 %v1963, %v1962
      %v1994 = vpack.c.bf16 %v1965, %v1964
      %v1995 = vpack.c.bf16 %v1967, %v1966
      %v1996 = vpack.c.bf16 %v1969, %v1968
      %v1997 = vpack.c.bf16 %v1971, %v1970
      %v1998 = vpack.c.bf16 %v1973, %v1972
      %v1999 = vpack.c.bf16 %v1975, %v1974
      %v2000 = vpack.c.bf16 %v1977, %v1976
      %v2001 = vpack.c.bf16 %v1979, %v1978
      %v2002 = vpack.c.bf16 %v1981, %v1980
      %v2003 = vpack.c.bf16 %v1983, %v1982
      %v2004 = vpack.c.bf16 %v1985, %v1984
      %v2005 = vpack.c.bf16 %v1987, %v1986
      %v2006 = vpack.c.bf16 %v1989, %v1988
      %v2007 = vpack.c.bf16 %v1991, %v1990
      %2024 = vrot.lane.b32.xlu0 %v1992, 4
      %v2025 = vpop.permute.xlu0 %2024
      %2026 = vrot.lane.b32.xlu0 %v1993, 4
      %v2027 = vpop.permute.xlu0 %2026
      %2028 = vrot.lane.b32.xlu0 %v1994, 4
      %v2029 = vpop.permute.xlu0 %2028
      %2030 = vrot.lane.b32.xlu0 %v1995, 4
      %v2031 = vpop.permute.xlu0 %2030
      %2032 = vrot.lane.b32.xlu0 %v1996, 4
      %v2033 = vpop.permute.xlu0 %2032
      %2034 = vrot.lane.b32.xlu0 %v1997, 4
      %v2035 = vpop.permute.xlu0 %2034
      %2036 = vrot.lane.b32.xlu0 %v1998, 4
      %v2037 = vpop.permute.xlu0 %2036
      %2038 = vrot.lane.b32.xlu0 %v1999, 4
      %v2039 = vpop.permute.xlu0 %2038
      %2040 = vrot.lane.b32.xlu0 %v2000, 4
      %v2041 = vpop.permute.xlu0 %2040
      %2042 = vrot.lane.b32.xlu0 %v2001, 4
      %v2043 = vpop.permute.xlu0 %2042
      %2044 = vrot.lane.b32.xlu0 %v2002, 4
      %v2045 = vpop.permute.xlu0 %2044
      %2046 = vrot.lane.b32.xlu0 %v2003, 4
      %v2047 = vpop.permute.xlu0 %2046
      %2048 = vrot.lane.b32.xlu0 %v2004, 4
      %v2049 = vpop.permute.xlu0 %2048
      %2050 = vrot.lane.b32.xlu0 %v2005, 4
      %v2051 = vpop.permute.xlu0 %2050
      %2052 = vrot.lane.b32.xlu0 %v2006, 4
      %v2053 = vpop.permute.xlu0 %2052
      %2054 = vrot.lane.b32.xlu0 %v2007, 4
      %v2055 = vpop.permute.xlu0 %2054
      %2072 = vst.msk [vmem:[#allocation3] sm:$0xff] %vm867, %v2025
      %2073 = vst.msk [vmem:[#allocation3 + $0x8] sm:$0xff] %vm867, %v2027
      %2074 = vst.msk [vmem:[#allocation3 + $0x10] sm:$0xff] %vm867, %v2029
      %2075 = vst.msk [vmem:[#allocation3 + $0x18] sm:$0xff] %vm867, %v2031
      %2076 = vst.msk [vmem:[#allocation3 + $0x20] sm:$0xff] %vm867, %v2033
      %2077 = vst.msk [vmem:[#allocation3 + $0x28] sm:$0xff] %vm867, %v2035
      %2078 = vst.msk [vmem:[#allocation3 + $0x30] sm:$0xff] %vm867, %v2037
      %2079 = vst.msk [vmem:[#allocation3 + $0x38] sm:$0xff] %vm867, %v2039
      %2080 = vst.msk [vmem:[#allocation3 + $0x40] sm:$0xff] %vm867, %v2041
      %2081 = vst.msk [vmem:[#allocation3 + $0x48] sm:$0xff] %vm867, %v2043
      %2082 = vst.msk [vmem:[#allocation3 + $0x50] sm:$0xff] %vm867, %v2045
      %2083 = vst.msk [vmem:[#allocation3 + $0x58] sm:$0xff] %vm867, %v2047
      %2084 = vst.msk [vmem:[#allocation3 + $0x60] sm:$0xff] %vm867, %v2049
      %2085 = vst.msk [vmem:[#allocation3 + $0x68] sm:$0xff] %vm867, %v2051
      %2086 = vst.msk [vmem:[#allocation3 + $0x70] sm:$0xff] %vm867, %v2053
      %2087 = vst.msk [vmem:[#allocation3 + $0x78] sm:$0xff] %vm867, %v2055
      %2088 = vst.msk [vmem:[#allocation3] sm:$0xff] %vm884, 0
      %2089 = vst.msk [vmem:[#allocation3 + $0x8] sm:$0xff] %vm884, %v1992
      %2090 = vst.msk [vmem:[#allocation3 + $0x10] sm:$0xff] %vm884, %v1993
      %2091 = vst.msk [vmem:[#allocation3 + $0x18] sm:$0xff] %vm884, %v1994
      %2092 = vst.msk [vmem:[#allocation3 + $0x20] sm:$0xff] %vm884, %v1995
      %2093 = vst.msk [vmem:[#allocation3 + $0x28] sm:$0xff] %vm884, %v1996
      %2094 = vst.msk [vmem:[#allocation3 + $0x30] sm:$0xff] %vm884, %v1997
      %2095 = vst.msk [vmem:[#allocation3 + $0x38] sm:$0xff] %vm884, %v1998
      %2096 = vst.msk [vmem:[#allocation3 + $0x40] sm:$0xff] %vm884, %v1999
      %2097 = vst.msk [vmem:[#allocation3 + $0x48] sm:$0xff] %vm884, %v2000
      %2098 = vst.msk [vmem:[#allocation3 + $0x50] sm:$0xff] %vm884, %v2001
      %2099 = vst.msk [vmem:[#allocation3 + $0x58] sm:$0xff] %vm884, %v2002
      %2100 = vst.msk [vmem:[#allocation3 + $0x60] sm:$0xff] %vm884, %v2003
      %2101 = vst.msk [vmem:[#allocation3 + $0x68] sm:$0xff] %vm884, %v2004
      %2102 = vst.msk [vmem:[#allocation3 + $0x70] sm:$0xff] %vm884, %v2005
      %2103 = vst.msk [vmem:[#allocation3 + $0x78] sm:$0xff] %vm884, %v2006
      %2104 = vrot.lane.b32.xlu0 %v1993, 8
      %v2105 = vpop.permute.xlu0 %2104
      %2106 = vrot.lane.b32.xlu0 %v1994, 8
      %v2107 = vpop.permute.xlu0 %2106
      %2108 = vrot.lane.b32.xlu0 %v1995, 8
      %v2109 = vpop.permute.xlu0 %2108
      %2110 = vrot.lane.b32.xlu0 %v1996, 8
      %v2111 = vpop.permute.xlu0 %2110
      %2112 = vrot.lane.b32.xlu0 %v1997, 8
      %v2113 = vpop.permute.xlu0 %2112
      %2114 = vrot.lane.b32.xlu0 %v1998, 8
      %v2115 = vpop.permute.xlu0 %2114
      %2116 = vrot.lane.b32.xlu0 %v1999, 8
      %v2117 = vpop.permute.xlu0 %2116
      %2118 = vrot.lane.b32.xlu0 %v2000, 8
      %v2119 = vpop.permute.xlu0 %2118
      %2120 = vrot.lane.b32.xlu0 %v2001, 8
      %v2121 = vpop.permute.xlu0 %2120
      %2122 = vrot.lane.b32.xlu0 %v2002, 8
      %v2123 = vpop.permute.xlu0 %2122
      %2124 = vrot.lane.b32.xlu0 %v2003, 8
      %v2125 = vpop.permute.xlu0 %2124
      %2126 = vrot.lane.b32.xlu0 %v2004, 8
      %v2127 = vpop.permute.xlu0 %2126
      %2128 = vrot.lane.b32.xlu0 %v2005, 8
      %v2129 = vpop.permute.xlu0 %2128
      %2130 = vrot.lane.b32.xlu0 %v2006, 8
      %v2131 = vpop.permute.xlu0 %2130
      %2132 = vrot.lane.b32.xlu0 %v2007, 8
      %v2133 = vpop.permute.xlu0 %2132
      %2149 = vst.msk [vmem:[#allocation3] sm:$0xff] %vm961, %v2105
      %2150 = vst.msk [vmem:[#allocation3 + $0x8] sm:$0xff] %vm961, %v2107
      %2151 = vst.msk [vmem:[#allocation3 + $0x10] sm:$0xff] %vm961, %v2109
      %2152 = vst.msk [vmem:[#allocation3 + $0x18] sm:$0xff] %vm961, %v2111
      %2153 = vst.msk [vmem:[#allocation3 + $0x20] sm:$0xff] %vm961, %v2113
      %2154 = vst.msk [vmem:[#allocation3 + $0x28] sm:$0xff] %vm961, %v2115
      %2155 = vst.msk [vmem:[#allocation3 + $0x30] sm:$0xff] %vm961, %v2117
      %2156 = vst.msk [vmem:[#allocation3 + $0x38] sm:$0xff] %vm961, %v2119
      %2157 = vst.msk [vmem:[#allocation3 + $0x40] sm:$0xff] %vm961, %v2121
      %2158 = vst.msk [vmem:[#allocation3 + $0x48] sm:$0xff] %vm961, %v2123
      %2159 = vst.msk [vmem:[#allocation3 + $0x50] sm:$0xff] %vm961, %v2125
      %2160 = vst.msk [vmem:[#allocation3 + $0x58] sm:$0xff] %vm961, %v2127
      %2161 = vst.msk [vmem:[#allocation3 + $0x60] sm:$0xff] %vm961, %v2129
      %2162 = vst.msk [vmem:[#allocation3 + $0x68] sm:$0xff] %vm961, %v2131
      %2163 = vst.msk [vmem:[#allocation3 + $0x70] sm:$0xff] %vm961, %v2133
      %2164 = vst.msk [vmem:[#allocation3 + $0x78] sm:$0xff] %vm961, 0
      %v2165 = vld [vmem:[#allocation3] sm:$0xff]
      %v2166 = vld [vmem:[#allocation3 + $0x8] sm:$0xff]
      %v2167 = vld [vmem:[#allocation3 + $0x10] sm:$0xff]
      %v2168 = vld [vmem:[#allocation3 + $0x18] sm:$0xff]
      %v2169 = vld [vmem:[#allocation3 + $0x20] sm:$0xff]
      %v2170 = vld [vmem:[#allocation3 + $0x28] sm:$0xff]
      %v2171 = vld [vmem:[#allocation3 + $0x30] sm:$0xff]
      %v2172 = vld [vmem:[#allocation3 + $0x38] sm:$0xff]
      %v2173 = vld [vmem:[#allocation3 + $0x40] sm:$0xff]
      %v2174 = vld [vmem:[#allocation3 + $0x48] sm:$0xff]
      %v2175 = vld [vmem:[#allocation3 + $0x50] sm:$0xff]
      %v2176 = vld [vmem:[#allocation3 + $0x58] sm:$0xff]
      %v2177 = vld [vmem:[#allocation3 + $0x60] sm:$0xff]
      %v2178 = vld [vmem:[#allocation3 + $0x68] sm:$0xff]
      %v2179 = vld [vmem:[#allocation3 + $0x70] sm:$0xff]
      %v2180 = vld [vmem:[#allocation3 + $0x78] sm:$0xff]
      %v2181 = vld [vmem:[%s3] sm:$0xf]
      %v2182 = vld [vmem:[%s3 + $0x4] sm:$0x3]
      %v2185 = vunpack.c.l.b16 %v2181
      %v2186 = vunpack.c.l.b16 %v2182
      %v2187 = vpack.c.b16 %v2186, %v2185
      %v2189 = vsel %vm1001, %v2165, 0
      %v2192 = vsel %vm1001, %v2166, 0
      %v2195 = vsel %vm1001, %v2167, 0
      %v2198 = vsel %vm1001, %v2168, 0
      %v2201 = vsel %vm1001, %v2169, 0
      %v2204 = vsel %vm1001, %v2170, 0
      %v2207 = vsel %vm1001, %v2171, 0
      %v2210 = vsel %vm1001, %v2172, 0
      %v2213 = vsel %vm1001, %v2173, 0
      %v2216 = vsel %vm1001, %v2174, 0
      %v2219 = vsel %vm1001, %v2175, 0
      %v2222 = vsel %vm1001, %v2176, 0
      %v2225 = vsel %vm1001, %v2177, 0
      %v2228 = vsel %vm1001, %v2178, 0
      %v2231 = vsel %vm1001, %v2179, 0
      %v2234 = vsel %vm1001, %v2180, 0
      %v2237 = vsel %vm1050, %v2187, 0
      %2239 = vmatprep.subr.bf16.mxu0 0
      %2240 = vmatpush1.bf16.msra.mxu0 %v2237
      %2241 = vmatprep.subr.bf16.mxu0 0
      %2242 = vmatpush1.bf16.msra.mxu0 0
      %2243 = vmatprep.subr.bf16.mxu0 0
      %2244 = vmatpush1.bf16.msra.mxu0 0
      %2245 = vmatprep.subr.bf16.mxu0 0
      %2246 = vmatpush1.bf16.msra.mxu0 0
      %2247 = vmatprep.subr.bf16.mxu0 0
      %2248 = vmatpush1.bf16.msra.mxu0 0
      %2249 = vmatprep.subr.bf16.mxu0 0
      %2250 = vmatpush1.bf16.msra.mxu0 0
      %2251 = vmatprep.subr.bf16.mxu0 0
      %2252 = vmatpush1.bf16.msra.mxu0 0
      %2253 = vmatprep.subr.bf16.mxu0 0
      %2254 = vmatpush1.bf16.msra.mxu0 0
      %2255 = vmatprep.subr.bf16.mxu0 0
      %2256 = vmatpush1.bf16.msra.mxu0 0
      %2257 = vmatprep.subr.bf16.mxu0 0
      %2258 = vmatpush1.bf16.msra.mxu0 0
      %2259 = vmatprep.subr.bf16.mxu0 0
      %2260 = vmatpush1.bf16.msra.mxu0 0
      %2261 = vmatprep.subr.bf16.mxu0 0
      %2262 = vmatpush1.bf16.msra.mxu0 0
      %2263 = vmatprep.subr.bf16.mxu0 0
      %2264 = vmatpush1.bf16.msra.mxu0 0
      %2265 = vmatprep.subr.bf16.mxu0 0
      %2266 = vmatpush1.bf16.msra.mxu0 0
      %2267 = vmatprep.subr.bf16.mxu0 0
      %2268 = vmatpush1.bf16.msra.mxu0 0
      %2269 = vmatprep.subr.bf16.mxu0 0
      %2270 = vmatpush1.bf16.msra.mxu0 0
      %2271 = vmatprep.mubr.bf16.mxu0 0
      %2272 = vmatmul.mubr.bf16.gmra.mrb[0].mxu0 %v2189
      %v2273 = vpop.f32.mrb[0].mxu0
      %v2274 = vadd.f32 0.0, %v2273
      %v2275 = vpop.f32.mrb[0].mxu0
      %v2276 = vpop.f32.mrb[0].mxu0
      %v2277 = vadd.f32 0.0, %v2276
      %v2278 = vpop.f32.mrb[0].mxu0
      %2279 = vmatprep.mubr.bf16.mxu0 0
      %2280 = vmatmul.mubr.bf16.gmra.mrb[0].mxu0 %v2192
      %v2281 = vpop.f32.mrb[0].mxu0
      %v2282 = vadd.f32 0.0, %v2281
      %v2283 = vpop.f32.mrb[0].mxu0
      %v2284 = vpop.f32.mrb[0].mxu0
      %v2285 = vadd.f32 0.0, %v2284
      %v2286 = vpop.f32.mrb[0].mxu0
      %2287 = vmatprep.mubr.bf16.mxu0 0
      %2288 = vmatmul.mubr.bf16.gmra.mrb[0].mxu0 %v2195
      %v2289 = vpop.f32.mrb[0].mxu0
      %v2290 = vadd.f32 0.0, %v2289
      %v2291 = vpop.f32.mrb[0].mxu0
      %v2292 = vpop.f32.mrb[0].mxu0
      %v2293 = vadd.f32 0.0, %v2292
      %v2294 = vpop.f32.mrb[0].mxu0
      %2295 = vmatprep.mubr.bf16.mxu0 0
      %2296 = vmatmul.mubr.bf16.gmra.mrb[0].mxu0 %v2198
      %v2297 = vpop.f32.mrb[0].mxu0
      %v2298 = vadd.f32 0.0, %v2297
      %v2299 = vpop.f32.mrb[0].mxu0
      %v2300 = vpop.f32.mrb[0].mxu0
      %v2301 = vadd.f32 0.0, %v2300
      %v2302 = vpop.f32.mrb[0].mxu0
      %2303 = vmatprep.mubr.bf16.mxu0 0
      %2304 = vmatmul.mubr.bf16.gmra.mrb[0].mxu0 %v2201
      %v2305 = vpop.f32.mrb[0].mxu0
      %v2306 = vadd.f32 0.0, %v2305
      %v2307 = vpop.f32.mrb[0].mxu0
      %v2308 = vpop.f32.mrb[0].mxu0
      %v2309 = vadd.f32 0.0, %v2308
      %v2310 = vpop.f32.mrb[0].mxu0
      %2311 = vmatprep.mubr.bf16.mxu0 0
      %2312 = vmatmul.mubr.bf16.gmra.mrb[0].mxu0 %v2204
      %v2313 = vpop.f32.mrb[0].mxu0
      %v2314 = vadd.f32 0.0, %v2313
      %v2315 = vpop.f32.mrb[0].mxu0
      %v2316 = vpop.f32.mrb[0].mxu0
      %v2317 = vadd.f32 0.0, %v2316
      %v2318 = vpop.f32.mrb[0].mxu0
      %2319 = vmatprep.mubr.bf16.mxu0 0
      %2320 = vmatmul.mubr.bf16.gmra.mrb[0].mxu0 %v2207
      %v2321 = vpop.f32.mrb[0].mxu0
      %v2322 = vadd.f32 0.0, %v2321
      %v2323 = vpop.f32.mrb[0].mxu0
      %v2324 = vpop.f32.mrb[0].mxu0
      %v2325 = vadd.f32 0.0, %v2324
      %v2326 = vpop.f32.mrb[0].mxu0
      %2327 = vmatprep.mubr.bf16.mxu0 0
      %2328 = vmatmul.mubr.bf16.gmra.mrb[0].mxu0 %v2210
      %v2329 = vpop.f32.mrb[0].mxu0
      %v2330 = vadd.f32 0.0, %v2329
      %v2331 = vpop.f32.mrb[0].mxu0
      %v2332 = vpop.f32.mrb[0].mxu0
      %v2333 = vadd.f32 0.0, %v2332
      %v2334 = vpop.f32.mrb[0].mxu0
      %2335 = vmatprep.mubr.bf16.mxu0 0
      %2336 = vmatmul.mubr.bf16.gmra.mrb[0].mxu0 %v2213
      %v2337 = vpop.f32.mrb[0].mxu0
      %v2338 = vadd.f32 0.0, %v2337
      %v2339 = vpop.f32.mrb[0].mxu0
      %v2340 = vpop.f32.mrb[0].mxu0
      %v2341 = vadd.f32 0.0, %v2340
      %v2342 = vpop.f32.mrb[0].mxu0
      %2343 = vmatprep.mubr.bf16.mxu0 0
      %2344 = vmatmul.mubr.bf16.gmra.mrb[0].mxu0 %v2216
      %v2345 = vpop.f32.mrb[0].mxu0
      %v2346 = vadd.f32 0.0, %v2345
      %v2347 = vpop.f32.mrb[0].mxu0
      %v2348 = vpop.f32.mrb[0].mxu0
      %v2349 = vadd.f32 0.0, %v2348
      %v2350 = vpop.f32.mrb[0].mxu0
      %2351 = vmatprep.mubr.bf16.mxu0 0
      %2352 = vmatmul.mubr.bf16.gmra.mrb[0].mxu0 %v2219
      %v2353 = vpop.f32.mrb[0].mxu0
      %v2354 = vadd.f32 0.0, %v2353
      %v2355 = vpop.f32.mrb[0].mxu0
      %v2356 = vpop.f32.mrb[0].mxu0
      %v2357 = vadd.f32 0.0, %v2356
      %v2358 = vpop.f32.mrb[0].mxu0
      %2359 = vmatprep.mubr.bf16.mxu0 0
      %2360 = vmatmul.mubr.bf16.gmra.mrb[0].mxu0 %v2222
      %v2361 = vpop.f32.mrb[0].mxu0
      %v2362 = vadd.f32 0.0, %v2361
      %v2363 = vpop.f32.mrb[0].mxu0
      %v2364 = vpop.f32.mrb[0].mxu0
      %v2365 = vadd.f32 0.0, %v2364
      %v2366 = vpop.f32.mrb[0].mxu0
      %2367 = vmatprep.mubr.bf16.mxu0 0
      %2368 = vmatmul.mubr.bf16.gmra.mrb[0].mxu0 %v2225
      %v2369 = vpop.f32.mrb[0].mxu0
      %v2370 = vadd.f32 0.0, %v2369
      %v2371 = vpop.f32.mrb[0].mxu0
      %v2372 = vpop.f32.mrb[0].mxu0
      %v2373 = vadd.f32 0.0, %v2372
      %v2374 = vpop.f32.mrb[0].mxu0
      %2375 = vmatprep.mubr.bf16.mxu0 0
      %2376 = vmatmul.mubr.bf16.gmra.mrb[0].mxu0 %v2228
      %v2377 = vpop.f32.mrb[0].mxu0
      %v2378 = vadd.f32 0.0, %v2377
      %v2379 = vpop.f32.mrb[0].mxu0
      %v2380 = vpop.f32.mrb[0].mxu0
      %v2381 = vadd.f32 0.0, %v2380
      %v2382 = vpop.f32.mrb[0].mxu0
      %2383 = vmatprep.mubr.bf16.mxu0 0
      %2384 = vmatmul.mubr.bf16.gmra.mrb[0].mxu0 %v2231
      %v2385 = vpop.f32.mrb[0].mxu0
      %v2386 = vadd.f32 0.0, %v2385
      %v2387 = vpop.f32.mrb[0].mxu0
      %v2388 = vpop.f32.mrb[0].mxu0
      %v2389 = vadd.f32 0.0, %v2388
      %v2390 = vpop.f32.mrb[0].mxu0
      %2391 = vmatprep.mubr.bf16.mxu0 0
      %2392 = vmatmul.mubr.bf16.gmra.mrb[0].mxu0 %v2234
      %v2393 = vpop.f32.mrb[0].mxu0
      %v2394 = vadd.f32 0.0, %v2393
      %v2395 = vpop.f32.mrb[0].mxu0
      %v2396 = vpop.f32.mrb[0].mxu0
      %v2397 = vadd.f32 0.0, %v2396
      %v2398 = vpop.f32.mrb[0].mxu0
      %2399 = vdwg.mxu0
      %v2432 = vrot.slane %v2274, 7
      %v2433 = vrot.slane %v2277, 7
      %v2434 = vsel %vm1247, %v2432, %v2433
      %v2435 = vrot.slane %v2282, 7
      %v2436 = vsel %vm1247, %v2433, %v2435
      %v2437 = vrot.slane %v2285, 7
      %v2438 = vsel %vm1247, %v2435, %v2437
      %v2439 = vrot.slane %v2290, 7
      %v2440 = vsel %vm1247, %v2437, %v2439
      %v2441 = vrot.slane %v2293, 7
      %v2442 = vsel %vm1247, %v2439, %v2441
      %v2443 = vrot.slane %v2298, 7
      %v2444 = vsel %vm1247, %v2441, %v2443
      %v2445 = vrot.slane %v2301, 7
      %v2446 = vsel %vm1247, %v2443, %v2445
      %v2447 = vrot.slane %v2306, 7
      %v2448 = vsel %vm1247, %v2445, %v2447
      %v2449 = vrot.slane %v2309, 7
      %v2450 = vsel %vm1247, %v2447, %v2449
      %v2451 = vrot.slane %v2314, 7
      %v2452 = vsel %vm1247, %v2449, %v2451
      %v2453 = vrot.slane %v2317, 7
      %v2454 = vsel %vm1247, %v2451, %v2453
      %v2455 = vrot.slane %v2322, 7
      %v2456 = vsel %vm1247, %v2453, %v2455
      %v2457 = vrot.slane %v2325, 7
      %v2458 = vsel %vm1247, %v2455, %v2457
      %v2459 = vrot.slane %v2330, 7
      %v2460 = vsel %vm1247, %v2457, %v2459
      %v2461 = vrot.slane %v2333, 7
      %v2462 = vsel %vm1247, %v2459, %v2461
      %v2463 = vrot.slane %v2338, 7
      %v2464 = vsel %vm1247, %v2461, %v2463
      %v2465 = vrot.slane %v2341, 7
      %v2466 = vsel %vm1247, %v2463, %v2465
      %v2467 = vrot.slane %v2346, 7
      %v2468 = vsel %vm1247, %v2465, %v2467
      %v2469 = vrot.slane %v2349, 7
      %v2470 = vsel %vm1247, %v2467, %v2469
      %v2471 = vrot.slane %v2354, 7
      %v2472 = vsel %vm1247, %v2469, %v2471
      %v2473 = vrot.slane %v2357, 7
      %v2474 = vsel %vm1247, %v2471, %v2473
      %v2475 = vrot.slane %v2362, 7
      %v2476 = vsel %vm1247, %v2473, %v2475
      %v2477 = vrot.slane %v2365, 7
      %v2478 = vsel %vm1247, %v2475, %v2477
      %v2479 = vrot.slane %v2370, 7
      %v2480 = vsel %vm1247, %v2477, %v2479
      %v2481 = vrot.slane %v2373, 7
      %v2482 = vsel %vm1247, %v2479, %v2481
      %v2483 = vrot.slane %v2378, 7
      %v2484 = vsel %vm1247, %v2481, %v2483
      %v2485 = vrot.slane %v2381, 7
      %v2486 = vsel %vm1247, %v2483, %v2485
      %v2487 = vrot.slane %v2386, 7
      %v2488 = vsel %vm1247, %v2485, %v2487
      %v2489 = vrot.slane %v2389, 7
      %v2490 = vsel %vm1247, %v2487, %v2489
      %v2491 = vrot.slane %v2394, 7
      %v2492 = vsel %vm1247, %v2489, %v2491
      %v2493 = vrot.slane %v2397, 7
      %v2494 = vsel %vm1247, %v2491, %v2493
      %v2527 = vsel %vm1247, 0.0, %v2432
      %v2528 = vrot.slane %v2274, 1
      %v2529 = vrot.slane %v2277, 1
      %v2530 = vsel %vm1344, %v2528, %v2529
      %v2531 = vrot.slane %v2282, 1
      %v2532 = vsel %vm1344, %v2529, %v2531
      %v2533 = vrot.slane %v2285, 1
      %v2534 = vsel %vm1344, %v2531, %v2533
      %v2535 = vrot.slane %v2290, 1
      %v2536 = vsel %vm1344, %v2533, %v2535
      %v2537 = vrot.slane %v2293, 1
      %v2538 = vsel %vm1344, %v2535, %v2537
      %v2539 = vrot.slane %v2298, 1
      %v2540 = vsel %vm1344, %v2537, %v2539
      %v2541 = vrot.slane %v2301, 1
      %v2542 = vsel %vm1344, %v2539, %v2541
      %v2543 = vrot.slane %v2306, 1
      %v2544 = vsel %vm1344, %v2541, %v2543
      %v2545 = vrot.slane %v2309, 1
      %v2546 = vsel %vm1344, %v2543, %v2545
      %v2547 = vrot.slane %v2314, 1
      %v2548 = vsel %vm1344, %v2545, %v2547
      %v2549 = vrot.slane %v2317, 1
      %v2550 = vsel %vm1344, %v2547, %v2549
      %v2551 = vrot.slane %v2322, 1
      %v2552 = vsel %vm1344, %v2549, %v2551
      %v2553 = vrot.slane %v2325, 1
      %v2554 = vsel %vm1344, %v2551, %v2553
      %v2555 = vrot.slane %v2330, 1
      %v2556 = vsel %vm1344, %v2553, %v2555
      %v2557 = vrot.slane %v2333, 1
      %v2558 = vsel %vm1344, %v2555, %v2557
      %v2559 = vrot.slane %v2338, 1
      %v2560 = vsel %vm1344, %v2557, %v2559
      %v2561 = vrot.slane %v2341, 1
      %v2562 = vsel %vm1344, %v2559, %v2561
      %v2563 = vrot.slane %v2346, 1
      %v2564 = vsel %vm1344, %v2561, %v2563
      %v2565 = vrot.slane %v2349, 1
      %v2566 = vsel %vm1344, %v2563, %v2565
      %v2567 = vrot.slane %v2354, 1
      %v2568 = vsel %vm1344, %v2565, %v2567
      %v2569 = vrot.slane %v2357, 1
      %v2570 = vsel %vm1344, %v2567, %v2569
      %v2571 = vrot.slane %v2362, 1
      %v2572 = vsel %vm1344, %v2569, %v2571
      %v2573 = vrot.slane %v2365, 1
      %v2574 = vsel %vm1344, %v2571, %v2573
      %v2575 = vrot.slane %v2370, 1
      %v2576 = vsel %vm1344, %v2573, %v2575
      %v2577 = vrot.slane %v2373, 1
      %v2578 = vsel %vm1344, %v2575, %v2577
      %v2579 = vrot.slane %v2378, 1
      %v2580 = vsel %vm1344, %v2577, %v2579
      %v2581 = vrot.slane %v2381, 1
      %v2582 = vsel %vm1344, %v2579, %v2581
      %v2583 = vrot.slane %v2386, 1
      %v2584 = vsel %vm1344, %v2581, %v2583
      %v2585 = vrot.slane %v2389, 1
      %v2586 = vsel %vm1344, %v2583, %v2585
      %v2587 = vrot.slane %v2394, 1
      %v2588 = vsel %vm1344, %v2585, %v2587
      %v2589 = vrot.slane %v2397, 1
      %v2590 = vsel %vm1344, %v2587, %v2589
      %v2623 = vsel %vm1344, %v2589, 0.0
      %v2624 = vsel %vm1473, %v2527, 0.0
      %v2625 = vsel %vm1474, %v2434, 0.0
      %v2626 = vsel %vm1475, %v2436, 0.0
      %v2627 = vsel %vm1476, %v2438, 0.0
      %v2628 = vsel %vm1477, %v2440, 0.0
      %v2629 = vsel %vm1478, %v2442, 0.0
      %v2630 = vsel %vm1479, %v2444, 0.0
      %v2631 = vsel %vm1480, %v2446, 0.0
      %v2632 = vsel %vm1481, %v2448, 0.0
      %v2633 = vsel %vm1482, %v2450, 0.0
      %v2634 = vsel %vm1483, %v2452, 0.0
      %v2635 = vsel %vm1484, %v2454, 0.0
      %v2636 = vsel %vm1485, %v2456, 0.0
      %v2637 = vsel %vm1486, %v2458, 0.0
      %v2638 = vsel %vm1487, %v2460, 0.0
      %v2639 = vsel %vm1488, %v2462, 0.0
      %v2640 = vsel %vm1489, %v2464, 0.0
      %v2641 = vsel %vm1490, %v2466, 0.0
      %v2642 = vsel %vm1491, %v2468, 0.0
      %v2643 = vsel %vm1492, %v2470, 0.0
      %v2644 = vsel %vm1493, %v2472, 0.0
      %v2645 = vsel %vm1494, %v2474, 0.0
      %v2646 = vsel %vm1495, %v2476, 0.0
      %v2647 = vsel %vm1496, %v2478, 0.0
      %v2648 = vsel %vm1497, %v2480, 0.0
      %v2649 = vsel %vm1498, %v2482, 0.0
      %v2650 = vsel %vm1499, %v2484, 0.0
      %v2651 = vsel %vm1500, %v2486, 0.0
      %v2652 = vsel %vm1501, %v2488, 0.0
      %v2653 = vsel %vm1502, %v2490, 0.0
      %v2654 = vsel %vm1503, %v2492, 0.0
      %v2655 = vsel %vm1504, %v2494, 0.0
      %2656 = vrot.lane.b32.xlu0 %v2274, 124
      %v2657 = vpop.permute.xlu0 %2656
      %2658 = vrot.lane.b32.xlu0 %v2277, 124
      %v2659 = vpop.permute.xlu0 %2658
      %2660 = vrot.lane.b32.xlu0 %v2282, 124
      %v2661 = vpop.permute.xlu0 %2660
      %2662 = vrot.lane.b32.xlu0 %v2285, 124
      %v2663 = vpop.permute.xlu0 %2662
      %2664 = vrot.lane.b32.xlu0 %v2290, 124
      %v2665 = vpop.permute.xlu0 %2664
      %2666 = vrot.lane.b32.xlu0 %v2293, 124
      %v2667 = vpop.permute.xlu0 %2666
      %2668 = vrot.lane.b32.xlu0 %v2298, 124
      %v2669 = vpop.permute.xlu0 %2668
      %2670 = vrot.lane.b32.xlu0 %v2301, 124
      %v2671 = vpop.permute.xlu0 %2670
      %2672 = vrot.lane.b32.xlu0 %v2306, 124
      %v2673 = vpop.permute.xlu0 %2672
      %2674 = vrot.lane.b32.xlu0 %v2309, 124
      %v2675 = vpop.permute.xlu0 %2674
      %2676 = vrot.lane.b32.xlu0 %v2314, 124
      %v2677 = vpop.permute.xlu0 %2676
      %2678 = vrot.lane.b32.xlu0 %v2317, 124
      %v2679 = vpop.permute.xlu0 %2678
      %2680 = vrot.lane.b32.xlu0 %v2322, 124
      %v2681 = vpop.permute.xlu0 %2680
      %2682 = vrot.lane.b32.xlu0 %v2325, 124
      %v2683 = vpop.permute.xlu0 %2682
      %2684 = vrot.lane.b32.xlu0 %v2330, 124
      %v2685 = vpop.permute.xlu0 %2684
      %2686 = vrot.lane.b32.xlu0 %v2333, 124
      %v2687 = vpop.permute.xlu0 %2686
      %2688 = vrot.lane.b32.xlu0 %v2338, 124
      %v2689 = vpop.permute.xlu0 %2688
      %2690 = vrot.lane.b32.xlu0 %v2341, 124
      %v2691 = vpop.permute.xlu0 %2690
      %2692 = vrot.lane.b32.xlu0 %v2346, 124
      %v2693 = vpop.permute.xlu0 %2692
      %2694 = vrot.lane.b32.xlu0 %v2349, 124
      %v2695 = vpop.permute.xlu0 %2694
      %2696 = vrot.lane.b32.xlu0 %v2354, 124
      %v2697 = vpop.permute.xlu0 %2696
      %2698 = vrot.lane.b32.xlu0 %v2357, 124
      %v2699 = vpop.permute.xlu0 %2698
      %2700 = vrot.lane.b32.xlu0 %v2362, 124
      %v2701 = vpop.permute.xlu0 %2700
      %2702 = vrot.lane.b32.xlu0 %v2365, 124
      %v2703 = vpop.permute.xlu0 %2702
      %2704 = vrot.lane.b32.xlu0 %v2370, 124
      %v2705 = vpop.permute.xlu0 %2704
      %2706 = vrot.lane.b32.xlu0 %v2373, 124
      %v2707 = vpop.permute.xlu0 %2706
      %2708 = vrot.lane.b32.xlu0 %v2378, 124
      %v2709 = vpop.permute.xlu0 %2708
      %2710 = vrot.lane.b32.xlu0 %v2381, 124
      %v2711 = vpop.permute.xlu0 %2710
      %2712 = vrot.lane.b32.xlu0 %v2386, 124
      %v2713 = vpop.permute.xlu0 %2712
      %2714 = vrot.lane.b32.xlu0 %v2389, 124
      %v2715 = vpop.permute.xlu0 %2714
      %2716 = vrot.lane.b32.xlu0 %v2394, 124
      %v2717 = vpop.permute.xlu0 %2716
      %2718 = vrot.lane.b32.xlu0 %v2397, 124
      %v2719 = vpop.permute.xlu0 %2718
      %v2752 = vadd.f32 %v2624, %v2657
      %v2753 = vadd.f32 %v2625, %v2659
      %v2754 = vadd.f32 %v2626, %v2661
      %v2755 = vadd.f32 %v2627, %v2663
      %v2756 = vadd.f32 %v2628, %v2665
      %v2757 = vadd.f32 %v2629, %v2667
      %v2758 = vadd.f32 %v2630, %v2669
      %v2759 = vadd.f32 %v2631, %v2671
      %v2760 = vadd.f32 %v2632, %v2673
      %v2761 = vadd.f32 %v2633, %v2675
      %v2762 = vadd.f32 %v2634, %v2677
      %v2763 = vadd.f32 %v2635, %v2679
      %v2764 = vadd.f32 %v2636, %v2681
      %v2765 = vadd.f32 %v2637, %v2683
      %v2766 = vadd.f32 %v2638, %v2685
      %v2767 = vadd.f32 %v2639, %v2687
      %v2768 = vadd.f32 %v2640, %v2689
      %v2769 = vadd.f32 %v2641, %v2691
      %v2770 = vadd.f32 %v2642, %v2693
      %v2771 = vadd.f32 %v2643, %v2695
      %v2772 = vadd.f32 %v2644, %v2697
      %v2773 = vadd.f32 %v2645, %v2699
      %v2774 = vadd.f32 %v2646, %v2701
      %v2775 = vadd.f32 %v2647, %v2703
      %v2776 = vadd.f32 %v2648, %v2705
      %v2777 = vadd.f32 %v2649, %v2707
      %v2778 = vadd.f32 %v2650, %v2709
      %v2779 = vadd.f32 %v2651, %v2711
      %v2780 = vadd.f32 %v2652, %v2713
      %v2781 = vadd.f32 %v2653, %v2715
      %v2782 = vadd.f32 %v2654, %v2717
      %v2783 = vadd.f32 %v2655, %v2719
      %v2784 = vsel %vm1697, %v2530, 0.0
      %v2785 = vsel %vm1698, %v2532, 0.0
      %v2786 = vsel %vm1699, %v2534, 0.0
      %v2787 = vsel %vm1700, %v2536, 0.0
      %v2788 = vsel %vm1701, %v2538, 0.0
      %v2789 = vsel %vm1702, %v2540, 0.0
      %v2790 = vsel %vm1703, %v2542, 0.0
      %v2791 = vsel %vm1704, %v2544, 0.0
      %v2792 = vsel %vm1705, %v2546, 0.0
      %v2793 = vsel %vm1706, %v2548, 0.0
      %v2794 = vsel %vm1707, %v2550, 0.0
      %v2795 = vsel %vm1708, %v2552, 0.0
      %v2796 = vsel %vm1709, %v2554, 0.0
      %v2797 = vsel %vm1710, %v2556, 0.0
      %v2798 = vsel %vm1711, %v2558, 0.0
      %v2799 = vsel %vm1712, %v2560, 0.0
      %v2800 = vsel %vm1713, %v2562, 0.0
      %v2801 = vsel %vm1714, %v2564, 0.0
      %v2802 = vsel %vm1715, %v2566, 0.0
      %v2803 = vsel %vm1716, %v2568, 0.0
      %v2804 = vsel %vm1717, %v2570, 0.0
      %v2805 = vsel %vm1718, %v2572, 0.0
      %v2806 = vsel %vm1719, %v2574, 0.0
      %v2807 = vsel %vm1720, %v2576, 0.0
      %v2808 = vsel %vm1721, %v2578, 0.0
      %v2809 = vsel %vm1722, %v2580, 0.0
      %v2810 = vsel %vm1723, %v2582, 0.0
      %v2811 = vsel %vm1724, %v2584, 0.0
      %v2812 = vsel %vm1725, %v2586, 0.0
      %v2813 = vsel %vm1726, %v2588, 0.0
      %v2814 = vsel %vm1727, %v2590, 0.0
      %v2815 = vsel %vm1728, %v2623, 0.0
      %2848 = vrot.lane.b32.xlu0 %v2784, 120
      %v2849 = vpop.permute.xlu0 %2848
      %2850 = vrot.lane.b32.xlu0 %v2785, 120
      %v2851 = vpop.permute.xlu0 %2850
      %2852 = vrot.lane.b32.xlu0 %v2786, 120
      %v2853 = vpop.permute.xlu0 %2852
      %2854 = vrot.lane.b32.xlu0 %v2787, 120
      %v2855 = vpop.permute.xlu0 %2854
      %2856 = vrot.lane.b32.xlu0 %v2788, 120
      %v2857 = vpop.permute.xlu0 %2856
      %2858 = vrot.lane.b32.xlu0 %v2789, 120
      %v2859 = vpop.permute.xlu0 %2858
      %2860 = vrot.lane.b32.xlu0 %v2790, 120
      %v2861 = vpop.permute.xlu0 %2860
      %2862 = vrot.lane.b32.xlu0 %v2791, 120
      %v2863 = vpop.permute.xlu0 %2862
      %2864 = vrot.lane.b32.xlu0 %v2792, 120
      %v2865 = vpop.permute.xlu0 %2864
      %2866 = vrot.lane.b32.xlu0 %v2793, 120
      %v2867 = vpop.permute.xlu0 %2866
      %2868 = vrot.lane.b32.xlu0 %v2794, 120
      %v2869 = vpop.permute.xlu0 %2868
      %2870 = vrot.lane.b32.xlu0 %v2795, 120
      %v2871 = vpop.permute.xlu0 %2870
      %2872 = vrot.lane.b32.xlu0 %v2796, 120
      %v2873 = vpop.permute.xlu0 %2872
      %2874 = vrot.lane.b32.xlu0 %v2797, 120
      %v2875 = vpop.permute.xlu0 %2874
      %2876 = vrot.lane.b32.xlu0 %v2798, 120
      %v2877 = vpop.permute.xlu0 %2876
      %2878 = vrot.lane.b32.xlu0 %v2799, 120
      %v2879 = vpop.permute.xlu0 %2878
      %2880 = vrot.lane.b32.xlu0 %v2800, 120
      %v2881 = vpop.permute.xlu0 %2880
      %2882 = vrot.lane.b32.xlu0 %v2801, 120
      %v2883 = vpop.permute.xlu0 %2882
      %2884 = vrot.lane.b32.xlu0 %v2802, 120
      %v2885 = vpop.permute.xlu0 %2884
      %2886 = vrot.lane.b32.xlu0 %v2803, 120
      %v2887 = vpop.permute.xlu0 %2886
      %2888 = vrot.lane.b32.xlu0 %v2804, 120
      %v2889 = vpop.permute.xlu0 %2888
      %2890 = vrot.lane.b32.xlu0 %v2805, 120
      %v2891 = vpop.permute.xlu0 %2890
      %2892 = vrot.lane.b32.xlu0 %v2806, 120
      %v2893 = vpop.permute.xlu0 %2892
      %2894 = vrot.lane.b32.xlu0 %v2807, 120
      %v2895 = vpop.permute.xlu0 %2894
      %2896 = vrot.lane.b32.xlu0 %v2808, 120
      %v2897 = vpop.permute.xlu0 %2896
      %2898 = vrot.lane.b32.xlu0 %v2809, 120
      %v2899 = vpop.permute.xlu0 %2898
      %2900 = vrot.lane.b32.xlu0 %v2810, 120
      %v2901 = vpop.permute.xlu0 %2900
      %2902 = vrot.lane.b32.xlu0 %v2811, 120
      %v2903 = vpop.permute.xlu0 %2902
      %2904 = vrot.lane.b32.xlu0 %v2812, 120
      %v2905 = vpop.permute.xlu0 %2904
      %2906 = vrot.lane.b32.xlu0 %v2813, 120
      %v2907 = vpop.permute.xlu0 %2906
      %2908 = vrot.lane.b32.xlu0 %v2814, 120
      %v2909 = vpop.permute.xlu0 %2908
      %2910 = vrot.lane.b32.xlu0 %v2815, 120
      %v2911 = vpop.permute.xlu0 %2910
      %v2944 = vadd.f32 %v2752, %v2849
      %v2945 = vadd.f32 %v2753, %v2851
      %v2946 = vadd.f32 %v2754, %v2853
      %v2947 = vadd.f32 %v2755, %v2855
      %v2948 = vadd.f32 %v2756, %v2857
      %v2949 = vadd.f32 %v2757, %v2859
      %v2950 = vadd.f32 %v2758, %v2861
      %v2951 = vadd.f32 %v2759, %v2863
      %v2952 = vadd.f32 %v2760, %v2865
      %v2953 = vadd.f32 %v2761, %v2867
      %v2954 = vadd.f32 %v2762, %v2869
      %v2955 = vadd.f32 %v2763, %v2871
      %v2956 = vadd.f32 %v2764, %v2873
      %v2957 = vadd.f32 %v2765, %v2875
      %v2958 = vadd.f32 %v2766, %v2877
      %v2959 = vadd.f32 %v2767, %v2879
      %v2960 = vadd.f32 %v2768, %v2881
      %v2961 = vadd.f32 %v2769, %v2883
      %v2962 = vadd.f32 %v2770, %v2885
      %v2963 = vadd.f32 %v2771, %v2887
      %v2964 = vadd.f32 %v2772, %v2889
      %v2965 = vadd.f32 %v2773, %v2891
      %v2966 = vadd.f32 %v2774, %v2893
      %v2967 = vadd.f32 %v2775, %v2895
      %v2968 = vadd.f32 %v2776, %v2897
      %v2969 = vadd.f32 %v2777, %v2899
      %v2970 = vadd.f32 %v2778, %v2901
      %v2971 = vadd.f32 %v2779, %v2903
      %v2972 = vadd.f32 %v2780, %v2905
      %v2973 = vadd.f32 %v2781, %v2907
      %v2974 = vadd.f32 %v2782, %v2909
      %v2975 = vadd.f32 %v2783, %v2911
      %v2976 = vld [vmem:[%s4] sm:$0x1]
      %v2978 = vlaneseq
      %v2979 = vshrl.u32 %v2978, 7
      %v2980 = vsub.s32 0, %v2979
      %v2981 = vrot.slane %v2976, %v2980
      %v2983 = vadd.f32 %v2944, %v2981
      %v2984 = vadd.f32 %v2945, %v2981
      %v2985 = vadd.f32 %v2946, %v2981
      %v2986 = vadd.f32 %v2947, %v2981
      %v2987 = vadd.f32 %v2948, %v2981
      %v2988 = vadd.f32 %v2949, %v2981
      %v2989 = vadd.f32 %v2950, %v2981
      %v2990 = vadd.f32 %v2951, %v2981
      %v2991 = vadd.f32 %v2952, %v2981
      %v2992 = vadd.f32 %v2953, %v2981
      %v2993 = vadd.f32 %v2954, %v2981
      %v2994 = vadd.f32 %v2955, %v2981
      %v2995 = vadd.f32 %v2956, %v2981
      %v2996 = vadd.f32 %v2957, %v2981
      %v2997 = vadd.f32 %v2958, %v2981
      %v2998 = vadd.f32 %v2959, %v2981
      %v2999 = vadd.f32 %v2960, %v2981
      %v3000 = vadd.f32 %v2961, %v2981
      %v3001 = vadd.f32 %v2962, %v2981
      %v3002 = vadd.f32 %v2963, %v2981
      %v3003 = vadd.f32 %v2964, %v2981
      %v3004 = vadd.f32 %v2965, %v2981
      %v3005 = vadd.f32 %v2966, %v2981
      %v3006 = vadd.f32 %v2967, %v2981
      %v3007 = vadd.f32 %v2968, %v2981
      %v3008 = vadd.f32 %v2969, %v2981
      %v3009 = vadd.f32 %v2970, %v2981
      %v3010 = vadd.f32 %v2971, %v2981
      %v3011 = vadd.f32 %v2972, %v2981
      %v3012 = vadd.f32 %v2973, %v2981
      %v3013 = vadd.f32 %v2974, %v2981
      %v3014 = vadd.f32 %v2975, %v2981
      %v3015 = vunpack.c.l.bf16 %v226
      %v3016 = vunpack.c.l.bf16 %v227
      %v3017 = vunpack.c.l.bf16 %v228
      %v3018 = vunpack.c.l.bf16 %v229
      %v3019 = vunpack.c.l.bf16 %v230
      %v3020 = vunpack.c.l.bf16 %v231
      %v3021 = vunpack.c.l.bf16 %v232
      %v3022 = vunpack.c.l.bf16 %v233
      %v3023 = vunpack.c.l.bf16 %v234
      %v3024 = vunpack.c.l.bf16 %v235
      %v3025 = vunpack.c.l.bf16 %v236
      %v3026 = vunpack.c.l.bf16 %v237
      %v3027 = vunpack.c.l.bf16 %v238
      %v3028 = vunpack.c.l.bf16 %v239
      %v3029 = vunpack.c.l.bf16 %v240
      %v3030 = vunpack.c.l.bf16 %v241
      %v3031 = vunpack.c.l.bf16 %v242
      %v3032 = vunpack.c.l.bf16 %v243
      %v3033 = vunpack.c.l.bf16 %v244
      %v3034 = vunpack.c.l.bf16 %v245
      %v3035 = vunpack.c.l.bf16 %v246
      %v3036 = vunpack.c.l.bf16 %v247
      %v3037 = vunpack.c.l.bf16 %v248
      %v3038 = vunpack.c.l.bf16 %v249
      %v3039 = vunpack.c.l.bf16 %v250
      %v3040 = vunpack.c.l.bf16 %v251
      %v3041 = vunpack.c.l.bf16 %v252
      %v3042 = vunpack.c.l.bf16 %v253
      %v3043 = vunpack.c.l.bf16 %v254
      %v3044 = vunpack.c.l.bf16 %v255
      %v3045 = vunpack.c.l.bf16 %v256
      %v3046 = vunpack.c.l.bf16 %v257
      %v3047 = vadd.f32 %v2983, %v3015
      %v3048 = vadd.f32 %v2984, %v3016
      %v3049 = vadd.f32 %v2985, %v3017
      %v3050 = vadd.f32 %v2986, %v3018
      %v3051 = vadd.f32 %v2987, %v3019
      %v3052 = vadd.f32 %v2988, %v3020
      %v3053 = vadd.f32 %v2989, %v3021
      %v3054 = vadd.f32 %v2990, %v3022
      %v3055 = vadd.f32 %v2991, %v3023
      %v3056 = vadd.f32 %v2992, %v3024
      %v3057 = vadd.f32 %v2993, %v3025
      %v3058 = vadd.f32 %v2994, %v3026
      %v3059 = vadd.f32 %v2995, %v3027
      %v3060 = vadd.f32 %v2996, %v3028
      %v3061 = vadd.f32 %v2997, %v3029
      %v3062 = vadd.f32 %v2998, %v3030
      %v3063 = vadd.f32 %v2999, %v3031
      %v3064 = vadd.f32 %v3000, %v3032
      %v3065 = vadd.f32 %v3001, %v3033
      %v3066 = vadd.f32 %v3002, %v3034
      %v3067 = vadd.f32 %v3003, %v3035
      %v3068 = vadd.f32 %v3004, %v3036
      %v3069 = vadd.f32 %v3005, %v3037
      %v3070 = vadd.f32 %v3006, %v3038
      %v3071 = vadd.f32 %v3007, %v3039
      %v3072 = vadd.f32 %v3008, %v3040
      %v3073 = vadd.f32 %v3009, %v3041
      %v3074 = vadd.f32 %v3010, %v3042
      %v3075 = vadd.f32 %v3011, %v3043
      %v3076 = vadd.f32 %v3012, %v3044
      %v3077 = vadd.f32 %v3013, %v3045
      %v3078 = vadd.f32 %v3014, %v3046
      %v3079 = vmax.f32 %v3047, 0.0
      %v3080 = vmax.f32 %v3048, 0.0
      %v3081 = vmax.f32 %v3049, 0.0
      %v3082 = vmax.f32 %v3050, 0.0
      %v3083 = vmax.f32 %v3051, 0.0
      %v3084 = vmax.f32 %v3052, 0.0
      %v3085 = vmax.f32 %v3053, 0.0
      %v3086 = vmax.f32 %v3054, 0.0
      %v3087 = vmax.f32 %v3055, 0.0
      %v3088 = vmax.f32 %v3056, 0.0
      %v3089 = vmax.f32 %v3057, 0.0
      %v3090 = vmax.f32 %v3058, 0.0
      %v3091 = vmax.f32 %v3059, 0.0
      %v3092 = vmax.f32 %v3060, 0.0
      %v3093 = vmax.f32 %v3061, 0.0
      %v3094 = vmax.f32 %v3062, 0.0
      %v3095 = vmax.f32 %v3063, 0.0
      %v3096 = vmax.f32 %v3064, 0.0
      %v3097 = vmax.f32 %v3065, 0.0
      %v3098 = vmax.f32 %v3066, 0.0
      %v3099 = vmax.f32 %v3067, 0.0
      %v3100 = vmax.f32 %v3068, 0.0
      %v3101 = vmax.f32 %v3069, 0.0
      %v3102 = vmax.f32 %v3070, 0.0
      %v3103 = vmax.f32 %v3071, 0.0
      %v3104 = vmax.f32 %v3072, 0.0
      %v3105 = vmax.f32 %v3073, 0.0
      %v3106 = vmax.f32 %v3074, 0.0
      %v3107 = vmax.f32 %v3075, 0.0
      %v3108 = vmax.f32 %v3076, 0.0
      %v3109 = vmax.f32 %v3077, 0.0
      %v3110 = vmax.f32 %v3078, 0.0
      %v3111 = vpack.c.bf16 %v3080, %v3079
      %v3112 = vpack.c.bf16 %v3082, %v3081
      %v3113 = vpack.c.bf16 %v3084, %v3083
      %v3114 = vpack.c.bf16 %v3086, %v3085
      %v3115 = vpack.c.bf16 %v3088, %v3087
      %v3116 = vpack.c.bf16 %v3090, %v3089
      %v3117 = vpack.c.bf16 %v3092, %v3091
      %v3118 = vpack.c.bf16 %v3094, %v3093
      %v3119 = vpack.c.bf16 %v3096, %v3095
      %v3120 = vpack.c.bf16 %v3098, %v3097
      %v3121 = vpack.c.bf16 %v3100, %v3099
      %v3122 = vpack.c.bf16 %v3102, %v3101
      %v3123 = vpack.c.bf16 %v3104, %v3103
      %v3124 = vpack.c.bf16 %v3106, %v3105
      %v3125 = vpack.c.bf16 %v3108, %v3107
      %v3126 = vpack.c.bf16 %v3110, %v3109
      %v3143 = vunpack.c.l.b16 %v3111
      %v3144 = vunpack.c.h.b16 %v3111
      %v3145 = vunpack.c.l.b16 %v3112
      %v3146 = vunpack.c.h.b16 %v3112
      %v3147 = vunpack.c.l.b16 %v3113
      %v3148 = vunpack.c.h.b16 %v3113
      %v3149 = vunpack.c.l.b16 %v3114
      %v3150 = vunpack.c.h.b16 %v3114
      %v3151 = vunpack.c.l.b16 %v3115
      %v3152 = vunpack.c.h.b16 %v3115
      %v3153 = vunpack.c.l.b16 %v3116
      %v3154 = vunpack.c.h.b16 %v3116
      %v3155 = vunpack.c.l.b16 %v3117
      %v3156 = vunpack.c.h.b16 %v3117
      %v3157 = vunpack.c.l.b16 %v3118
      %v3158 = vunpack.c.h.b16 %v3118
      %v3159 = vunpack.c.l.b16 %v3119
      %v3160 = vunpack.c.h.b16 %v3119
      %v3161 = vunpack.c.l.b16 %v3120
      %v3162 = vunpack.c.h.b16 %v3120
      %v3163 = vunpack.c.l.b16 %v3121
      %v3164 = vunpack.c.h.b16 %v3121
      %v3165 = vunpack.c.l.b16 %v3122
      %v3166 = vunpack.c.h.b16 %v3122
      %v3167 = vunpack.c.l.b16 %v3123
      %v3168 = vunpack.c.h.b16 %v3123
      %v3169 = vunpack.c.l.b16 %v3124
      %v3170 = vunpack.c.h.b16 %v3124
      %v3171 = vunpack.c.l.b16 %v3125
      %v3172 = vunpack.c.h.b16 %v3125
      %v3173 = vunpack.c.l.b16 %v3126
      %v3174 = vunpack.c.h.b16 %v3126
      %v3175 = vpack.c.b16 %v3143, %v3143
      %v3176 = vpack.c.b16 %v3144, %v3144
      %v3177 = vpack.c.b16 %v3145, %v3145
      %v3178 = vpack.c.b16 %v3146, %v3146
      %v3179 = vpack.c.b16 %v3147, %v3147
      %v3180 = vpack.c.b16 %v3148, %v3148
      %v3181 = vpack.c.b16 %v3149, %v3149
      %v3182 = vpack.c.b16 %v3150, %v3150
      %v3183 = vpack.c.b16 %v3151, %v3151
      %v3184 = vpack.c.b16 %v3152, %v3152
      %v3185 = vpack.c.b16 %v3153, %v3153
      %v3186 = vpack.c.b16 %v3154, %v3154
      %v3187 = vpack.c.b16 %v3155, %v3155
      %v3188 = vpack.c.b16 %v3156, %v3156
      %v3189 = vpack.c.b16 %v3157, %v3157
      %v3190 = vpack.c.b16 %v3158, %v3158
      %v3191 = vpack.c.b16 %v3159, %v3159
      %v3192 = vpack.c.b16 %v3160, %v3160
      %v3193 = vpack.c.b16 %v3161, %v3161
      %v3194 = vpack.c.b16 %v3162, %v3162
      %v3195 = vpack.c.b16 %v3163, %v3163
      %v3196 = vpack.c.b16 %v3164, %v3164
      %v3197 = vpack.c.b16 %v3165, %v3165
      %v3198 = vpack.c.b16 %v3166, %v3166
      %v3199 = vpack.c.b16 %v3167, %v3167
      %v3200 = vpack.c.b16 %v3168, %v3168
      %v3201 = vpack.c.b16 %v3169, %v3169
      %v3202 = vpack.c.b16 %v3170, %v3170
      %v3203 = vpack.c.b16 %v3171, %v3171
      %v3204 = vpack.c.b16 %v3172, %v3172
      %v3205 = vpack.c.b16 %v3173, %v3173
      %v3206 = vpack.c.b16 %v3174, %v3174
      %vm3239 = vcmask 27648
      %3240 = vst.msk [vmem:[%s224] sm:$0xf] %vm3239, %v3175
      %3241 = vst.msk [vmem:[%s224 + $0x4] sm:$0xf] %vm3239, %v3176
      %3242 = vst.msk [vmem:[%s224 + $0x8] sm:$0xf] %vm3239, %v3177
      %3243 = vst.msk [vmem:[%s224 + $0xc] sm:$0xf] %vm3239, %v3178
      %3244 = vst.msk [vmem:[%s224 + $0x10] sm:$0xf] %vm3239, %v3179
      %3245 = vst.msk [vmem:[%s224 + $0x14] sm:$0xf] %vm3239, %v3180
      %3246 = vst.msk [vmem:[%s224 + $0x18] sm:$0xf] %vm3239, %v3181
      %3247 = vst.msk [vmem:[%s224 + $0x1c] sm:$0xf] %vm3239, %v3182
      %3248 = vst.msk [vmem:[%s224 + $0x20] sm:$0xf] %vm3239, %v3183
      %3249 = vst.msk [vmem:[%s224 + $0x24] sm:$0xf] %vm3239, %v3184
      %3250 = vst.msk [vmem:[%s224 + $0x28] sm:$0xf] %vm3239, %v3185
      %3251 = vst.msk [vmem:[%s224 + $0x2c] sm:$0xf] %vm3239, %v3186
      %3252 = vst.msk [vmem:[%s224 + $0x30] sm:$0xf] %vm3239, %v3187
      %3253 = vst.msk [vmem:[%s224 + $0x34] sm:$0xf] %vm3239, %v3188
      %3254 = vst.msk [vmem:[%s224 + $0x38] sm:$0xf] %vm3239, %v3189
      %3255 = vst.msk [vmem:[%s224 + $0x3c] sm:$0xf] %vm3239, %v3190
      %3256 = vst.msk [vmem:[%s224 + $0x40] sm:$0xf] %vm3239, %v3191
      %3257 = vst.msk [vmem:[%s224 + $0x44] sm:$0xf] %vm3239, %v3192
      %3258 = vst.msk [vmem:[%s224 + $0x48] sm:$0xf] %vm3239, %v3193
      %3259 = vst.msk [vmem:[%s224 + $0x4c] sm:$0xf] %vm3239, %v3194
      %3260 = vst.msk [vmem:[%s224 + $0x50] sm:$0xf] %vm3239, %v3195
      %3261 = vst.msk [vmem:[%s224 + $0x54] sm:$0xf] %vm3239, %v3196
      %3262 = vst.msk [vmem:[%s224 + $0x58] sm:$0xf] %vm3239, %v3197
      %3263 = vst.msk [vmem:[%s224 + $0x5c] sm:$0xf] %vm3239, %v3198
      %3264 = vst.msk [vmem:[%s224 + $0x60] sm:$0xf] %vm3239, %v3199
      %3265 = vst.msk [vmem:[%s224 + $0x64] sm:$0xf] %vm3239, %v3200
      %3266 = vst.msk [vmem:[%s224 + $0x68] sm:$0xf] %vm3239, %v3201
      %3267 = vst.msk [vmem:[%s224 + $0x6c] sm:$0xf] %vm3239, %v3202
      %3268 = vst.msk [vmem:[%s224 + $0x70] sm:$0xf] %vm3239, %v3203
      %3269 = vst.msk [vmem:[%s224 + $0x74] sm:$0xf] %vm3239, %v3204
      %3270 = vst.msk [vmem:[%s224 + $0x78] sm:$0xf] %vm3239, %v3205
      %3271 = vst.msk [vmem:[%s224 + $0x7c] sm:$0xf] %vm3239, %v3206
      %p3272 = scmp.lt.s32.totalorder %s16, 1
      %s3273 = scalar_select %p3272, %s16, 1
      %s3274 = smul.addr %s3273, 32
      %s3275 = smul.addr %s3274, 4
      %s3276 = scalar_lea.vmem %s5, %s3275
      // Predicated region
      $region41: #{tpu_custom_call.1} parent=39 // pred_check
        %p3277 = pneg %p144
      $region42: #{tpu_custom_call.1} parent=39 // pred_check_branch
        %3279 = sbr.rel (%p3277) target = $region44
      $region43: #{tpu_custom_call.1} parent=39 // pred_region
        _
      $region44: #{tpu_custom_call.1} parent=39 // pred_fallthru
        _
    $region40: #{tpu_custom_call.1} parent=5 // pred_fallthru
      _
    %p3280 = scmp.le.s32.totalorder 2, %s11
    // Predicated region
    $region45: #{tpu_custom_call.1} parent=5 // pred_check
      %p3281 = pneg %p3280
    $region46: #{tpu_custom_call.1} parent=5 // pred_check_branch
      %3283 = sbr.rel (%p3281) target = $region48
    $region47: #{tpu_custom_call.1} parent=5 // pred_region
      %s3284 = ssub.s32 %s11, 2
      // Predicated region
      $region49: #{tpu_custom_call.1} parent=47 // pred_check
        %p3285 = pneg %p150
      $region50: #{tpu_custom_call.1} parent=47 // pred_check_branch
        %3287 = sbr.rel (%p3285) target = $region52
      $region51: #{tpu_custom_call.1} parent=47 // pred_region
        %p3288 = scmp.lt.s32.totalorder %s17, 1
        %s3289 = scalar_select %p3288, %s17, 1
        %s3290 = smul.addr %s3289, 32
        %s3291 = smul.addr %s3290, 4
        %s3292 = scalar_lea.vmem %s5, %s3291
      $region52: #{tpu_custom_call.1} parent=47 // pred_fallthru
        _
    $region48: #{tpu_custom_call.1} parent=5 // pred_fallthru
      _
  $region6: #{tpu_custom_call.1} parent=0 // loop_footer
    %s15 = sadd.s32 1, %s11
  $region7: #{tpu_custom_call.1} parent=0 // loop_footer_branch
    %10 = sbr.rel target = $region3
  $region8: #{tpu_custom_call.1} parent=0 // loop_exit
    _

// kernel: tpu_custom_call.1
$region0: #{tpu_custom_call.1}
  #allocation0 [shape = 'u32[]', space=smem, size = 0x4, offset = 0x4, fixed_abs, tag = 'smem constant byte address 0x4 - core index']
  #allocation1 [shape = 'u32[144,128]{1,0:T(1,128)}', space=vmem, size = 0x12000, scoped, tag = 'internal scratch']
  #allocation2 [shape = 'bf16[256,12]{1,0:T(16,128)(2,1)}', space=vmem, size = 0x10000, scoped, tag = 'scratch operand']
  #allocation3 [shape = 'bf16[256,12]{1,0:T(16,128)(2,1)}', space=vmem, size = 0x10000, scoped, tag = 'scratch operand']
  %s0 = inlined_call_operand.vmem [shape: bf16[2,256,4], index: 0, kind: input, shape index: {}]
  %s1 = inlined_call_operand.vmem [shape: bf16[12,12], index: 1, kind: input, shape index: {}]
  %s2 = inlined_call_operand.vmem [shape: f32[1,4], index: 2, kind: input, shape index: {}]
  %s3 = inlined_call_operand.vmem [shape: bf16[12,12], index: 3, kind: input, shape index: {}]
  %s4 = inlined_call_operand.vmem [shape: f32[1,4], index: 4, kind: input, shape index: {}]
  %s5 = inlined_call_operand.vmem [shape: bf16[2,256,4], index: 5, kind: output, shape index: {}]
  %s6 = sld [smem:[#allocation0]]
  $region53: #{tpu_custom_call.1} parent=0
    _
  %s8 = ssub.s32 1, %s6
  %s9 = scalar_select 0, %s8, %s6
  loop: start=0, step=1, limit=4
  $region2: #{tpu_custom_call.1} parent=0 // loop_pre_header
    _
  $region3: #{tpu_custom_call.1} parent=0 // loop_header
    %s11 = sphi 0, %s15
    %p12 = scmp.ge.s32.totalorder %s11, 4
    %s21 = sphi 0, %s23
    %s24 = sphi 0, %s21
    %s25 = sphi 0, %s24
    %s41 = sphi 0, %s25
    %s45 = sphi 0, %s45
    %s47 = sphi 0, %s45
    %s48 = sphi 0, %s47
    %s62 = sphi 0, %s48
    %s66 = sphi 0, %s66
    %s68 = sphi 0, %s66
    %s69 = sphi 0, %s68
    %s83 = sphi 0, %s69
    %s87 = sphi 0, %s87
    %s89 = sphi 0, %s87
    %s90 = sphi 0, %s89
    %s104 = sphi 0, %s90
    %s108 = sphi 0, %s108
    %s110 = sphi 0, %s108
    %s111 = sphi 0, %s110
    %s125 = sphi 0, %s111
    %s131 = sphi 0, %s133
    %s134 = sphi 0, %s131
    %s135 = sphi 0, %s134
    %s151 = sphi 0, %s135
  $region4: #{tpu_custom_call.1} parent=0 // loop_header_branch
    %14 = sbr.rel (%p12) target = $region8
  $region5: #{tpu_custom_call.1} parent=0 // loop_body
    %s16 = ssub.s32 %s11, 1
    %s17 = ssub.s32 %s11, 2
    %s18 = sadd.s32 %s11, 1
    %s19 = ssub.s32 %s11, %s18
    %p20 = scmp.eq.s32.totalorder %s19, 0
    %s22 = sadd.s32 %s21, 1
    %s23 = scalar_select %p20, %s21, %s22
    %p26 = pneg %p20
    %p27 = scmp.eq.s32.totalorder %s11, 1
    %p28 = por %p26, %p27
    %p29 = scmp.ne.s32.totalorder %s21, %s24
    %p30 = scmp.eq.s32.totalorder %s11, 0
    %p31 = por %p29, %p30
    %p32 = scmp.ne.s32.totalorder %s21, %s24
    %p33 = scmp.eq.s32.totalorder %s16, 1
    %p34 = por %p32, %p33
    %p35 = scmp.ne.s32.totalorder %s24, %s25
    %p36 = scmp.eq.s32.totalorder %s16, 0
    %p37 = por %p35, %p36
    %p38 = scmp.ne.s32.totalorder %s24, %s25
    %p39 = scmp.eq.s32.totalorder %s17, 1
    %p40 = por %p38, %p39
    %p42 = scmp.ne.s32.totalorder %s25, %s41
    %p43 = scmp.eq.s32.totalorder %s17, 0
    %p44 = por %p42, %p43
    %s46 = sadd.s32 %s45, 1
    %p49 = scmp.eq.s32.totalorder %s11, 1
    %p50 = scmp.ne.s32.totalorder %s45, %s47
    %p51 = scmp.eq.s32.totalorder %s11, 0
    %p52 = por %p50, %p51
    %p53 = scmp.ne.s32.totalorder %s45, %s47
    %p54 = scmp.eq.s32.totalorder %s16, 1
    %p55 = por %p53, %p54
    %p56 = scmp.ne.s32.totalorder %s47, %s48
    %p57 = scmp.eq.s32.totalorder %s16, 0
    %p58 = por %p56, %p57
    %p59 = scmp.ne.s32.totalorder %s47, %s48
    %p60 = scmp.eq.s32.totalorder %s17, 1
    %p61 = por %p59, %p60
    %p63 = scmp.ne.s32.totalorder %s48, %s62
    %p64 = scmp.eq.s32.totalorder %s17, 0
    %p65 = por %p63, %p64
    %s67 = sadd.s32 %s66, 1
    %p70 = scmp.eq.s32.totalorder %s11, 1
    %p71 = scmp.ne.s32.totalorder %s66, %s68
    %p72 = scmp.eq.s32.totalorder %s11, 0
    %p73 = por %p71, %p72
    %p74 = scmp.ne.s32.totalorder %s66, %s68
    %p75 = scmp.eq.s32.totalorder %s16, 1
    %p76 = por %p74, %p75
    %p77 = scmp.ne.s32.totalorder %s68, %s69
    %p78 = scmp.eq.s32.totalorder %s16, 0
    %p79 = por %p77, %p78
    %p80 = scmp.ne.s32.totalorder %s68, %s69
    %p81 = scmp.eq.s32.totalorder %s17, 1
    %p82 = por %p80, %p81
    %p84 = scmp.ne.s32.totalorder %s69, %s83
    %p85 = scmp.eq.s32.totalorder %s17, 0
    %p86 = por %p84, %p85
    %s88 = sadd.s32 %s87, 1
    %p91 = scmp.eq.s32.totalorder %s11, 1
    %p92 = scmp.ne.s32.totalorder %s87, %s89
    %p93 = scmp.eq.s32.totalorder %s11, 0
    %p94 = por %p92, %p93
    %p95 = scmp.ne.s32.totalorder %s87, %s89
    %p96 = scmp.eq.s32.totalorder %s16, 1
    %p97 = por %p95, %p96
    %p98 = scmp.ne.s32.totalorder %s89, %s90
    %p99 = scmp.eq.s32.totalorder %s16, 0
    %p100 = por %p98, %p99
    %p101 = scmp.ne.s32.totalorder %s89, %s90
    %p102 = scmp.eq.s32.totalorder %s17, 1
    %p103 = por %p101, %p102
    %p105 = scmp.ne.s32.totalorder %s90, %s104
    %p106 = scmp.eq.s32.totalorder %s17, 0
    %p107 = por %p105, %p106
    %s109 = sadd.s32 %s108, 1
    %p112 = scmp.eq.s32.totalorder %s11, 1
    %p113 = scmp.ne.s32.totalorder %s108, %s110
    %p114 = scmp.eq.s32.totalorder %s11, 0
    %p115 = por %p113, %p114
    %p116 = scmp.ne.s32.totalorder %s108, %s110
    %p117 = scmp.eq.s32.totalorder %s16, 1
    %p118 = por %p116, %p117
    %p119 = scmp.ne.s32.totalorder %s110, %s111
    %p120 = scmp.eq.s32.totalorder %s16, 0
    %p121 = por %p119, %p120
    %p122 = scmp.ne.s32.totalorder %s110, %s111
    %p123 = scmp.eq.s32.totalorder %s17, 1
    %p124 = por %p122, %p123
    %p126 = scmp.ne.s32.totalorder %s111, %s125
    %p127 = scmp.eq.s32.totalorder %s17, 0
    %p128 = por %p126, %p127
    %s129 = ssub.s32 %s11, %s18
    %p130 = scmp.eq.s32.totalorder %s129, 0
    %s132 = sadd.s32 %s131, 1
    %s133 = scalar_select %p130, %s131, %s132
    %p136 = pneg %p130
    %p137 = scmp.eq.s32.totalorder %s11, 1
    %p138 = por %p136, %p137
    %p139 = scmp.ne.s32.totalorder %s131, %s134
    %p140 = scmp.eq.s32.totalorder %s11, 0
    %p141 = por %p139, %p140
    %p142 = scmp.ne.s32.totalorder %s131, %s134
    %p143 = scmp.eq.s32.totalorder %s16, 1
    %p144 = por %p142, %p143
    %p145 = scmp.ne.s32.totalorder %s134, %s135
    %p146 = scmp.eq.s32.totalorder %s16, 0
    %p147 = por %p145, %p146
    %p148 = scmp.ne.s32.totalorder %s134, %s135
    %p149 = scmp.eq.s32.totalorder %s17, 1
    %p150 = por %p148, %p149
    %p152 = scmp.ne.s32.totalorder %s135, %s151
    %p153 = scmp.eq.s32.totalorder %s17, 0
    %p154 = por %p152, %p153
    %p155 = scmp.le.s32.totalorder 1, %s11
    %p156 = scmp.lt.s32.totalorder %s11, 3
    %p157 = pnand %p155, %p156
    %p158 = pneg %p157
    // Predicated region
    $region9: #{tpu_custom_call.1} parent=5 // pred_check
      _
    $region10: #{tpu_custom_call.1} parent=5 // pred_check_branch
      %160 = sbr.rel (%p157) target = $region12
    $region11: #{tpu_custom_call.1} parent=5 // pred_region
      %s161 = ssub.s32 %s11, 1
      // Predicated region
      $region13: #{tpu_custom_call.1} parent=11 // pred_check
        %p162 = pneg %p58
      $region14: #{tpu_custom_call.1} parent=11 // pred_check_branch
        %164 = sbr.rel (%p162) target = $region16
      $region15: #{tpu_custom_call.1} parent=11 // pred_region
        _
      $region16: #{tpu_custom_call.1} parent=11 // pred_fallthru
        _
      // Predicated region
      $region17: #{tpu_custom_call.1} parent=11 // pred_check
        %p165 = pneg %p79
      $region18: #{tpu_custom_call.1} parent=11 // pred_check_branch
        %167 = sbr.rel (%p165) target = $region20
      $region19: #{tpu_custom_call.1} parent=11 // pred_region
        _
      $region20: #{tpu_custom_call.1} parent=11 // pred_fallthru
        _
      // Predicated region
      $region21: #{tpu_custom_call.1} parent=11 // pred_check
        %p168 = pneg %p100
      $region22: #{tpu_custom_call.1} parent=11 // pred_check_branch
        %170 = sbr.rel (%p168) target = $region24
      $region23: #{tpu_custom_call.1} parent=11 // pred_region
        _
      $region24: #{tpu_custom_call.1} parent=11 // pred_fallthru
        _
      // Predicated region
      $region25: #{tpu_custom_call.1} parent=11 // pred_check
        %p171 = pneg %p121
      $region26: #{tpu_custom_call.1} parent=11 // pred_check_branch
        %173 = sbr.rel (%p171) target = $region28
      $region27: #{tpu_custom_call.1} parent=11 // pred_region
        _
      $region28: #{tpu_custom_call.1} parent=11 // pred_fallthru
        _
    $region12: #{tpu_custom_call.1} parent=5 // pred_fallthru
      _
    %p174 = scmp.lt.s32.totalorder %s11, 2
    // Predicated region
    $region29: #{tpu_custom_call.1} parent=5 // pred_check
      %p175 = pneg %p174
    $region30: #{tpu_custom_call.1} parent=5 // pred_check_branch
      %177 = sbr.rel (%p175) target = $region32
    $region31: #{tpu_custom_call.1} parent=5 // pred_region
      // Predicated region
      $region33: #{tpu_custom_call.1} parent=31 // pred_check
        %p178 = pneg %p31
      $region34: #{tpu_custom_call.1} parent=31 // pred_check_branch
        %180 = sbr.rel (%p178) target = $region36
      $region35: #{tpu_custom_call.1} parent=31 // pred_region
        %p181 = scmp.lt.s32.totalorder %s11, 1
        %s182 = scalar_select %p181, %s11, 1
        %s183 = smul.addr %s182, 32
        %s184 = smul.addr %s183, 4
        %s185 = scalar_lea.vmem %s0, %s184
      $region36: #{tpu_custom_call.1} parent=31 // pred_fallthru
        _
    $region32: #{tpu_custom_call.1} parent=5 // pred_fallthru
      _
    %p186 = scmp.le.s32.totalorder 1, %s11
    %p187 = scmp.lt.s32.totalorder %s11, 3
    %p188 = pnand %p186, %p187
    %p189 = pneg %p188
    // Predicated region
    $region37: #{tpu_custom_call.1} parent=5 // pred_check
      _
    $region38: #{tpu_custom_call.1} parent=5 // pred_check_branch
      %191 = sbr.rel (%p188) target = $region40
    $region39: #{tpu_custom_call.1} parent=5 // pred_region
      %s192 = ssub.s32 %s11, 1
      %p193 = scmp.lt.s32.totalorder %s16, 1
      %s194 = scalar_select %p193, %s16, 1
      %s195 = smul.addr %s194, 32
      %s196 = smul.addr %s195, 4
      %s197 = scalar_lea.vmem %s0, %s196
      %p198 = pneg %p37
      %p199 = pneg %p34
      %p200 = pneg %p58
      %p201 = pneg %p55
      %p202 = pneg %p79
      %p203 = pneg %p76
      %p204 = pneg %p100
      %p205 = pneg %p97
      %p206 = pneg %p121
      %p207 = pneg %p118
      %p208 = pneg %p147
      %p209 = pneg %p144
      %p210 = scmp.lt.s32.totalorder %s16, 1
      %s211 = scalar_select %p210, %s16, 1
      %s212 = smul.addr %s211, 32
      %s213 = smul.addr %s212, 4
      %s214 = scalar_lea.vmem %s5, %s213
      %p215 = scmp.lt.s32.totalorder %s16, 1
      %s216 = scalar_select %p215, %s16, 1
      %s217 = smul.addr %s216, 32
      %s218 = smul.addr %s217, 4
      %s219 = scalar_lea.vmem %s0, %s218
      %p220 = scmp.lt.s32.totalorder %s16, 1
      %s221 = scalar_select %p220, %s16, 1
      %s222 = smul.addr %s221, 32
      %s223 = smul.addr %s222, 4
      %s224 = scalar_lea.vmem %s5, %s223
      %v226 = vld [vmem:[%s219] sm:$0xf]
      %v227 = vld [vmem:[%s219 + $0x4] sm:$0xf]
      %v228 = vld [vmem:[%s219 + $0x8] sm:$0xf]
      %v229 = vld [vmem:[%s219 + $0xc] sm:$0xf]
      %v230 = vld [vmem:[%s219 + $0x10] sm:$0xf]
      %v231 = vld [vmem:[%s219 + $0x14] sm:$0xf]
      %v232 = vld [vmem:[%s219 + $0x18] sm:$0xf]
      %v233 = vld [vmem:[%s219 + $0x1c] sm:$0xf]
      %v234 = vld [vmem:[%s219 + $0x20] sm:$0xf]
      %v235 = vld [vmem:[%s219 + $0x24] sm:$0xf]
      %v236 = vld [vmem:[%s219 + $0x28] sm:$0xf]
      %v237 = vld [vmem:[%s219 + $0x2c] sm:$0xf]
      %v238 = vld [vmem:[%s219 + $0x30] sm:$0xf]
      %v239 = vld [vmem:[%s219 + $0x34] sm:$0xf]
      %v240 = vld [vmem:[%s219 + $0x38] sm:$0xf]
      %v241 = vld [vmem:[%s219 + $0x3c] sm:$0xf]
      %v242 = vld [vmem:[%s219 + $0x40] sm:$0xf]
      %v243 = vld [vmem:[%s219 + $0x44] sm:$0xf]
      %v244 = vld [vmem:[%s219 + $0x48] sm:$0xf]
      %v245 = vld [vmem:[%s219 + $0x4c] sm:$0xf]
      %v246 = vld [vmem:[%s219 + $0x50] sm:$0xf]
      %v247 = vld [vmem:[%s219 + $0x54] sm:$0xf]
      %v248 = vld [vmem:[%s219 + $0x58] sm:$0xf]
      %v249 = vld [vmem:[%s219 + $0x5c] sm:$0xf]
      %v250 = vld [vmem:[%s219 + $0x60] sm:$0xf]
      %v251 = vld [vmem:[%s219 + $0x64] sm:$0xf]
      %v252 = vld [vmem:[%s219 + $0x68] sm:$0xf]
      %v253 = vld [vmem:[%s219 + $0x6c] sm:$0xf]
      %v254 = vld [vmem:[%s219 + $0x70] sm:$0xf]
      %v255 = vld [vmem:[%s219 + $0x74] sm:$0xf]
      %v256 = vld [vmem:[%s219 + $0x78] sm:$0xf]
      %v257 = vld [vmem:[%s219 + $0x7c] sm:$0xf]
      %v258 = vlaneseq
      %v259 = vshrl.u32 %v258, 7
      %v260 = vadd.s32 %v259, 8
      %v261 = vadd.s32 %v259, 16
      %v262 = vadd.s32 %v259, 24
      %v263 = vadd.s32 %v259, 32
      %v264 = vadd.s32 %v259, 40
      %v265 = vadd.s32 %v259, 48
      %v266 = vadd.s32 %v259, 56
      %v267 = vadd.s32 %v259, 64
      %v268 = vadd.s32 %v259, 72
      %v269 = vadd.s32 %v259, 80
      %v270 = vadd.s32 %v259, 88
      %v271 = vadd.s32 %v259, 96
      %v272 = vadd.s32 %v259, 104
      %v273 = vadd.s32 %v259, 112
      %v274 = vadd.s32 %v259, 120
      %v275 = vadd.s32 %v259, 128
      %v276 = vadd.s32 %v259, 136
      %v277 = vadd.s32 %v259, 144
      %v278 = vadd.s32 %v259, 152
      %v279 = vadd.s32 %v259, 160
      %v280 = vadd.s32 %v259, 168
      %v281 = vadd.s32 %v259, 176
      %v282 = vadd.s32 %v259, 184
      %v283 = vadd.s32 %v259, 192
      %v284 = vadd.s32 %v259, 200
      %v285 = vadd.s32 %v259, 208
      %v286 = vadd.s32 %v259, 216
      %v287 = vadd.s32 %v259, 224
      %v288 = vadd.s32 %v259, 232
      %v289 = vadd.s32 %v259, 240
      %v290 = vadd.s32 %v259, 248
      %vm291 = vcmp.lt.s32.totalorder %v259, 0
      %v292 = vsub.s32 0, %v259
      %v293 = vsel %vm291, %v292, %v259
      %v294 = vshrl.u32 %v293, 4
      %v295 = vand.u32 %v293, 15
      %v296 = vsub.s32 0, %v295
      %v297 = vsel %vm291, %v296, %v295
      %vm298 = vcmp.lt.s32.totalorder %v260, 0
      %v299 = vsub.s32 0, %v260
      %v300 = vsel %vm298, %v299, %v260
      %v301 = vshrl.u32 %v300, 4
      %v302 = vand.u32 %v300, 15
      %v303 = vsub.s32 0, %v302
      %v304 = vsel %vm298, %v303, %v302
      %vm305 = vcmp.lt.s32.totalorder %v261, 0
      %v306 = vsub.s32 0, %v261
      %v307 = vsel %vm305, %v306, %v261
      %v308 = vshrl.u32 %v307, 4
      %v309 = vand.u32 %v307, 15
      %v310 = vsub.s32 0, %v309
      %v311 = vsel %vm305, %v310, %v309
      %vm312 = vcmp.lt.s32.totalorder %v262, 0
      %v313 = vsub.s32 0, %v262
      %v314 = vsel %vm312, %v313, %v262
      %v315 = vshrl.u32 %v314, 4
      %v316 = vand.u32 %v314, 15
      %v317 = vsub.s32 0, %v316
      %v318 = vsel %vm312, %v317, %v316
      %vm319 = vcmp.lt.s32.totalorder %v263, 0
      %v320 = vsub.s32 0, %v263
      %v321 = vsel %vm319, %v320, %v263
      %v322 = vshrl.u32 %v321, 4
      %v323 = vand.u32 %v321, 15
      %v324 = vsub.s32 0, %v323
      %v325 = vsel %vm319, %v324, %v323
      %vm326 = vcmp.lt.s32.totalorder %v264, 0
      %v327 = vsub.s32 0, %v264
      %v328 = vsel %vm326, %v327, %v264
      %v329 = vshrl.u32 %v328, 4
      %v330 = vand.u32 %v328, 15
      %v331 = vsub.s32 0, %v330
      %v332 = vsel %vm326, %v331, %v330
      %vm333 = vcmp.lt.s32.totalorder %v265, 0
      %v334 = vsub.s32 0, %v265
      %v335 = vsel %vm333, %v334, %v265
      %v336 = vshrl.u32 %v335, 4
      %v337 = vand.u32 %v335, 15
      %v338 = vsub.s32 0, %v337
      %v339 = vsel %vm333, %v338, %v337
      %vm340 = vcmp.lt.s32.totalorder %v266, 0
      %v341 = vsub.s32 0, %v266
      %v342 = vsel %vm340, %v341, %v266
      %v343 = vshrl.u32 %v342, 4
      %v344 = vand.u32 %v342, 15
      %v345 = vsub.s32 0, %v344
      %v346 = vsel %vm340, %v345, %v344
      %vm347 = vcmp.lt.s32.totalorder %v267, 0
      %v348 = vsub.s32 0, %v267
      %v349 = vsel %vm347, %v348, %v267
      %v350 = vshrl.u32 %v349, 4
      %v351 = vand.u32 %v349, 15
      %v352 = vsub.s32 0, %v351
      %v353 = vsel %vm347, %v352, %v351
      %vm354 = vcmp.lt.s32.totalorder %v268, 0
      %v355 = vsub.s32 0, %v268
      %v356 = vsel %vm354, %v355, %v268
      %v357 = vshrl.u32 %v356, 4
      %v358 = vand.u32 %v356, 15
      %v359 = vsub.s32 0, %v358
      %v360 = vsel %vm354, %v359, %v358
      %vm361 = vcmp.lt.s32.totalorder %v269, 0
      %v362 = vsub.s32 0, %v269
      %v363 = vsel %vm361, %v362, %v269
      %v364 = vshrl.u32 %v363, 4
      %v365 = vand.u32 %v363, 15
      %v366 = vsub.s32 0, %v365
      %v367 = vsel %vm361, %v366, %v365
      %vm368 = vcmp.lt.s32.totalorder %v270, 0
      %v369 = vsub.s32 0, %v270
      %v370 = vsel %vm368, %v369, %v270
      %v371 = vshrl.u32 %v370, 4
      %v372 = vand.u32 %v370, 15
      %v373 = vsub.s32 0, %v372
      %v374 = vsel %vm368, %v373, %v372
      %vm375 = vcmp.lt.s32.totalorder %v271, 0
      %v376 = vsub.s32 0, %v271
      %v377 = vsel %vm375, %v376, %v271
      %v378 = vshrl.u32 %v377, 4
      %v379 = vand.u32 %v377, 15
      %v380 = vsub.s32 0, %v379
      %v381 = vsel %vm375, %v380, %v379
      %vm382 = vcmp.lt.s32.totalorder %v272, 0
      %v383 = vsub.s32 0, %v272
      %v384 = vsel %vm382, %v383, %v272
      %v385 = vshrl.u32 %v384, 4
      %v386 = vand.u32 %v384, 15
      %v387 = vsub.s32 0, %v386
      %v388 = vsel %vm382, %v387, %v386
      %vm389 = vcmp.lt.s32.totalorder %v273, 0
      %v390 = vsub.s32 0, %v273
      %v391 = vsel %vm389, %v390, %v273
      %v392 = vshrl.u32 %v391, 4
      %v393 = vand.u32 %v391, 15
      %v394 = vsub.s32 0, %v393
      %v395 = vsel %vm389, %v394, %v393
      %vm396 = vcmp.lt.s32.totalorder %v274, 0
      %v397 = vsub.s32 0, %v274
      %v398 = vsel %vm396, %v397, %v274
      %v399 = vshrl.u32 %v398, 4
      %v400 = vand.u32 %v398, 15
      %v401 = vsub.s32 0, %v400
      %v402 = vsel %vm396, %v401, %v400
      %vm403 = vcmp.lt.s32.totalorder %v275, 0
      %v404 = vsub.s32 0, %v275
      %v405 = vsel %vm403, %v404, %v275
      %v406 = vshrl.u32 %v405, 4
      %v407 = vand.u32 %v405, 15
      %v408 = vsub.s32 0, %v407
      %v409 = vsel %vm403, %v408, %v407
      %vm410 = vcmp.lt.s32.totalorder %v276, 0
      %v411 = vsub.s32 0, %v276
      %v412 = vsel %vm410, %v411, %v276
      %v413 = vshrl.u32 %v412, 4
      %v414 = vand.u32 %v412, 15
      %v415 = vsub.s32 0, %v414
      %v416 = vsel %vm410, %v415, %v414
      %vm417 = vcmp.lt.s32.totalorder %v277, 0
      %v418 = vsub.s32 0, %v277
      %v419 = vsel %vm417, %v418, %v277
      %v420 = vshrl.u32 %v419, 4
      %v421 = vand.u32 %v419, 15
      %v422 = vsub.s32 0, %v421
      %v423 = vsel %vm417, %v422, %v421
      %vm424 = vcmp.lt.s32.totalorder %v278, 0
      %v425 = vsub.s32 0, %v278
      %v426 = vsel %vm424, %v425, %v278
      %v427 = vshrl.u32 %v426, 4
      %v428 = vand.u32 %v426, 15
      %v429 = vsub.s32 0, %v428
      %v430 = vsel %vm424, %v429, %v428
      %vm431 = vcmp.lt.s32.totalorder %v279, 0
      %v432 = vsub.s32 0, %v279
      %v433 = vsel %vm431, %v432, %v279
      %v434 = vshrl.u32 %v433, 4
      %v435 = vand.u32 %v433, 15
      %v436 = vsub.s32 0, %v435
      %v437 = vsel %vm431, %v436, %v435
      %vm438 = vcmp.lt.s32.totalorder %v280, 0
      %v439 = vsub.s32 0, %v280
      %v440 = vsel %vm438, %v439, %v280
      %v441 = vshrl.u32 %v440, 4
      %v442 = vand.u32 %v440, 15
      %v443 = vsub.s32 0, %v442
      %v444 = vsel %vm438, %v443, %v442
      %vm445 = vcmp.lt.s32.totalorder %v281, 0
      %v446 = vsub.s32 0, %v281
      %v447 = vsel %vm445, %v446, %v281
      %v448 = vshrl.u32 %v447, 4
      %v449 = vand.u32 %v447, 15
      %v450 = vsub.s32 0, %v449
      %v451 = vsel %vm445, %v450, %v449
      %vm452 = vcmp.lt.s32.totalorder %v282, 0
      %v453 = vsub.s32 0, %v282
      %v454 = vsel %vm452, %v453, %v282
      %v455 = vshrl.u32 %v454, 4
      %v456 = vand.u32 %v454, 15
      %v457 = vsub.s32 0, %v456
      %v458 = vsel %vm452, %v457, %v456
      %vm459 = vcmp.lt.s32.totalorder %v283, 0
      %v460 = vsub.s32 0, %v283
      %v461 = vsel %vm459, %v460, %v283
      %v462 = vshrl.u32 %v461, 4
      %v463 = vand.u32 %v461, 15
      %v464 = vsub.s32 0, %v463
      %v465 = vsel %vm459, %v464, %v463
      %vm466 = vcmp.lt.s32.totalorder %v284, 0
      %v467 = vsub.s32 0, %v284
      %v468 = vsel %vm466, %v467, %v284
      %v469 = vshrl.u32 %v468, 4
      %v470 = vand.u32 %v468, 15
      %v471 = vsub.s32 0, %v470
      %v472 = vsel %vm466, %v471, %v470
      %vm473 = vcmp.lt.s32.totalorder %v285, 0
      %v474 = vsub.s32 0, %v285
      %v475 = vsel %vm473, %v474, %v285
      %v476 = vshrl.u32 %v475, 4
      %v477 = vand.u32 %v475, 15
      %v478 = vsub.s32 0, %v477
      %v479 = vsel %vm473, %v478, %v477
      %vm480 = vcmp.lt.s32.totalorder %v286, 0
      %v481 = vsub.s32 0, %v286
      %v482 = vsel %vm480, %v481, %v286
      %v483 = vshrl.u32 %v482, 4
      %v484 = vand.u32 %v482, 15
      %v485 = vsub.s32 0, %v484
      %v486 = vsel %vm480, %v485, %v484
      %vm487 = vcmp.lt.s32.totalorder %v287, 0
      %v488 = vsub.s32 0, %v287
      %v489 = vsel %vm487, %v488, %v287
      %v490 = vshrl.u32 %v489, 4
      %v491 = vand.u32 %v489, 15
      %v492 = vsub.s32 0, %v491
      %v493 = vsel %vm487, %v492, %v491
      %vm494 = vcmp.lt.s32.totalorder %v288, 0
      %v495 = vsub.s32 0, %v288
      %v496 = vsel %vm494, %v495, %v288
      %v497 = vshrl.u32 %v496, 4
      %v498 = vand.u32 %v496, 15
      %v499 = vsub.s32 0, %v498
      %v500 = vsel %vm494, %v499, %v498
      %vm501 = vcmp.lt.s32.totalorder %v289, 0
      %v502 = vsub.s32 0, %v289
      %v503 = vsel %vm501, %v502, %v289
      %v504 = vshrl.u32 %v503, 4
      %v505 = vand.u32 %v503, 15
      %v506 = vsub.s32 0, %v505
      %v507 = vsel %vm501, %v506, %v505
      %vm508 = vcmp.lt.s32.totalorder %v290, 0
      %v509 = vsub.s32 0, %v290
      %v510 = vsel %vm508, %v509, %v290
      %v511 = vshrl.u32 %v510, 4
      %v512 = vand.u32 %v510, 15
      %v513 = vsub.s32 0, %v512
      %v514 = vsel %vm508, %v513, %v512
      %vm515 = vcmp.ne.s32.totalorder %v297, 0
      %vm516 = vcmp.ne.s32.totalorder %v304, 0
      %vm517 = vcmp.ne.s32.totalorder %v311, 0
      %vm518 = vcmp.ne.s32.totalorder %v318, 0
      %vm519 = vcmp.ne.s32.totalorder %v325, 0
      %vm520 = vcmp.ne.s32.totalorder %v332, 0
      %vm521 = vcmp.ne.s32.totalorder %v339, 0
      %vm522 = vcmp.ne.s32.totalorder %v346, 0
      %vm523 = vcmp.ne.s32.totalorder %v353, 0
      %vm524 = vcmp.ne.s32.totalorder %v360, 0
      %vm525 = vcmp.ne.s32.totalorder %v367, 0
      %vm526 = vcmp.ne.s32.totalorder %v374, 0
      %vm527 = vcmp.ne.s32.totalorder %v381, 0
      %vm528 = vcmp.ne.s32.totalorder %v388, 0
      %vm529 = vcmp.ne.s32.totalorder %v395, 0
      %vm530 = vcmp.ne.s32.totalorder %v402, 0
      %vm531 = vcmp.ne.s32.totalorder %v409, 0
      %vm532 = vcmp.ne.s32.totalorder %v416, 0
      %vm533 = vcmp.ne.s32.totalorder %v423, 0
      %vm534 = vcmp.ne.s32.totalorder %v430, 0
      %vm535 = vcmp.ne.s32.totalorder %v437, 0
      %vm536 = vcmp.ne.s32.totalorder %v444, 0
      %vm537 = vcmp.ne.s32.totalorder %v451, 0
      %vm538 = vcmp.ne.s32.totalorder %v458, 0
      %vm539 = vcmp.ne.s32.totalorder %v465, 0
      %vm540 = vcmp.ne.s32.totalorder %v472, 0
      %vm541 = vcmp.ne.s32.totalorder %v479, 0
      %vm542 = vcmp.ne.s32.totalorder %v486, 0
      %vm543 = vcmp.ne.s32.totalorder %v493, 0
      %vm544 = vcmp.ne.s32.totalorder %v500, 0
      %vm545 = vcmp.ne.s32.totalorder %v507, 0
      %vm546 = vcmp.ne.s32.totalorder %v514, 0
      %vm547 = vcmp.lt.s32.totalorder %v297, 0
      %vm548 = vcmp.lt.s32.totalorder %v304, 0
      %vm549 = vcmp.lt.s32.totalorder %v311, 0
      %vm550 = vcmp.lt.s32.totalorder %v318, 0
      %vm551 = vcmp.lt.s32.totalorder %v325, 0
      %vm552 = vcmp.lt.s32.totalorder %v332, 0
      %vm553 = vcmp.lt.s32.totalorder %v339, 0
      %vm554 = vcmp.lt.s32.totalorder %v346, 0
      %vm555 = vcmp.lt.s32.totalorder %v353, 0
      %vm556 = vcmp.lt.s32.totalorder %v360, 0
      %vm557 = vcmp.lt.s32.totalorder %v367, 0
      %vm558 = vcmp.lt.s32.totalorder %v374, 0
      %vm559 = vcmp.lt.s32.totalorder %v381, 0
      %vm560 = vcmp.lt.s32.totalorder %v388, 0
      %vm561 = vcmp.lt.s32.totalorder %v395, 0
      %vm562 = vcmp.lt.s32.totalorder %v402, 0
      %vm563 = vcmp.lt.s32.totalorder %v409, 0
      %vm564 = vcmp.lt.s32.totalorder %v416, 0
      %vm565 = vcmp.lt.s32.totalorder %v423, 0
      %vm566 = vcmp.lt.s32.totalorder %v430, 0
      %vm567 = vcmp.lt.s32.totalorder %v437, 0
      %vm568 = vcmp.lt.s32.totalorder %v444, 0
      %vm569 = vcmp.lt.s32.totalorder %v451, 0
      %vm570 = vcmp.lt.s32.totalorder %v458, 0
      %vm571 = vcmp.lt.s32.totalorder %v465, 0
      %vm572 = vcmp.lt.s32.totalorder %v472, 0
      %vm573 = vcmp.lt.s32.totalorder %v479, 0
      %vm574 = vcmp.lt.s32.totalorder %v486, 0
      %vm575 = vcmp.lt.s32.totalorder %v493, 0
      %vm576 = vcmp.lt.s32.totalorder %v500, 0
      %vm577 = vcmp.lt.s32.totalorder %v507, 0
      %vm578 = vcmp.lt.s32.totalorder %v514, 0
      %vm579 = vmand %vm547, %vm515
      %vm580 = vmand %vm548, %vm516
      %vm581 = vmand %vm549, %vm517
      %vm582 = vmand %vm550, %vm518
      %vm583 = vmand %vm551, %vm519
      %vm584 = vmand %vm552, %vm520
      %vm585 = vmand %vm553, %vm521
      %vm586 = vmand %vm554, %vm522
      %vm587 = vmand %vm555, %vm523
      %vm588 = vmand %vm556, %vm524
      %vm589 = vmand %vm557, %vm525
      %vm590 = vmand %vm558, %vm526
      %vm591 = vmand %vm559, %vm527
      %vm592 = vmand %vm560, %vm528
      %vm593 = vmand %vm561, %vm529
      %vm594 = vmand %vm562, %vm530
      %vm595 = vmand %vm563, %vm531
      %vm596 = vmand %vm564, %vm532
      %vm597 = vmand %vm565, %vm533
      %vm598 = vmand %vm566, %vm534
      %vm599 = vmand %vm567, %vm535
      %vm600 = vmand %vm568, %vm536
      %vm601 = vmand %vm569, %vm537
      %vm602 = vmand %vm570, %vm538
      %vm603 = vmand %vm571, %vm539
      %vm604 = vmand %vm572, %vm540
      %vm605 = vmand %vm573, %vm541
      %vm606 = vmand %vm574, %vm542
      %vm607 = vmand %vm575, %vm543
      %vm608 = vmand %vm576, %vm544
      %vm609 = vmand %vm577, %vm545
      %vm610 = vmand %vm578, %vm546
      %v611 = vadd.s32 %v297, 16
      %v612 = vadd.s32 %v304, 16
      %v613 = vadd.s32 %v311, 16
      %v614 = vadd.s32 %v318, 16
      %v615 = vadd.s32 %v325, 16
      %v616 = vadd.s32 %v332, 16
      %v617 = vadd.s32 %v339, 16
      %v618 = vadd.s32 %v346, 16
      %v619 = vadd.s32 %v353, 16
      %v620 = vadd.s32 %v360, 16
      %v621 = vadd.s32 %v367, 16
      %v622 = vadd.s32 %v374, 16
      %v623 = vadd.s32 %v381, 16
      %v624 = vadd.s32 %v388, 16
      %v625 = vadd.s32 %v395, 16
      %v626 = vadd.s32 %v402, 16
      %v627 = vadd.s32 %v409, 16
      %v628 = vadd.s32 %v416, 16
      %v629 = vadd.s32 %v423, 16
      %v630 = vadd.s32 %v430, 16
      %v631 = vadd.s32 %v437, 16
      %v632 = vadd.s32 %v444, 16
      %v633 = vadd.s32 %v451, 16
      %v634 = vadd.s32 %v458, 16
      %v635 = vadd.s32 %v465, 16
      %v636 = vadd.s32 %v472, 16
      %v637 = vadd.s32 %v479, 16
      %v638 = vadd.s32 %v486, 16
      %v639 = vadd.s32 %v493, 16
      %v640 = vadd.s32 %v500, 16
      %v641 = vadd.s32 %v507, 16
      %v642 = vadd.s32 %v514, 16
      %v643 = vsel %vm579, %v611, %v297
      %v644 = vsel %vm580, %v612, %v304
      %v645 = vsel %vm581, %v613, %v311
      %v646 = vsel %vm582, %v614, %v318
      %v647 = vsel %vm583, %v615, %v325
      %v648 = vsel %vm584, %v616, %v332
      %v649 = vsel %vm585, %v617, %v339
      %v650 = vsel %vm586, %v618, %v346
      %v651 = vsel %vm587, %v619, %v353
      %v652 = vsel %vm588, %v620, %v360
      %v653 = vsel %vm589, %v621, %v367
      %v654 = vsel %vm590, %v622, %v374
      %v655 = vsel %vm591, %v623, %v381
      %v656 = vsel %vm592, %v624, %v388
      %v657 = vsel %vm593, %v625, %v395
      %v658 = vsel %vm594, %v626, %v402
      %v659 = vsel %vm595, %v627, %v409
      %v660 = vsel %vm596, %v628, %v416
      %v661 = vsel %vm597, %v629, %v423
      %v662 = vsel %vm598, %v630, %v430
      %v663 = vsel %vm599, %v631, %v437
      %v664 = vsel %vm600, %v632, %v444
      %v665 = vsel %vm601, %v633, %v451
      %v666 = vsel %vm602, %v634, %v458
      %v667 = vsel %vm603, %v635, %v465
      %v668 = vsel %vm604, %v636, %v472
      %v669 = vsel %vm605, %v637, %v479
      %v670 = vsel %vm606, %v638, %v486
      %v671 = vsel %vm607, %v639, %v493
      %v672 = vsel %vm608, %v640, %v500
      %v673 = vsel %vm609, %v641, %v507
      %v674 = vsel %vm610, %v642, %v514
      %vm675 = vcmp.gt.s32.totalorder %v643, 0
      %vm676 = vcmp.gt.s32.totalorder %v644, 0
      %vm677 = vcmp.gt.s32.totalorder %v645, 0
      %vm678 = vcmp.gt.s32.totalorder %v646, 0
      %vm679 = vcmp.gt.s32.totalorder %v647, 0
      %vm680 = vcmp.gt.s32.totalorder %v648, 0
      %vm681 = vcmp.gt.s32.totalorder %v649, 0
      %vm682 = vcmp.gt.s32.totalorder %v650, 0
      %vm683 = vcmp.gt.s32.totalorder %v651, 0
      %vm684 = vcmp.gt.s32.totalorder %v652, 0
      %vm685 = vcmp.gt.s32.totalorder %v653, 0
      %vm686 = vcmp.gt.s32.totalorder %v654, 0
      %vm687 = vcmp.gt.s32.totalorder %v655, 0
      %vm688 = vcmp.gt.s32.totalorder %v656, 0
      %vm689 = vcmp.gt.s32.totalorder %v657, 0
      %vm690 = vcmp.gt.s32.totalorder %v658, 0
      %vm691 = vcmp.gt.s32.totalorder %v659, 0
      %vm692 = vcmp.gt.s32.totalorder %v660, 0
      %vm693 = vcmp.gt.s32.totalorder %v661, 0
      %vm694 = vcmp.gt.s32.totalorder %v662, 0
      %vm695 = vcmp.gt.s32.totalorder %v663, 0
      %vm696 = vcmp.gt.s32.totalorder %v664, 0
      %vm697 = vcmp.gt.s32.totalorder %v665, 0
      %vm698 = vcmp.gt.s32.totalorder %v666, 0
      %vm699 = vcmp.gt.s32.totalorder %v667, 0
      %vm700 = vcmp.gt.s32.totalorder %v668, 0
      %vm701 = vcmp.gt.s32.totalorder %v669, 0
      %vm702 = vcmp.gt.s32.totalorder %v670, 0
      %vm703 = vcmp.gt.s32.totalorder %v671, 0
      %vm704 = vcmp.gt.s32.totalorder %v672, 0
      %vm705 = vcmp.gt.s32.totalorder %v673, 0
      %vm706 = vcmp.gt.s32.totalorder %v674, 0
      %vm707 = vcmp.lt.s32.totalorder %v643, 15
      %vm708 = vcmp.lt.s32.totalorder %v644, 15
      %vm709 = vcmp.lt.s32.totalorder %v645, 15
      %vm710 = vcmp.lt.s32.totalorder %v646, 15
      %vm711 = vcmp.lt.s32.totalorder %v647, 15
      %vm712 = vcmp.lt.s32.totalorder %v648, 15
      %vm713 = vcmp.lt.s32.totalorder %v649, 15
      %vm714 = vcmp.lt.s32.totalorder %v650, 15
      %vm715 = vcmp.lt.s32.totalorder %v651, 15
      %vm716 = vcmp.lt.s32.totalorder %v652, 15
      %vm717 = vcmp.lt.s32.totalorder %v653, 15
      %vm718 = vcmp.lt.s32.totalorder %v654, 15
      %vm719 = vcmp.lt.s32.totalorder %v655, 15
      %vm720 = vcmp.lt.s32.totalorder %v656, 15
      %vm721 = vcmp.lt.s32.totalorder %v657, 15
      %vm722 = vcmp.lt.s32.totalorder %v658, 15
      %vm723 = vcmp.lt.s32.totalorder %v659, 15
      %vm724 = vcmp.lt.s32.totalorder %v660, 15
      %vm725 = vcmp.lt.s32.totalorder %v661, 15
      %vm726 = vcmp.lt.s32.totalorder %v662, 15
      %vm727 = vcmp.lt.s32.totalorder %v663, 15
      %vm728 = vcmp.lt.s32.totalorder %v664, 15
      %vm729 = vcmp.lt.s32.totalorder %v665, 15
      %vm730 = vcmp.lt.s32.totalorder %v666, 15
      %vm731 = vcmp.lt.s32.totalorder %v667, 15
      %vm732 = vcmp.lt.s32.totalorder %v668, 15
      %vm733 = vcmp.lt.s32.totalorder %v669, 15
      %vm734 = vcmp.lt.s32.totalorder %v670, 15
      %vm735 = vcmp.lt.s32.totalorder %v671, 15
      %vm736 = vcmp.lt.s32.totalorder %v672, 15
      %vm737 = vcmp.lt.s32.totalorder %v673, 15
      %vm738 = vcmp.lt.s32.totalorder %v674, 15
      %v771 = vunpack.c.l.b16 %v226
      %v772 = vunpack.c.l.b16 %v227
      %v773 = vunpack.c.l.b16 %v228
      %v774 = vunpack.c.l.b16 %v229
      %v775 = vunpack.c.l.b16 %v230
      %v776 = vunpack.c.l.b16 %v231
      %v777 = vunpack.c.l.b16 %v232
      %v778 = vunpack.c.l.b16 %v233
      %v779 = vunpack.c.l.b16 %v234
      %v780 = vunpack.c.l.b16 %v235
      %v781 = vunpack.c.l.b16 %v236
      %v782 = vunpack.c.l.b16 %v237
      %v783 = vunpack.c.l.b16 %v238
      %v784 = vunpack.c.l.b16 %v239
      %v785 = vunpack.c.l.b16 %v240
      %v786 = vunpack.c.l.b16 %v241
      %v787 = vunpack.c.l.b16 %v242
      %v788 = vunpack.c.l.b16 %v243
      %v789 = vunpack.c.l.b16 %v244
      %v790 = vunpack.c.l.b16 %v245
      %v791 = vunpack.c.l.b16 %v246
      %v792 = vunpack.c.l.b16 %v247
      %v793 = vunpack.c.l.b16 %v248
      %v794 = vunpack.c.l.b16 %v249
      %v795 = vunpack.c.l.b16 %v250
      %v796 = vunpack.c.l.b16 %v251
      %v797 = vunpack.c.l.b16 %v252
      %v798 = vunpack.c.l.b16 %v253
      %v799 = vunpack.c.l.b16 %v254
      %v800 = vunpack.c.l.b16 %v255
      %v801 = vunpack.c.l.b16 %v256
      %v802 = vunpack.c.l.b16 %v257
      %v803 = vpack.c.b16 %v772, %v771
      %v804 = vpack.c.b16 %v774, %v773
      %v805 = vpack.c.b16 %v776, %v775
      %v806 = vpack.c.b16 %v778, %v777
      %v807 = vpack.c.b16 %v780, %v779
      %v808 = vpack.c.b16 %v782, %v781
      %v809 = vpack.c.b16 %v784, %v783
      %v810 = vpack.c.b16 %v786, %v785
      %v811 = vpack.c.b16 %v788, %v787
      %v812 = vpack.c.b16 %v790, %v789
      %v813 = vpack.c.b16 %v792, %v791
      %v814 = vpack.c.b16 %v794, %v793
      %v815 = vpack.c.b16 %v796, %v795
      %v816 = vpack.c.b16 %v798, %v797
      %v817 = vpack.c.b16 %v800, %v799
      %v818 = vpack.c.b16 %v802, %v801
      %819 = vrot.lane.b32.xlu0 %v803, 4
      %v820 = vpop.permute.xlu0 %819
      %821 = vrot.lane.b32.xlu0 %v804, 4
      %v822 = vpop.permute.xlu0 %821
      %823 = vrot.lane.b32.xlu0 %v805, 4
      %v824 = vpop.permute.xlu0 %823
      %825 = vrot.lane.b32.xlu0 %v806, 4
      %v826 = vpop.permute.xlu0 %825
      %827 = vrot.lane.b32.xlu0 %v807, 4
      %v828 = vpop.permute.xlu0 %827
      %829 = vrot.lane.b32.xlu0 %v808, 4
      %v830 = vpop.permute.xlu0 %829
      %831 = vrot.lane.b32.xlu0 %v809, 4
      %v832 = vpop.permute.xlu0 %831
      %833 = vrot.lane.b32.xlu0 %v810, 4
      %v834 = vpop.permute.xlu0 %833
      %835 = vrot.lane.b32.xlu0 %v811, 4
      %v836 = vpop.permute.xlu0 %835
      %837 = vrot.lane.b32.xlu0 %v812, 4
      %v838 = vpop.permute.xlu0 %837
      %839 = vrot.lane.b32.xlu0 %v813, 4
      %v840 = vpop.permute.xlu0 %839
      %841 = vrot.lane.b32.xlu0 %v814, 4
      %v842 = vpop.permute.xlu0 %841
      %843 = vrot.lane.b32.xlu0 %v815, 4
      %v844 = vpop.permute.xlu0 %843
      %845 = vrot.lane.b32.xlu0 %v816, 4
      %v846 = vpop.permute.xlu0 %845
      %847 = vrot.lane.b32.xlu0 %v817, 4
      %v848 = vpop.permute.xlu0 %847
      %849 = vrot.lane.b32.xlu0 %v818, 4
      %v850 = vpop.permute.xlu0 %849
      %vm867 = vcmask 64544
      %868 = vst.msk [vmem:[#allocation2] sm:$0xff] %vm867, %v820
      %869 = vst.msk [vmem:[#allocation2 + $0x8] sm:$0xff] %vm867, %v822
      %870 = vst.msk [vmem:[#allocation2 + $0x10] sm:$0xff] %vm867, %v824
      %871 = vst.msk [vmem:[#allocation2 + $0x18] sm:$0xff] %vm867, %v826
      %872 = vst.msk [vmem:[#allocation2 + $0x20] sm:$0xff] %vm867, %v828
      %873 = vst.msk [vmem:[#allocation2 + $0x28] sm:$0xff] %vm867, %v830
      %874 = vst.msk [vmem:[#allocation2 + $0x30] sm:$0xff] %vm867, %v832
      %875 = vst.msk [vmem:[#allocation2 + $0x38] sm:$0xff] %vm867, %v834
      %876 = vst.msk [vmem:[#allocation2 + $0x40] sm:$0xff] %vm867, %v836
      %877 = vst.msk [vmem:[#allocation2 + $0x48] sm:$0xff] %vm867, %v838
      %878 = vst.msk [vmem:[#allocation2 + $0x50] sm:$0xff] %vm867, %v840
      %879 = vst.msk [vmem:[#allocation2 + $0x58] sm:$0xff] %vm867, %v842
      %880 = vst.msk [vmem:[#allocation2 + $0x60] sm:$0xff] %vm867, %v844
      %881 = vst.msk [vmem:[#allocation2 + $0x68] sm:$0xff] %vm867, %v846
      %882 = vst.msk [vmem:[#allocation2 + $0x70] sm:$0xff] %vm867, %v848
      %883 = vst.msk [vmem:[#allocation2 + $0x78] sm:$0xff] %vm867, %v850
      %vm884 = vcmask 31744
      %885 = vst.msk [vmem:[#allocation2] sm:$0xff] %vm884, 0
      %901 = vst.msk [vmem:[#allocation2 + $0x8] sm:$0xff] %vm884, %v803
      %902 = vst.msk [vmem:[#allocation2 + $0x10] sm:$0xff] %vm884, %v804
      %903 = vst.msk [vmem:[#allocation2 + $0x18] sm:$0xff] %vm884, %v805
      %904 = vst.msk [vmem:[#allocation2 + $0x20] sm:$0xff] %vm884, %v806
      %905 = vst.msk [vmem:[#allocation2 + $0x28] sm:$0xff] %vm884, %v807
      %906 = vst.msk [vmem:[#allocation2 + $0x30] sm:$0xff] %vm884, %v808
      %907 = vst.msk [vmem:[#allocation2 + $0x38] sm:$0xff] %vm884, %v809
      %908 = vst.msk [vmem:[#allocation2 + $0x40] sm:$0xff] %vm884, %v810
      %909 = vst.msk [vmem:[#allocation2 + $0x48] sm:$0xff] %vm884, %v811
      %910 = vst.msk [vmem:[#allocation2 + $0x50] sm:$0xff] %vm884, %v812
      %911 = vst.msk [vmem:[#allocation2 + $0x58] sm:$0xff] %vm884, %v813
      %912 = vst.msk [vmem:[#allocation2 + $0x60] sm:$0xff] %vm884, %v814
      %913 = vst.msk [vmem:[#allocation2 + $0x68] sm:$0xff] %vm884, %v815
      %914 = vst.msk [vmem:[#allocation2 + $0x70] sm:$0xff] %vm884, %v816
      %915 = vst.msk [vmem:[#allocation2 + $0x78] sm:$0xff] %vm884, %v817
      %916 = vrot.lane.b32.xlu0 %v804, 8
      %v917 = vpop.permute.xlu0 %916
      %918 = vrot.lane.b32.xlu0 %v805, 8
      %v919 = vpop.permute.xlu0 %918
      %920 = vrot.lane.b32.xlu0 %v806, 8
      %v921 = vpop.permute.xlu0 %920
      %922 = vrot.lane.b32.xlu0 %v807, 8
      %v923 = vpop.permute.xlu0 %922
      %924 = vrot.lane.b32.xlu0 %v808, 8
      %v925 = vpop.permute.xlu0 %924
      %926 = vrot.lane.b32.xlu0 %v809, 8
      %v927 = vpop.permute.xlu0 %926
      %928 = vrot.lane.b32.xlu0 %v810, 8
      %v929 = vpop.permute.xlu0 %928
      %930 = vrot.lane.b32.xlu0 %v811, 8
      %v931 = vpop.permute.xlu0 %930
      %932 = vrot.lane.b32.xlu0 %v812, 8
      %v933 = vpop.permute.xlu0 %932
      %934 = vrot.lane.b32.xlu0 %v813, 8
      %v935 = vpop.permute.xlu0 %934
      %936 = vrot.lane.b32.xlu0 %v814, 8
      %v937 = vpop.permute.xlu0 %936
      %938 = vrot.lane.b32.xlu0 %v815, 8
      %v939 = vpop.permute.xlu0 %938
      %940 = vrot.lane.b32.xlu0 %v816, 8
      %v941 = vpop.permute.xlu0 %940
      %942 = vrot.lane.b32.xlu0 %v817, 8
      %v943 = vpop.permute.xlu0 %942
      %944 = vrot.lane.b32.xlu0 %v818, 8
      %v945 = vpop.permute.xlu0 %944
      %vm961 = vcmask 97344
      %962 = vst.msk [vmem:[#allocation2] sm:$0xff] %vm961, %v917
      %963 = vst.msk [vmem:[#allocation2 + $0x8] sm:$0xff] %vm961, %v919
      %964 = vst.msk [vmem:[#allocation2 + $0x10] sm:$0xff] %vm961, %v921
      %965 = vst.msk [vmem:[#allocation2 + $0x18] sm:$0xff] %vm961, %v923
      %966 = vst.msk [vmem:[#allocation2 + $0x20] sm:$0xff] %vm961, %v925
      %967 = vst.msk [vmem:[#allocation2 + $0x28] sm:$0xff] %vm961, %v927
      %968 = vst.msk [vmem:[#allocation2 + $0x30] sm:$0xff] %vm961, %v929
      %969 = vst.msk [vmem:[#allocation2 + $0x38] sm:$0xff] %vm961, %v931
      %970 = vst.msk [vmem:[#allocation2 + $0x40] sm:$0xff] %vm961, %v933
      %971 = vst.msk [vmem:[#allocation2 + $0x48] sm:$0xff] %vm961, %v935
      %972 = vst.msk [vmem:[#allocation2 + $0x50] sm:$0xff] %vm961, %v937
      %973 = vst.msk [vmem:[#allocation2 + $0x58] sm:$0xff] %vm961, %v939
      %974 = vst.msk [vmem:[#allocation2 + $0x60] sm:$0xff] %vm961, %v941
      %975 = vst.msk [vmem:[#allocation2 + $0x68] sm:$0xff] %vm961, %v943
      %976 = vst.msk [vmem:[#allocation2 + $0x70] sm:$0xff] %vm961, %v945
      %977 = vst.msk [vmem:[#allocation2 + $0x78] sm:$0xff] %vm961, 0
      %v978 = vld [vmem:[#allocation2] sm:$0xff]
      %v979 = vld [vmem:[#allocation2 + $0x8] sm:$0xff]
      %v980 = vld [vmem:[#allocation2 + $0x10] sm:$0xff]
      %v981 = vld [vmem:[#allocation2 + $0x18] sm:$0xff]
      %v982 = vld [vmem:[#allocation2 + $0x20] sm:$0xff]
      %v983 = vld [vmem:[#allocation2 + $0x28] sm:$0xff]
      %v984 = vld [vmem:[#allocation2 + $0x30] sm:$0xff]
      %v985 = vld [vmem:[#allocation2 + $0x38] sm:$0xff]
      %v986 = vld [vmem:[#allocation2 + $0x40] sm:$0xff]
      %v987 = vld [vmem:[#allocation2 + $0x48] sm:$0xff]
      %v988 = vld [vmem:[#allocation2 + $0x50] sm:$0xff]
      %v989 = vld [vmem:[#allocation2 + $0x58] sm:$0xff]
      %v990 = vld [vmem:[#allocation2 + $0x60] sm:$0xff]
      %v991 = vld [vmem:[#allocation2 + $0x68] sm:$0xff]
      %v992 = vld [vmem:[#allocation2 + $0x70] sm:$0xff]
      %v993 = vld [vmem:[#allocation2 + $0x78] sm:$0xff]
      %v994 = vld [vmem:[%s1] sm:$0xf]
      %v995 = vld [vmem:[%s1 + $0x4] sm:$0x3]
      %v998 = vunpack.c.l.b16 %v994
      %v999 = vunpack.c.l.b16 %v995
      %v1000 = vpack.c.b16 %v999, %v998
      %vm1001 = vcmask 97280
      %v1003 = vsel %vm1001, %v978, 0
      %v1006 = vsel %vm1001, %v979, 0
      %v1009 = vsel %vm1001, %v980, 0
      %v1012 = vsel %vm1001, %v981, 0
      %v1015 = vsel %vm1001, %v982, 0
      %v1018 = vsel %vm1001, %v983, 0
      %v1021 = vsel %vm1001, %v984, 0
      %v1024 = vsel %vm1001, %v985, 0
      %v1027 = vsel %vm1001, %v986, 0
      %v1030 = vsel %vm1001, %v987, 0
      %v1033 = vsel %vm1001, %v988, 0
      %v1036 = vsel %vm1001, %v989, 0
      %v1039 = vsel %vm1001, %v990, 0
      %v1042 = vsel %vm1001, %v991, 0
      %v1045 = vsel %vm1001, %v992, 0
      %v1048 = vsel %vm1001, %v993, 0
      %vm1050 = vcmask 1045504
      %v1052 = vsel %vm1050, %v1000, 0
      %1054 = vmatprep.subr.bf16.mxu0 0
      %1055 = vmatpush1.bf16.msra.mxu0 %v1052
      %1056 = vmatprep.subr.bf16.mxu0 0
      %1057 = vmatpush1.bf16.msra.mxu0 0
      %1058 = vmatprep.subr.bf16.mxu0 0
      %1059 = vmatpush1.bf16.msra.mxu0 0
      %1060 = vmatprep.subr.bf16.mxu0 0
      %1061 = vmatpush1.bf16.msra.mxu0 0
      %1062 = vmatprep.subr.bf16.mxu0 0
      %1063 = vmatpush1.bf16.msra.mxu0 0
      %1064 = vmatprep.subr.bf16.mxu0 0
      %1065 = vmatpush1.bf16.msra.mxu0 0
      %1066 = vmatprep.subr.bf16.mxu0 0
      %1067 = vmatpush1.bf16.msra.mxu0 0
      %1068 = vmatprep.subr.bf16.mxu0 0
      %1069 = vmatpush1.bf16.msra.mxu0 0
      %1070 = vmatprep.subr.bf16.mxu0 0
      %1071 = vmatpush1.bf16.msra.mxu0 0
      %1072 = vmatprep.subr.bf16.mxu0 0
      %1073 = vmatpush1.bf16.msra.mxu0 0
      %1074 = vmatprep.subr.bf16.mxu0 0
      %1075 = vmatpush1.bf16.msra.mxu0 0
      %1076 = vmatprep.subr.bf16.mxu0 0
      %1077 = vmatpush1.bf16.msra.mxu0 0
      %1078 = vmatprep.subr.bf16.mxu0 0
      %1079 = vmatpush1.bf16.msra.mxu0 0
      %1080 = vmatprep.subr.bf16.mxu0 0
      %1081 = vmatpush1.bf16.msra.mxu0 0
      %1082 = vmatprep.subr.bf16.mxu0 0
      %1083 = vmatpush1.bf16.msra.mxu0 0
      %1084 = vmatprep.subr.bf16.mxu0 0
      %1085 = vmatpush1.bf16.msra.mxu0 0
      %1086 = vmatprep.mubr.bf16.mxu0 0
      %1087 = vmatmul.mubr.bf16.gmra.mrb[0].mxu0 %v1003
      %v1088 = vpop.f32.mrb[0].mxu0
      %v1089 = vadd.f32 0.0, %v1088
      %v1090 = vpop.f32.mrb[0].mxu0
      %v1091 = vpop.f32.mrb[0].mxu0
      %v1092 = vadd.f32 0.0, %v1091
      %v1093 = vpop.f32.mrb[0].mxu0
      %1094 = vmatprep.mubr.bf16.mxu0 0
      %1095 = vmatmul.mubr.bf16.gmra.mrb[0].mxu0 %v1006
      %v1096 = vpop.f32.mrb[0].mxu0
      %v1097 = vadd.f32 0.0, %v1096
      %v1098 = vpop.f32.mrb[0].mxu0
      %v1099 = vpop.f32.mrb[0].mxu0
      %v1100 = vadd.f32 0.0, %v1099
      %v1101 = vpop.f32.mrb[0].mxu0
      %1102 = vmatprep.mubr.bf16.mxu0 0
      %1103 = vmatmul.mubr.bf16.gmra.mrb[0].mxu0 %v1009
      %v1104 = vpop.f32.mrb[0].mxu0
      %v1105 = vadd.f32 0.0, %v1104
      %v1106 = vpop.f32.mrb[0].mxu0
      %v1107 = vpop.f32.mrb[0].mxu0
      %v1108 = vadd.f32 0.0, %v1107
      %v1109 = vpop.f32.mrb[0].mxu0
      %1110 = vmatprep.mubr.bf16.mxu0 0
      %1111 = vmatmul.mubr.bf16.gmra.mrb[0].mxu0 %v1012
      %v1112 = vpop.f32.mrb[0].mxu0
      %v1113 = vadd.f32 0.0, %v1112
      %v1114 = vpop.f32.mrb[0].mxu0
      %v1115 = vpop.f32.mrb[0].mxu0
      %v1116 = vadd.f32 0.0, %v1115
      %v1117 = vpop.f32.mrb[0].mxu0
      %1118 = vmatprep.mubr.bf16.mxu0 0
      %1119 = vmatmul.mubr.bf16.gmra.mrb[0].mxu0 %v1015
      %v1120 = vpop.f32.mrb[0].mxu0
      %v1121 = vadd.f32 0.0, %v1120
      %v1122 = vpop.f32.mrb[0].mxu0
      %v1123 = vpop.f32.mrb[0].mxu0
      %v1124 = vadd.f32 0.0, %v1123
      %v1125 = vpop.f32.mrb[0].mxu0
      %1126 = vmatprep.mubr.bf16.mxu0 0
      %1127 = vmatmul.mubr.bf16.gmra.mrb[0].mxu0 %v1018
      %v1128 = vpop.f32.mrb[0].mxu0
      %v1129 = vadd.f32 0.0, %v1128
      %v1130 = vpop.f32.mrb[0].mxu0
      %v1131 = vpop.f32.mrb[0].mxu0
      %v1132 = vadd.f32 0.0, %v1131
      %v1133 = vpop.f32.mrb[0].mxu0
      %1134 = vmatprep.mubr.bf16.mxu0 0
      %1135 = vmatmul.mubr.bf16.gmra.mrb[0].mxu0 %v1021
      %v1136 = vpop.f32.mrb[0].mxu0
      %v1137 = vadd.f32 0.0, %v1136
      %v1138 = vpop.f32.mrb[0].mxu0
      %v1139 = vpop.f32.mrb[0].mxu0
      %v1140 = vadd.f32 0.0, %v1139
      %v1141 = vpop.f32.mrb[0].mxu0
      %1142 = vmatprep.mubr.bf16.mxu0 0
      %1143 = vmatmul.mubr.bf16.gmra.mrb[0].mxu0 %v1024
      %v1144 = vpop.f32.mrb[0].mxu0
      %v1145 = vadd.f32 0.0, %v1144
      %v1146 = vpop.f32.mrb[0].mxu0
      %v1147 = vpop.f32.mrb[0].mxu0
      %v1148 = vadd.f32 0.0, %v1147
      %v1149 = vpop.f32.mrb[0].mxu0
      %1150 = vmatprep.mubr.bf16.mxu0 0
      %1151 = vmatmul.mubr.bf16.gmra.mrb[0].mxu0 %v1027
      %v1152 = vpop.f32.mrb[0].mxu0
      %v1153 = vadd.f32 0.0, %v1152
      %v1154 = vpop.f32.mrb[0].mxu0
      %v1155 = vpop.f32.mrb[0].mxu0
      %v1156 = vadd.f32 0.0, %v1155
      %v1157 = vpop.f32.mrb[0].mxu0
      %1158 = vmatprep.mubr.bf16.mxu0 0
      %1159 = vmatmul.mubr.bf16.gmra.mrb[0].mxu0 %v1030
      %v1160 = vpop.f32.mrb[0].mxu0
      %v1161 = vadd.f32 0.0, %v1160
      %v1162 = vpop.f32.mrb[0].mxu0
      %v1163 = vpop.f32.mrb[0].mxu0
      %v1164 = vadd.f32 0.0, %v1163
      %v1165 = vpop.f32.mrb[0].mxu0
      %1166 = vmatprep.mubr.bf16.mxu0 0
      %1167 = vmatmul.mubr.bf16.gmra.mrb[0].mxu0 %v1033
      %v1168 = vpop.f32.mrb[0].mxu0
      %v1169 = vadd.f32 0.0, %v1168
      %v1170 = vpop.f32.mrb[0].mxu0
      %v1171 = vpop.f32.mrb[0].mxu0
      %v1172 = vadd.f32 0.0, %v1171
      %v1173 = vpop.f32.mrb[0].mxu0
      %1174 = vmatprep.mubr.bf16.mxu0 0
      %1175 = vmatmul.mubr.bf16.gmra.mrb[0].mxu0 %v1036
      %v1176 = vpop.f32.mrb[0].mxu0
      %v1177 = vadd.f32 0.0, %v1176
      %v1178 = vpop.f32.mrb[0].mxu0
      %v1179 = vpop.f32.mrb[0].mxu0
      %v1180 = vadd.f32 0.0, %v1179
      %v1181 = vpop.f32.mrb[0].mxu0
      %1182 = vmatprep.mubr.bf16.mxu0 0
      %1183 = vmatmul.mubr.bf16.gmra.mrb[0].mxu0 %v1039
      %v1184 = vpop.f32.mrb[0].mxu0
      %v1185 = vadd.f32 0.0, %v1184
      %v1186 = vpop.f32.mrb[0].mxu0
      %v1187 = vpop.f32.mrb[0].mxu0
      %v1188 = vadd.f32 0.0, %v1187
      %v1189 = vpop.f32.mrb[0].mxu0
      %1190 = vmatprep.mubr.bf16.mxu0 0
      %1191 = vmatmul.mubr.bf16.gmra.mrb[0].mxu0 %v1042
      %v1192 = vpop.f32.mrb[0].mxu0
      %v1193 = vadd.f32 0.0, %v1192
      %v1194 = vpop.f32.mrb[0].mxu0
      %v1195 = vpop.f32.mrb[0].mxu0
      %v1196 = vadd.f32 0.0, %v1195
      %v1197 = vpop.f32.mrb[0].mxu0
      %1198 = vmatprep.mubr.bf16.mxu0 0
      %1199 = vmatmul.mubr.bf16.gmra.mrb[0].mxu0 %v1045
      %v1200 = vpop.f32.mrb[0].mxu0
      %v1201 = vadd.f32 0.0, %v1200
      %v1202 = vpop.f32.mrb[0].mxu0
      %v1203 = vpop.f32.mrb[0].mxu0
      %v1204 = vadd.f32 0.0, %v1203
      %v1205 = vpop.f32.mrb[0].mxu0
      %1206 = vmatprep.mubr.bf16.mxu0 0
      %1207 = vmatmul.mubr.bf16.gmra.mrb[0].mxu0 %v1048
      %v1208 = vpop.f32.mrb[0].mxu0
      %v1209 = vadd.f32 0.0, %v1208
      %v1210 = vpop.f32.mrb[0].mxu0
      %v1211 = vpop.f32.mrb[0].mxu0
      %v1212 = vadd.f32 0.0, %v1211
      %v1213 = vpop.f32.mrb[0].mxu0
      %1214 = vdwg.mxu0
      %vm1247 = vcmask 1040384
      %v1248 = vrot.slane %v1089, 7
      %v1249 = vrot.slane %v1092, 7
      %v1250 = vsel %vm1247, %v1248, %v1249
      %v1251 = vrot.slane %v1097, 7
      %v1252 = vsel %vm1247, %v1249, %v1251
      %v1253 = vrot.slane %v1100, 7
      %v1254 = vsel %vm1247, %v1251, %v1253
      %v1255 = vrot.slane %v1105, 7
      %v1256 = vsel %vm1247, %v1253, %v1255
      %v1257 = vrot.slane %v1108, 7
      %v1258 = vsel %vm1247, %v1255, %v1257
      %v1259 = vrot.slane %v1113, 7
      %v1260 = vsel %vm1247, %v1257, %v1259
      %v1261 = vrot.slane %v1116, 7
      %v1262 = vsel %vm1247, %v1259, %v1261
      %v1263 = vrot.slane %v1121, 7
      %v1264 = vsel %vm1247, %v1261, %v1263
      %v1265 = vrot.slane %v1124, 7
      %v1266 = vsel %vm1247, %v1263, %v1265
      %v1267 = vrot.slane %v1129, 7
      %v1268 = vsel %vm1247, %v1265, %v1267
      %v1269 = vrot.slane %v1132, 7
      %v1270 = vsel %vm1247, %v1267, %v1269
      %v1271 = vrot.slane %v1137, 7
      %v1272 = vsel %vm1247, %v1269, %v1271
      %v1273 = vrot.slane %v1140, 7
      %v1274 = vsel %vm1247, %v1271, %v1273
      %v1275 = vrot.slane %v1145, 7
      %v1276 = vsel %vm1247, %v1273, %v1275
      %v1277 = vrot.slane %v1148, 7
      %v1278 = vsel %vm1247, %v1275, %v1277
      %v1279 = vrot.slane %v1153, 7
      %v1280 = vsel %vm1247, %v1277, %v1279
      %v1281 = vrot.slane %v1156, 7
      %v1282 = vsel %vm1247, %v1279, %v1281
      %v1283 = vrot.slane %v1161, 7
      %v1284 = vsel %vm1247, %v1281, %v1283
      %v1285 = vrot.slane %v1164, 7
      %v1286 = vsel %vm1247, %v1283, %v1285
      %v1287 = vrot.slane %v1169, 7
      %v1288 = vsel %vm1247, %v1285, %v1287
      %v1289 = vrot.slane %v1172, 7
      %v1290 = vsel %vm1247, %v1287, %v1289
      %v1291 = vrot.slane %v1177, 7
      %v1292 = vsel %vm1247, %v1289, %v1291
      %v1293 = vrot.slane %v1180, 7
      %v1294 = vsel %vm1247, %v1291, %v1293
      %v1295 = vrot.slane %v1185, 7
      %v1296 = vsel %vm1247, %v1293, %v1295
      %v1297 = vrot.slane %v1188, 7
      %v1298 = vsel %vm1247, %v1295, %v1297
      %v1299 = vrot.slane %v1193, 7
      %v1300 = vsel %vm1247, %v1297, %v1299
      %v1301 = vrot.slane %v1196, 7
      %v1302 = vsel %vm1247, %v1299, %v1301
      %v1303 = vrot.slane %v1201, 7
      %v1304 = vsel %vm1247, %v1301, %v1303
      %v1305 = vrot.slane %v1204, 7
      %v1306 = vsel %vm1247, %v1303, %v1305
      %v1307 = vrot.slane %v1209, 7
      %v1308 = vsel %vm1247, %v1305, %v1307
      %v1309 = vrot.slane %v1212, 7
      %v1310 = vsel %vm1247, %v1307, %v1309
      %v1343 = vsel %vm1247, 0.0, %v1248
      %vm1344 = vcmask 1046528
      %v1345 = vrot.slane %v1089, 1
      %v1346 = vrot.slane %v1092, 1
      %v1347 = vsel %vm1344, %v1345, %v1346
      %v1348 = vrot.slane %v1097, 1
      %v1349 = vsel %vm1344, %v1346, %v1348
      %v1350 = vrot.slane %v1100, 1
      %v1351 = vsel %vm1344, %v1348, %v1350
      %v1352 = vrot.slane %v1105, 1
      %v1353 = vsel %vm1344, %v1350, %v1352
      %v1354 = vrot.slane %v1108, 1
      %v1355 = vsel %vm1344, %v1352, %v1354
      %v1356 = vrot.slane %v1113, 1
      %v1357 = vsel %vm1344, %v1354, %v1356
      %v1358 = vrot.slane %v1116, 1
      %v1359 = vsel %vm1344, %v1356, %v1358
      %v1360 = vrot.slane %v1121, 1
      %v1361 = vsel %vm1344, %v1358, %v1360
      %v1362 = vrot.slane %v1124, 1
      %v1363 = vsel %vm1344, %v1360, %v1362
      %v1364 = vrot.slane %v1129, 1
      %v1365 = vsel %vm1344, %v1362, %v1364
      %v1366 = vrot.slane %v1132, 1
      %v1367 = vsel %vm1344, %v1364, %v1366
      %v1368 = vrot.slane %v1137, 1
      %v1369 = vsel %vm1344, %v1366, %v1368
      %v1370 = vrot.slane %v1140, 1
      %v1371 = vsel %vm1344, %v1368, %v1370
      %v1372 = vrot.slane %v1145, 1
      %v1373 = vsel %vm1344, %v1370, %v1372
      %v1374 = vrot.slane %v1148, 1
      %v1375 = vsel %vm1344, %v1372, %v1374
      %v1376 = vrot.slane %v1153, 1
      %v1377 = vsel %vm1344, %v1374, %v1376
      %v1378 = vrot.slane %v1156, 1
      %v1379 = vsel %vm1344, %v1376, %v1378
      %v1380 = vrot.slane %v1161, 1
      %v1381 = vsel %vm1344, %v1378, %v1380
      %v1382 = vrot.slane %v1164, 1
      %v1383 = vsel %vm1344, %v1380, %v1382
      %v1384 = vrot.slane %v1169, 1
      %v1385 = vsel %vm1344, %v1382, %v1384
      %v1386 = vrot.slane %v1172, 1
      %v1387 = vsel %vm1344, %v1384, %v1386
      %v1388 = vrot.slane %v1177, 1
      %v1389 = vsel %vm1344, %v1386, %v1388
      %v1390 = vrot.slane %v1180, 1
      %v1391 = vsel %vm1344, %v1388, %v1390
      %v1392 = vrot.slane %v1185, 1
      %v1393 = vsel %vm1344, %v1390, %v1392
      %v1394 = vrot.slane %v1188, 1
      %v1395 = vsel %vm1344, %v1392, %v1394
      %v1396 = vrot.slane %v1193, 1
      %v1397 = vsel %vm1344, %v1394, %v1396
      %v1398 = vrot.slane %v1196, 1
      %v1399 = vsel %vm1344, %v1396, %v1398
      %v1400 = vrot.slane %v1201, 1
      %v1401 = vsel %vm1344, %v1398, %v1400
      %v1402 = vrot.slane %v1204, 1
      %v1403 = vsel %vm1344, %v1400, %v1402
      %v1404 = vrot.slane %v1209, 1
      %v1405 = vsel %vm1344, %v1402, %v1404
      %v1406 = vrot.slane %v1212, 1
      %v1407 = vsel %vm1344, %v1404, %v1406
      %v1440 = vsel %vm1344, %v1406, 0.0
      %v1441 = vsel %vm675, 1, 0
      %v1442 = vsel %vm676, 1, 0
      %v1443 = vsel %vm677, 1, 0
      %v1444 = vsel %vm678, 1, 0
      %v1445 = vsel %vm679, 1, 0
      %v1446 = vsel %vm680, 1, 0
      %v1447 = vsel %vm681, 1, 0
      %v1448 = vsel %vm682, 1, 0
      %v1449 = vsel %vm683, 1, 0
      %v1450 = vsel %vm684, 1, 0
      %v1451 = vsel %vm685, 1, 0
      %v1452 = vsel %vm686, 1, 0
      %v1453 = vsel %vm687, 1, 0
      %v1454 = vsel %vm688, 1, 0
      %v1455 = vsel %vm689, 1, 0
      %v1456 = vsel %vm690, 1, 0
      %v1457 = vsel %vm691, 1, 0
      %v1458 = vsel %vm692, 1, 0
      %v1459 = vsel %vm693, 1, 0
      %v1460 = vsel %vm694, 1, 0
      %v1461 = vsel %vm695, 1, 0
      %v1462 = vsel %vm696, 1, 0
      %v1463 = vsel %vm697, 1, 0
      %v1464 = vsel %vm698, 1, 0
      %v1465 = vsel %vm699, 1, 0
      %v1466 = vsel %vm700, 1, 0
      %v1467 = vsel %vm701, 1, 0
      %v1468 = vsel %vm702, 1, 0
      %v1469 = vsel %vm703, 1, 0
      %v1470 = vsel %vm704, 1, 0
      %v1471 = vsel %vm705, 1, 0
      %v1472 = vsel %vm706, 1, 0
      %vm1473 = vcmp.eq.s32.totalorder %v1441, 1
      %vm1474 = vcmp.eq.s32.totalorder %v1442, 1
      %vm1475 = vcmp.eq.s32.totalorder %v1443, 1
      %vm1476 = vcmp.eq.s32.totalorder %v1444, 1
      %vm1477 = vcmp.eq.s32.totalorder %v1445, 1
      %vm1478 = vcmp.eq.s32.totalorder %v1446, 1
      %vm1479 = vcmp.eq.s32.totalorder %v1447, 1
      %vm1480 = vcmp.eq.s32.totalorder %v1448, 1
      %vm1481 = vcmp.eq.s32.totalorder %v1449, 1
      %vm1482 = vcmp.eq.s32.totalorder %v1450, 1
      %vm1483 = vcmp.eq.s32.totalorder %v1451, 1
      %vm1484 = vcmp.eq.s32.totalorder %v1452, 1
      %vm1485 = vcmp.eq.s32.totalorder %v1453, 1
      %vm1486 = vcmp.eq.s32.totalorder %v1454, 1
      %vm1487 = vcmp.eq.s32.totalorder %v1455, 1
      %vm1488 = vcmp.eq.s32.totalorder %v1456, 1
      %vm1489 = vcmp.eq.s32.totalorder %v1457, 1
      %vm1490 = vcmp.eq.s32.totalorder %v1458, 1
      %vm1491 = vcmp.eq.s32.totalorder %v1459, 1
      %vm1492 = vcmp.eq.s32.totalorder %v1460, 1
      %vm1493 = vcmp.eq.s32.totalorder %v1461, 1
      %vm1494 = vcmp.eq.s32.totalorder %v1462, 1
      %vm1495 = vcmp.eq.s32.totalorder %v1463, 1
      %vm1496 = vcmp.eq.s32.totalorder %v1464, 1
      %vm1497 = vcmp.eq.s32.totalorder %v1465, 1
      %vm1498 = vcmp.eq.s32.totalorder %v1466, 1
      %vm1499 = vcmp.eq.s32.totalorder %v1467, 1
      %vm1500 = vcmp.eq.s32.totalorder %v1468, 1
      %vm1501 = vcmp.eq.s32.totalorder %v1469, 1
      %vm1502 = vcmp.eq.s32.totalorder %v1470, 1
      %vm1503 = vcmp.eq.s32.totalorder %v1471, 1
      %vm1504 = vcmp.eq.s32.totalorder %v1472, 1
      %v1505 = vsel %vm1473, %v1343, 0.0
      %v1506 = vsel %vm1474, %v1250, 0.0
      %v1507 = vsel %vm1475, %v1252, 0.0
      %v1508 = vsel %vm1476, %v1254, 0.0
      %v1509 = vsel %vm1477, %v1256, 0.0
      %v1510 = vsel %vm1478, %v1258, 0.0
      %v1511 = vsel %vm1479, %v1260, 0.0
      %v1512 = vsel %vm1480, %v1262, 0.0
      %v1513 = vsel %vm1481, %v1264, 0.0
      %v1514 = vsel %vm1482, %v1266, 0.0
      %v1515 = vsel %vm1483, %v1268, 0.0
      %v1516 = vsel %vm1484, %v1270, 0.0
      %v1517 = vsel %vm1485, %v1272, 0.0
      %v1518 = vsel %vm1486, %v1274, 0.0
      %v1519 = vsel %vm1487, %v1276, 0.0
      %v1520 = vsel %vm1488, %v1278, 0.0
      %v1521 = vsel %vm1489, %v1280, 0.0
      %v1522 = vsel %vm1490, %v1282, 0.0
      %v1523 = vsel %vm1491, %v1284, 0.0
      %v1524 = vsel %vm1492, %v1286, 0.0
      %v1525 = vsel %vm1493, %v1288, 0.0
      %v1526 = vsel %vm1494, %v1290, 0.0
      %v1527 = vsel %vm1495, %v1292, 0.0
      %v1528 = vsel %vm1496, %v1294, 0.0
      %v1529 = vsel %vm1497, %v1296, 0.0
      %v1530 = vsel %vm1498, %v1298, 0.0
      %v1531 = vsel %vm1499, %v1300, 0.0
      %v1532 = vsel %vm1500, %v1302, 0.0
      %v1533 = vsel %vm1501, %v1304, 0.0
      %v1534 = vsel %vm1502, %v1306, 0.0
      %v1535 = vsel %vm1503, %v1308, 0.0
      %v1536 = vsel %vm1504, %v1310, 0.0
      %1537 = vrot.lane.b32.xlu0 %v1089, 124
      %v1538 = vpop.permute.xlu0 %1537
      %1539 = vrot.lane.b32.xlu0 %v1092, 124
      %v1540 = vpop.permute.xlu0 %1539
      %1541 = vrot.lane.b32.xlu0 %v1097, 124
      %v1542 = vpop.permute.xlu0 %1541
      %1543 = vrot.lane.b32.xlu0 %v1100, 124
      %v1544 = vpop.permute.xlu0 %1543
      %1545 = vrot.lane.b32.xlu0 %v1105, 124
      %v1546 = vpop.permute.xlu0 %1545
      %1547 = vrot.lane.b32.xlu0 %v1108, 124
      %v1548 = vpop.permute.xlu0 %1547
      %1549 = vrot.lane.b32.xlu0 %v1113, 124
      %v1550 = vpop.permute.xlu0 %1549
      %1551 = vrot.lane.b32.xlu0 %v1116, 124
      %v1552 = vpop.permute.xlu0 %1551
      %1553 = vrot.lane.b32.xlu0 %v1121, 124
      %v1554 = vpop.permute.xlu0 %1553
      %1555 = vrot.lane.b32.xlu0 %v1124, 124
      %v1556 = vpop.permute.xlu0 %1555
      %1557 = vrot.lane.b32.xlu0 %v1129, 124
      %v1558 = vpop.permute.xlu0 %1557
      %1559 = vrot.lane.b32.xlu0 %v1132, 124
      %v1560 = vpop.permute.xlu0 %1559
      %1561 = vrot.lane.b32.xlu0 %v1137, 124
      %v1562 = vpop.permute.xlu0 %1561
      %1563 = vrot.lane.b32.xlu0 %v1140, 124
      %v1564 = vpop.permute.xlu0 %1563
      %1565 = vrot.lane.b32.xlu0 %v1145, 124
      %v1566 = vpop.permute.xlu0 %1565
      %1567 = vrot.lane.b32.xlu0 %v1148, 124
      %v1568 = vpop.permute.xlu0 %1567
      %1569 = vrot.lane.b32.xlu0 %v1153, 124
      %v1570 = vpop.permute.xlu0 %1569
      %1571 = vrot.lane.b32.xlu0 %v1156, 124
      %v1572 = vpop.permute.xlu0 %1571
      %1573 = vrot.lane.b32.xlu0 %v1161, 124
      %v1574 = vpop.permute.xlu0 %1573
      %1575 = vrot.lane.b32.xlu0 %v1164, 124
      %v1576 = vpop.permute.xlu0 %1575
      %1577 = vrot.lane.b32.xlu0 %v1169, 124
      %v1578 = vpop.permute.xlu0 %1577
      %1579 = vrot.lane.b32.xlu0 %v1172, 124
      %v1580 = vpop.permute.xlu0 %1579
      %1581 = vrot.lane.b32.xlu0 %v1177, 124
      %v1582 = vpop.permute.xlu0 %1581
      %1583 = vrot.lane.b32.xlu0 %v1180, 124
      %v1584 = vpop.permute.xlu0 %1583
      %1585 = vrot.lane.b32.xlu0 %v1185, 124
      %v1586 = vpop.permute.xlu0 %1585
      %1587 = vrot.lane.b32.xlu0 %v1188, 124
      %v1588 = vpop.permute.xlu0 %1587
      %1589 = vrot.lane.b32.xlu0 %v1193, 124
      %v1590 = vpop.permute.xlu0 %1589
      %1591 = vrot.lane.b32.xlu0 %v1196, 124
      %v1592 = vpop.permute.xlu0 %1591
      %1593 = vrot.lane.b32.xlu0 %v1201, 124
      %v1594 = vpop.permute.xlu0 %1593
      %1595 = vrot.lane.b32.xlu0 %v1204, 124
      %v1596 = vpop.permute.xlu0 %1595
      %1597 = vrot.lane.b32.xlu0 %v1209, 124
      %v1598 = vpop.permute.xlu0 %1597
      %1599 = vrot.lane.b32.xlu0 %v1212, 124
      %v1600 = vpop.permute.xlu0 %1599
      %v1633 = vadd.f32 %v1505, %v1538
      %v1634 = vadd.f32 %v1506, %v1540
      %v1635 = vadd.f32 %v1507, %v1542
      %v1636 = vadd.f32 %v1508, %v1544
      %v1637 = vadd.f32 %v1509, %v1546
      %v1638 = vadd.f32 %v1510, %v1548
      %v1639 = vadd.f32 %v1511, %v1550
      %v1640 = vadd.f32 %v1512, %v1552
      %v1641 = vadd.f32 %v1513, %v1554
      %v1642 = vadd.f32 %v1514, %v1556
      %v1643 = vadd.f32 %v1515, %v1558
      %v1644 = vadd.f32 %v1516, %v1560
      %v1645 = vadd.f32 %v1517, %v1562
      %v1646 = vadd.f32 %v1518, %v1564
      %v1647 = vadd.f32 %v1519, %v1566
      %v1648 = vadd.f32 %v1520, %v1568
      %v1649 = vadd.f32 %v1521, %v1570
      %v1650 = vadd.f32 %v1522, %v1572
      %v1651 = vadd.f32 %v1523, %v1574
      %v1652 = vadd.f32 %v1524, %v1576
      %v1653 = vadd.f32 %v1525, %v1578
      %v1654 = vadd.f32 %v1526, %v1580
      %v1655 = vadd.f32 %v1527, %v1582
      %v1656 = vadd.f32 %v1528, %v1584
      %v1657 = vadd.f32 %v1529, %v1586
      %v1658 = vadd.f32 %v1530, %v1588
      %v1659 = vadd.f32 %v1531, %v1590
      %v1660 = vadd.f32 %v1532, %v1592
      %v1661 = vadd.f32 %v1533, %v1594
      %v1662 = vadd.f32 %v1534, %v1596
      %v1663 = vadd.f32 %v1535, %v1598
      %v1664 = vadd.f32 %v1536, %v1600
      %v1665 = vsel %vm707, 1, 0
      %v1666 = vsel %vm708, 1, 0
      %v1667 = vsel %vm709, 1, 0
      %v1668 = vsel %vm710, 1, 0
      %v1669 = vsel %vm711, 1, 0
      %v1670 = vsel %vm712, 1, 0
      %v1671 = vsel %vm713, 1, 0
      %v1672 = vsel %vm714, 1, 0
      %v1673 = vsel %vm715, 1, 0
      %v1674 = vsel %vm716, 1, 0
      %v1675 = vsel %vm717, 1, 0
      %v1676 = vsel %vm718, 1, 0
      %v1677 = vsel %vm719, 1, 0
      %v1678 = vsel %vm720, 1, 0
      %v1679 = vsel %vm721, 1, 0
      %v1680 = vsel %vm722, 1, 0
      %v1681 = vsel %vm723, 1, 0
      %v1682 = vsel %vm724, 1, 0
      %v1683 = vsel %vm725, 1, 0
      %v1684 = vsel %vm726, 1, 0
      %v1685 = vsel %vm727, 1, 0
      %v1686 = vsel %vm728, 1, 0
      %v1687 = vsel %vm729, 1, 0
      %v1688 = vsel %vm730, 1, 0
      %v1689 = vsel %vm731, 1, 0
      %v1690 = vsel %vm732, 1, 0
      %v1691 = vsel %vm733, 1, 0
      %v1692 = vsel %vm734, 1, 0
      %v1693 = vsel %vm735, 1, 0
      %v1694 = vsel %vm736, 1, 0
      %v1695 = vsel %vm737, 1, 0
      %v1696 = vsel %vm738, 1, 0
      %vm1697 = vcmp.eq.s32.totalorder %v1665, 1
      %vm1698 = vcmp.eq.s32.totalorder %v1666, 1
      %vm1699 = vcmp.eq.s32.totalorder %v1667, 1
      %vm1700 = vcmp.eq.s32.totalorder %v1668, 1
      %vm1701 = vcmp.eq.s32.totalorder %v1669, 1
      %vm1702 = vcmp.eq.s32.totalorder %v1670, 1
      %vm1703 = vcmp.eq.s32.totalorder %v1671, 1
      %vm1704 = vcmp.eq.s32.totalorder %v1672, 1
      %vm1705 = vcmp.eq.s32.totalorder %v1673, 1
      %vm1706 = vcmp.eq.s32.totalorder %v1674, 1
      %vm1707 = vcmp.eq.s32.totalorder %v1675, 1
      %vm1708 = vcmp.eq.s32.totalorder %v1676, 1
      %vm1709 = vcmp.eq.s32.totalorder %v1677, 1
      %vm1710 = vcmp.eq.s32.totalorder %v1678, 1
      %vm1711 = vcmp.eq.s32.totalorder %v1679, 1
      %vm1712 = vcmp.eq.s32.totalorder %v1680, 1
      %vm1713 = vcmp.eq.s32.totalorder %v1681, 1
      %vm1714 = vcmp.eq.s32.totalorder %v1682, 1
      %vm1715 = vcmp.eq.s32.totalorder %v1683, 1
      %vm1716 = vcmp.eq.s32.totalorder %v1684, 1
      %vm1717 = vcmp.eq.s32.totalorder %v1685, 1
      %vm1718 = vcmp.eq.s32.totalorder %v1686, 1
      %vm1719 = vcmp.eq.s32.totalorder %v1687, 1
      %vm1720 = vcmp.eq.s32.totalorder %v1688, 1
      %vm1721 = vcmp.eq.s32.totalorder %v1689, 1
      %vm1722 = vcmp.eq.s32.totalorder %v1690, 1
      %vm1723 = vcmp.eq.s32.totalorder %v1691, 1
      %vm1724 = vcmp.eq.s32.totalorder %v1692, 1
      %vm1725 = vcmp.eq.s32.totalorder %v1693, 1
      %vm1726 = vcmp.eq.s32.totalorder %v1694, 1
      %vm1727 = vcmp.eq.s32.totalorder %v1695, 1
      %vm1728 = vcmp.eq.s32.totalorder %v1696, 1
      %v1729 = vsel %vm1697, %v1347, 0.0
      %v1730 = vsel %vm1698, %v1349, 0.0
      %v1731 = vsel %vm1699, %v1351, 0.0
      %v1732 = vsel %vm1700, %v1353, 0.0
      %v1733 = vsel %vm1701, %v1355, 0.0
      %v1734 = vsel %vm1702, %v1357, 0.0
      %v1735 = vsel %vm1703, %v1359, 0.0
      %v1736 = vsel %vm1704, %v1361, 0.0
      %v1737 = vsel %vm1705, %v1363, 0.0
      %v1738 = vsel %vm1706, %v1365, 0.0
      %v1739 = vsel %vm1707, %v1367, 0.0
      %v1740 = vsel %vm1708, %v1369, 0.0
      %v1741 = vsel %vm1709, %v1371, 0.0
      %v1742 = vsel %vm1710, %v1373, 0.0
      %v1743 = vsel %vm1711, %v1375, 0.0
      %v1744 = vsel %vm1712, %v1377, 0.0
      %v1745 = vsel %vm1713, %v1379, 0.0
      %v1746 = vsel %vm1714, %v1381, 0.0
      %v1747 = vsel %vm1715, %v1383, 0.0
      %v1748 = vsel %vm1716, %v1385, 0.0
      %v1749 = vsel %vm1717, %v1387, 0.0
      %v1750 = vsel %vm1718, %v1389, 0.0
      %v1751 = vsel %vm1719, %v1391, 0.0
      %v1752 = vsel %vm1720, %v1393, 0.0
      %v1753 = vsel %vm1721, %v1395, 0.0
      %v1754 = vsel %vm1722, %v1397, 0.0
      %v1755 = vsel %vm1723, %v1399, 0.0
      %v1756 = vsel %vm1724, %v1401, 0.0
      %v1757 = vsel %vm1725, %v1403, 0.0
      %v1758 = vsel %vm1726, %v1405, 0.0
      %v1759 = vsel %vm1727, %v1407, 0.0
      %v1760 = vsel %vm1728, %v1440, 0.0
      %1793 = vrot.lane.b32.xlu0 %v1729, 120
      %v1794 = vpop.permute.xlu0 %1793
      %1795 = vrot.lane.b32.xlu0 %v1730, 120
      %v1796 = vpop.permute.xlu0 %1795
      %1797 = vrot.lane.b32.xlu0 %v1731, 120
      %v1798 = vpop.permute.xlu0 %1797
      %1799 = vrot.lane.b32.xlu0 %v1732, 120
      %v1800 = vpop.permute.xlu0 %1799
      %1801 = vrot.lane.b32.xlu0 %v1733, 120
      %v1802 = vpop.permute.xlu0 %1801
      %1803 = vrot.lane.b32.xlu0 %v1734, 120
      %v1804 = vpop.permute.xlu0 %1803
      %1805 = vrot.lane.b32.xlu0 %v1735, 120
      %v1806 = vpop.permute.xlu0 %1805
      %1807 = vrot.lane.b32.xlu0 %v1736, 120
      %v1808 = vpop.permute.xlu0 %1807
      %1809 = vrot.lane.b32.xlu0 %v1737, 120
      %v1810 = vpop.permute.xlu0 %1809
      %1811 = vrot.lane.b32.xlu0 %v1738, 120
      %v1812 = vpop.permute.xlu0 %1811
      %1813 = vrot.lane.b32.xlu0 %v1739, 120
      %v1814 = vpop.permute.xlu0 %1813
      %1815 = vrot.lane.b32.xlu0 %v1740, 120
      %v1816 = vpop.permute.xlu0 %1815
      %1817 = vrot.lane.b32.xlu0 %v1741, 120
      %v1818 = vpop.permute.xlu0 %1817
      %1819 = vrot.lane.b32.xlu0 %v1742, 120
      %v1820 = vpop.permute.xlu0 %1819
      %1821 = vrot.lane.b32.xlu0 %v1743, 120
      %v1822 = vpop.permute.xlu0 %1821
      %1823 = vrot.lane.b32.xlu0 %v1744, 120
      %v1824 = vpop.permute.xlu0 %1823
      %1825 = vrot.lane.b32.xlu0 %v1745, 120
      %v1826 = vpop.permute.xlu0 %1825
      %1827 = vrot.lane.b32.xlu0 %v1746, 120
      %v1828 = vpop.permute.xlu0 %1827
      %1829 = vrot.lane.b32.xlu0 %v1747, 120
      %v1830 = vpop.permute.xlu0 %1829
      %1831 = vrot.lane.b32.xlu0 %v1748, 120
      %v1832 = vpop.permute.xlu0 %1831
      %1833 = vrot.lane.b32.xlu0 %v1749, 120
      %v1834 = vpop.permute.xlu0 %1833
      %1835 = vrot.lane.b32.xlu0 %v1750, 120
      %v1836 = vpop.permute.xlu0 %1835
      %1837 = vrot.lane.b32.xlu0 %v1751, 120
      %v1838 = vpop.permute.xlu0 %1837
      %1839 = vrot.lane.b32.xlu0 %v1752, 120
      %v1840 = vpop.permute.xlu0 %1839
      %1841 = vrot.lane.b32.xlu0 %v1753, 120
      %v1842 = vpop.permute.xlu0 %1841
      %1843 = vrot.lane.b32.xlu0 %v1754, 120
      %v1844 = vpop.permute.xlu0 %1843
      %1845 = vrot.lane.b32.xlu0 %v1755, 120
      %v1846 = vpop.permute.xlu0 %1845
      %1847 = vrot.lane.b32.xlu0 %v1756, 120
      %v1848 = vpop.permute.xlu0 %1847
      %1849 = vrot.lane.b32.xlu0 %v1757, 120
      %v1850 = vpop.permute.xlu0 %1849
      %1851 = vrot.lane.b32.xlu0 %v1758, 120
      %v1852 = vpop.permute.xlu0 %1851
      %1853 = vrot.lane.b32.xlu0 %v1759, 120
      %v1854 = vpop.permute.xlu0 %1853
      %1855 = vrot.lane.b32.xlu0 %v1760, 120
      %v1856 = vpop.permute.xlu0 %1855
      %v1889 = vadd.f32 %v1633, %v1794
      %v1890 = vadd.f32 %v1634, %v1796
      %v1891 = vadd.f32 %v1635, %v1798
      %v1892 = vadd.f32 %v1636, %v1800
      %v1893 = vadd.f32 %v1637, %v1802
      %v1894 = vadd.f32 %v1638, %v1804
      %v1895 = vadd.f32 %v1639, %v1806
      %v1896 = vadd.f32 %v1640, %v1808
      %v1897 = vadd.f32 %v1641, %v1810
      %v1898 = vadd.f32 %v1642, %v1812
      %v1899 = vadd.f32 %v1643, %v1814
      %v1900 = vadd.f32 %v1644, %v1816
      %v1901 = vadd.f32 %v1645, %v1818
      %v1902 = vadd.f32 %v1646, %v1820
      %v1903 = vadd.f32 %v1647, %v1822
      %v1904 = vadd.f32 %v1648, %v1824
      %v1905 = vadd.f32 %v1649, %v1826
      %v1906 = vadd.f32 %v1650, %v1828
      %v1907 = vadd.f32 %v1651, %v1830
      %v1908 = vadd.f32 %v1652, %v1832
      %v1909 = vadd.f32 %v1653, %v1834
      %v1910 = vadd.f32 %v1654, %v1836
      %v1911 = vadd.f32 %v1655, %v1838
      %v1912 = vadd.f32 %v1656, %v1840
      %v1913 = vadd.f32 %v1657, %v1842
      %v1914 = vadd.f32 %v1658, %v1844
      %v1915 = vadd.f32 %v1659, %v1846
      %v1916 = vadd.f32 %v1660, %v1848
      %v1917 = vadd.f32 %v1661, %v1850
      %v1918 = vadd.f32 %v1662, %v1852
      %v1919 = vadd.f32 %v1663, %v1854
      %v1920 = vadd.f32 %v1664, %v1856
      %v1921 = vld [vmem:[%s2] sm:$0x1]
      %v1923 = vlaneseq
      %v1924 = vshrl.u32 %v1923, 7
      %v1925 = vsub.s32 0, %v1924
      %v1926 = vrot.slane %v1921, %v1925
      %v1928 = vadd.f32 %v1889, %v1926
      %v1929 = vadd.f32 %v1890, %v1926
      %v1930 = vadd.f32 %v1891, %v1926
      %v1931 = vadd.f32 %v1892, %v1926
      %v1932 = vadd.f32 %v1893, %v1926
      %v1933 = vadd.f32 %v1894, %v1926
      %v1934 = vadd.f32 %v1895, %v1926
      %v1935 = vadd.f32 %v1896, %v1926
      %v1936 = vadd.f32 %v1897, %v1926
      %v1937 = vadd.f32 %v1898, %v1926
      %v1938 = vadd.f32 %v1899, %v1926
      %v1939 = vadd.f32 %v1900, %v1926
      %v1940 = vadd.f32 %v1901, %v1926
      %v1941 = vadd.f32 %v1902, %v1926
      %v1942 = vadd.f32 %v1903, %v1926
      %v1943 = vadd.f32 %v1904, %v1926
      %v1944 = vadd.f32 %v1905, %v1926
      %v1945 = vadd.f32 %v1906, %v1926
      %v1946 = vadd.f32 %v1907, %v1926
      %v1947 = vadd.f32 %v1908, %v1926
      %v1948 = vadd.f32 %v1909, %v1926
      %v1949 = vadd.f32 %v1910, %v1926
      %v1950 = vadd.f32 %v1911, %v1926
      %v1951 = vadd.f32 %v1912, %v1926
      %v1952 = vadd.f32 %v1913, %v1926
      %v1953 = vadd.f32 %v1914, %v1926
      %v1954 = vadd.f32 %v1915, %v1926
      %v1955 = vadd.f32 %v1916, %v1926
      %v1956 = vadd.f32 %v1917, %v1926
      %v1957 = vadd.f32 %v1918, %v1926
      %v1958 = vadd.f32 %v1919, %v1926
      %v1959 = vadd.f32 %v1920, %v1926
      %v1960 = vmax.f32 %v1928, 0.0
      %v1961 = vmax.f32 %v1929, 0.0
      %v1962 = vmax.f32 %v1930, 0.0
      %v1963 = vmax.f32 %v1931, 0.0
      %v1964 = vmax.f32 %v1932, 0.0
      %v1965 = vmax.f32 %v1933, 0.0
      %v1966 = vmax.f32 %v1934, 0.0
      %v1967 = vmax.f32 %v1935, 0.0
      %v1968 = vmax.f32 %v1936, 0.0
      %v1969 = vmax.f32 %v1937, 0.0
      %v1970 = vmax.f32 %v1938, 0.0
      %v1971 = vmax.f32 %v1939, 0.0
      %v1972 = vmax.f32 %v1940, 0.0
      %v1973 = vmax.f32 %v1941, 0.0
      %v1974 = vmax.f32 %v1942, 0.0
      %v1975 = vmax.f32 %v1943, 0.0
      %v1976 = vmax.f32 %v1944, 0.0
      %v1977 = vmax.f32 %v1945, 0.0
      %v1978 = vmax.f32 %v1946, 0.0
      %v1979 = vmax.f32 %v1947, 0.0
      %v1980 = vmax.f32 %v1948, 0.0
      %v1981 = vmax.f32 %v1949, 0.0
      %v1982 = vmax.f32 %v1950, 0.0
      %v1983 = vmax.f32 %v1951, 0.0
      %v1984 = vmax.f32 %v1952, 0.0
      %v1985 = vmax.f32 %v1953, 0.0
      %v1986 = vmax.f32 %v1954, 0.0
      %v1987 = vmax.f32 %v1955, 0.0
      %v1988 = vmax.f32 %v1956, 0.0
      %v1989 = vmax.f32 %v1957, 0.0
      %v1990 = vmax.f32 %v1958, 0.0
      %v1991 = vmax.f32 %v1959, 0.0
      %v1992 = vpack.c.bf16 %v1961, %v1960
      %v1993 = vpack.c.bf16 %v1963, %v1962
      %v1994 = vpack.c.bf16 %v1965, %v1964
      %v1995 = vpack.c.bf16 %v1967, %v1966
      %v1996 = vpack.c.bf16 %v1969, %v1968
      %v1997 = vpack.c.bf16 %v1971, %v1970
      %v1998 = vpack.c.bf16 %v1973, %v1972
      %v1999 = vpack.c.bf16 %v1975, %v1974
      %v2000 = vpack.c.bf16 %v1977, %v1976
      %v2001 = vpack.c.bf16 %v1979, %v1978
      %v2002 = vpack.c.bf16 %v1981, %v1980
      %v2003 = vpack.c.bf16 %v1983, %v1982
      %v2004 = vpack.c.bf16 %v1985, %v1984
      %v2005 = vpack.c.bf16 %v1987, %v1986
      %v2006 = vpack.c.bf16 %v1989, %v1988
      %v2007 = vpack.c.bf16 %v1991, %v1990
      %2024 = vrot.lane.b32.xlu0 %v1992, 4
      %v2025 = vpop.permute.xlu0 %2024
      %2026 = vrot.lane.b32.xlu0 %v1993, 4
      %v2027 = vpop.permute.xlu0 %2026
      %2028 = vrot.lane.b32.xlu0 %v1994, 4
      %v2029 = vpop.permute.xlu0 %2028
      %2030 = vrot.lane.b32.xlu0 %v1995, 4
      %v2031 = vpop.permute.xlu0 %2030
      %2032 = vrot.lane.b32.xlu0 %v1996, 4
      %v2033 = vpop.permute.xlu0 %2032
      %2034 = vrot.lane.b32.xlu0 %v1997, 4
      %v2035 = vpop.permute.xlu0 %2034
      %2036 = vrot.lane.b32.xlu0 %v1998, 4
      %v2037 = vpop.permute.xlu0 %2036
      %2038 = vrot.lane.b32.xlu0 %v1999, 4
      %v2039 = vpop.permute.xlu0 %2038
      %2040 = vrot.lane.b32.xlu0 %v2000, 4
      %v2041 = vpop.permute.xlu0 %2040
      %2042 = vrot.lane.b32.xlu0 %v2001, 4
      %v2043 = vpop.permute.xlu0 %2042
      %2044 = vrot.lane.b32.xlu0 %v2002, 4
      %v2045 = vpop.permute.xlu0 %2044
      %2046 = vrot.lane.b32.xlu0 %v2003, 4
      %v2047 = vpop.permute.xlu0 %2046
      %2048 = vrot.lane.b32.xlu0 %v2004, 4
      %v2049 = vpop.permute.xlu0 %2048
      %2050 = vrot.lane.b32.xlu0 %v2005, 4
      %v2051 = vpop.permute.xlu0 %2050
      %2052 = vrot.lane.b32.xlu0 %v2006, 4
      %v2053 = vpop.permute.xlu0 %2052
      %2054 = vrot.lane.b32.xlu0 %v2007, 4
      %v2055 = vpop.permute.xlu0 %2054
      %2072 = vst.msk [vmem:[#allocation3] sm:$0xff] %vm867, %v2025
      %2073 = vst.msk [vmem:[#allocation3 + $0x8] sm:$0xff] %vm867, %v2027
      %2074 = vst.msk [vmem:[#allocation3 + $0x10] sm:$0xff] %vm867, %v2029
      %2075 = vst.msk [vmem:[#allocation3 + $0x18] sm:$0xff] %vm867, %v2031
      %2076 = vst.msk [vmem:[#allocation3 + $0x20] sm:$0xff] %vm867, %v2033
      %2077 = vst.msk [vmem:[#allocation3 + $0x28] sm:$0xff] %vm867, %v2035
      %2078 = vst.msk [vmem:[#allocation3 + $0x30] sm:$0xff] %vm867, %v2037
      %2079 = vst.msk [vmem:[#allocation3 + $0x38] sm:$0xff] %vm867, %v2039
      %2080 = vst.msk [vmem:[#allocation3 + $0x40] sm:$0xff] %vm867, %v2041
      %2081 = vst.msk [vmem:[#allocation3 + $0x48] sm:$0xff] %vm867, %v2043
      %2082 = vst.msk [vmem:[#allocation3 + $0x50] sm:$0xff] %vm867, %v2045
      %2083 = vst.msk [vmem:[#allocation3 + $0x58] sm:$0xff] %vm867, %v2047
      %2084 = vst.msk [vmem:[#allocation3 + $0x60] sm:$0xff] %vm867, %v2049
      %2085 = vst.msk [vmem:[#allocation3 + $0x68] sm:$0xff] %vm867, %v2051
      %2086 = vst.msk [vmem:[#allocation3 + $0x70] sm:$0xff] %vm867, %v2053
      %2087 = vst.msk [vmem:[#allocation3 + $0x78] sm:$0xff] %vm867, %v2055
      %2088 = vst.msk [vmem:[#allocation3] sm:$0xff] %vm884, 0
      %2089 = vst.msk [vmem:[#allocation3 + $0x8] sm:$0xff] %vm884, %v1992
      %2090 = vst.msk [vmem:[#allocation3 + $0x10] sm:$0xff] %vm884, %v1993
      %2091 = vst.msk [vmem:[#allocation3 + $0x18] sm:$0xff] %vm884, %v1994
      %2092 = vst.msk [vmem:[#allocation3 + $0x20] sm:$0xff] %vm884, %v1995
      %2093 = vst.msk [vmem:[#allocation3 + $0x28] sm:$0xff] %vm884, %v1996
      %2094 = vst.msk [vmem:[#allocation3 + $0x30] sm:$0xff] %vm884, %v1997
      %2095 = vst.msk [vmem:[#allocation3 + $0x38] sm:$0xff] %vm884, %v1998
      %2096 = vst.msk [vmem:[#allocation3 + $0x40] sm:$0xff] %vm884, %v1999
      %2097 = vst.msk [vmem:[#allocation3 + $0x48] sm:$0xff] %vm884, %v2000
      %2098 = vst.msk [vmem:[#allocation3 + $0x50] sm:$0xff] %vm884, %v2001
      %2099 = vst.msk [vmem:[#allocation3 + $0x58] sm:$0xff] %vm884, %v2002
      %2100 = vst.msk [vmem:[#allocation3 + $0x60] sm:$0xff] %vm884, %v2003
      %2101 = vst.msk [vmem:[#allocation3 + $0x68] sm:$0xff] %vm884, %v2004
      %2102 = vst.msk [vmem:[#allocation3 + $0x70] sm:$0xff] %vm884, %v2005
      %2103 = vst.msk [vmem:[#allocation3 + $0x78] sm:$0xff] %vm884, %v2006
      %2104 = vrot.lane.b32.xlu0 %v1993, 8
      %v2105 = vpop.permute.xlu0 %2104
      %2106 = vrot.lane.b32.xlu0 %v1994, 8
      %v2107 = vpop.permute.xlu0 %2106
      %2108 = vrot.lane.b32.xlu0 %v1995, 8
      %v2109 = vpop.permute.xlu0 %2108
      %2110 = vrot.lane.b32.xlu0 %v1996, 8
      %v2111 = vpop.permute.xlu0 %2110
      %2112 = vrot.lane.b32.xlu0 %v1997, 8
      %v2113 = vpop.permute.xlu0 %2112
      %2114 = vrot.lane.b32.xlu0 %v1998, 8
      %v2115 = vpop.permute.xlu0 %2114
      %2116 = vrot.lane.b32.xlu0 %v1999, 8
      %v2117 = vpop.permute.xlu0 %2116
      %2118 = vrot.lane.b32.xlu0 %v2000, 8
      %v2119 = vpop.permute.xlu0 %2118
      %2120 = vrot.lane.b32.xlu0 %v2001, 8
      %v2121 = vpop.permute.xlu0 %2120
      %2122 = vrot.lane.b32.xlu0 %v2002, 8
      %v2123 = vpop.permute.xlu0 %2122
      %2124 = vrot.lane.b32.xlu0 %v2003, 8
      %v2125 = vpop.permute.xlu0 %2124
      %2126 = vrot.lane.b32.xlu0 %v2004, 8
      %v2127 = vpop.permute.xlu0 %2126
      %2128 = vrot.lane.b32.xlu0 %v2005, 8
      %v2129 = vpop.permute.xlu0 %2128
      %2130 = vrot.lane.b32.xlu0 %v2006, 8
      %v2131 = vpop.permute.xlu0 %2130
      %2132 = vrot.lane.b32.xlu0 %v2007, 8
      %v2133 = vpop.permute.xlu0 %2132
      %2149 = vst.msk [vmem:[#allocation3] sm:$0xff] %vm961, %v2105
      %2150 = vst.msk [vmem:[#allocation3 + $0x8] sm:$0xff] %vm961, %v2107
      %2151 = vst.msk [vmem:[#allocation3 + $0x10] sm:$0xff] %vm961, %v2109
      %2152 = vst.msk [vmem:[#allocation3 + $0x18] sm:$0xff] %vm961, %v2111
      %2153 = vst.msk [vmem:[#allocation3 + $0x20] sm:$0xff] %vm961, %v2113
      %2154 = vst.msk [vmem:[#allocation3 + $0x28] sm:$0xff] %vm961, %v2115
      %2155 = vst.msk [vmem:[#allocation3 + $0x30] sm:$0xff] %vm961, %v2117
      %2156 = vst.msk [vmem:[#allocation3 + $0x38] sm:$0xff] %vm961, %v2119
      %2157 = vst.msk [vmem:[#allocation3 + $0x40] sm:$0xff] %vm961, %v2121
      %2158 = vst.msk [vmem:[#allocation3 + $0x48] sm:$0xff] %vm961, %v2123
      %2159 = vst.msk [vmem:[#allocation3 + $0x50] sm:$0xff] %vm961, %v2125
      %2160 = vst.msk [vmem:[#allocation3 + $0x58] sm:$0xff] %vm961, %v2127
      %2161 = vst.msk [vmem:[#allocation3 + $0x60] sm:$0xff] %vm961, %v2129
      %2162 = vst.msk [vmem:[#allocation3 + $0x68] sm:$0xff] %vm961, %v2131
      %2163 = vst.msk [vmem:[#allocation3 + $0x70] sm:$0xff] %vm961, %v2133
      %2164 = vst.msk [vmem:[#allocation3 + $0x78] sm:$0xff] %vm961, 0
      %v2165 = vld [vmem:[#allocation3] sm:$0xff]
      %v2166 = vld [vmem:[#allocation3 + $0x8] sm:$0xff]
      %v2167 = vld [vmem:[#allocation3 + $0x10] sm:$0xff]
      %v2168 = vld [vmem:[#allocation3 + $0x18] sm:$0xff]
      %v2169 = vld [vmem:[#allocation3 + $0x20] sm:$0xff]
      %v2170 = vld [vmem:[#allocation3 + $0x28] sm:$0xff]
      %v2171 = vld [vmem:[#allocation3 + $0x30] sm:$0xff]
      %v2172 = vld [vmem:[#allocation3 + $0x38] sm:$0xff]
      %v2173 = vld [vmem:[#allocation3 + $0x40] sm:$0xff]
      %v2174 = vld [vmem:[#allocation3 + $0x48] sm:$0xff]
      %v2175 = vld [vmem:[#allocation3 + $0x50] sm:$0xff]
      %v2176 = vld [vmem:[#allocation3 + $0x58] sm:$0xff]
      %v2177 = vld [vmem:[#allocation3 + $0x60] sm:$0xff]
      %v2178 = vld [vmem:[#allocation3 + $0x68] sm:$0xff]
      %v2179 = vld [vmem:[#allocation3 + $0x70] sm:$0xff]
      %v2180 = vld [vmem:[#allocation3 + $0x78] sm:$0xff]
      %v2181 = vld [vmem:[%s3] sm:$0xf]
      %v2182 = vld [vmem:[%s3 + $0x4] sm:$0x3]
      %v2185 = vunpack.c.l.b16 %v2181
      %v2186 = vunpack.c.l.b16 %v2182
      %v2187 = vpack.c.b16 %v2186, %v2185
      %v2189 = vsel %vm1001, %v2165, 0
      %v2192 = vsel %vm1001, %v2166, 0
      %v2195 = vsel %vm1001, %v2167, 0
      %v2198 = vsel %vm1001, %v2168, 0
      %v2201 = vsel %vm1001, %v2169, 0
      %v2204 = vsel %vm1001, %v2170, 0
      %v2207 = vsel %vm1001, %v2171, 0
      %v2210 = vsel %vm1001, %v2172, 0
      %v2213 = vsel %vm1001, %v2173, 0
      %v2216 = vsel %vm1001, %v2174, 0
      %v2219 = vsel %vm1001, %v2175, 0
      %v2222 = vsel %vm1001, %v2176, 0
      %v2225 = vsel %vm1001, %v2177, 0
      %v2228 = vsel %vm1001, %v2178, 0
      %v2231 = vsel %vm1001, %v2179, 0
      %v2234 = vsel %vm1001, %v2180, 0
      %v2237 = vsel %vm1050, %v2187, 0
      %2239 = vmatprep.subr.bf16.mxu0 0
      %2240 = vmatpush1.bf16.msra.mxu0 %v2237
      %2241 = vmatprep.subr.bf16.mxu0 0
      %2242 = vmatpush1.bf16.msra.mxu0 0
      %2243 = vmatprep.subr.bf16.mxu0 0
      %2244 = vmatpush1.bf16.msra.mxu0 0
      %2245 = vmatprep.subr.bf16.mxu0 0
      %2246 = vmatpush1.bf16.msra.mxu0 0
      %2247 = vmatprep.subr.bf16.mxu0 0
      %2248 = vmatpush1.bf16.msra.mxu0 0
      %2249 = vmatprep.subr.bf16.mxu0 0
      %2250 = vmatpush1.bf16.msra.mxu0 0
      %2251 = vmatprep.subr.bf16.mxu0 0
      %2252 = vmatpush1.bf16.msra.mxu0 0
      %2253 = vmatprep.subr.bf16.mxu0 0
      %2254 = vmatpush1.bf16.msra.mxu0 0
      %2255 = vmatprep.subr.bf16.mxu0 0
      %2256 = vmatpush1.bf16.msra.mxu0 0
      %2257 = vmatprep.subr.bf16.mxu0 0
      %2258 = vmatpush1.bf16.msra.mxu0 0
      %2259 = vmatprep.subr.bf16.mxu0 0
      %2260 = vmatpush1.bf16.msra.mxu0 0
      %2261 = vmatprep.subr.bf16.mxu0 0
      %2262 = vmatpush1.bf16.msra.mxu0 0
      %2263 = vmatprep.subr.bf16.mxu0 0
      %2264 = vmatpush1.bf16.msra.mxu0 0
      %2265 = vmatprep.subr.bf16.mxu0 0
      %2266 = vmatpush1.bf16.msra.mxu0 0
      %2267 = vmatprep.subr.bf16.mxu0 0
      %2268 = vmatpush1.bf16.msra.mxu0 0
      %2269 = vmatprep.subr.bf16.mxu0 0
      %2270 = vmatpush1.bf16.msra.mxu0 0
      %2271 = vmatprep.mubr.bf16.mxu0 0
      %2272 = vmatmul.mubr.bf16.gmra.mrb[0].mxu0 %v2189
      %v2273 = vpop.f32.mrb[0].mxu0
      %v2274 = vadd.f32 0.0, %v2273
      %v2275 = vpop.f32.mrb[0].mxu0
      %v2276 = vpop.f32.mrb[0].mxu0
      %v2277 = vadd.f32 0.0, %v2276
      %v2278 = vpop.f32.mrb[0].mxu0
      %2279 = vmatprep.mubr.bf16.mxu0 0
      %2280 = vmatmul.mubr.bf16.gmra.mrb[0].mxu0 %v2192
      %v2281 = vpop.f32.mrb[0].mxu0
      %v2282 = vadd.f32 0.0, %v2281
      %v2283 = vpop.f32.mrb[0].mxu0
      %v2284 = vpop.f32.mrb[0].mxu0
      %v2285 = vadd.f32 0.0, %v2284
      %v2286 = vpop.f32.mrb[0].mxu0
      %2287 = vmatprep.mubr.bf16.mxu0 0
      %2288 = vmatmul.mubr.bf16.gmra.mrb[0].mxu0 %v2195
      %v2289 = vpop.f32.mrb[0].mxu0
      %v2290 = vadd.f32 0.0, %v2289
      %v2291 = vpop.f32.mrb[0].mxu0
      %v2292 = vpop.f32.mrb[0].mxu0
      %v2293 = vadd.f32 0.0, %v2292
      %v2294 = vpop.f32.mrb[0].mxu0
      %2295 = vmatprep.mubr.bf16.mxu0 0
      %2296 = vmatmul.mubr.bf16.gmra.mrb[0].mxu0 %v2198
      %v2297 = vpop.f32.mrb[0].mxu0
      %v2298 = vadd.f32 0.0, %v2297
      %v2299 = vpop.f32.mrb[0].mxu0
      %v2300 = vpop.f32.mrb[0].mxu0
      %v2301 = vadd.f32 0.0, %v2300
      %v2302 = vpop.f32.mrb[0].mxu0
      %2303 = vmatprep.mubr.bf16.mxu0 0
      %2304 = vmatmul.mubr.bf16.gmra.mrb[0].mxu0 %v2201
      %v2305 = vpop.f32.mrb[0].mxu0
      %v2306 = vadd.f32 0.0, %v2305
      %v2307 = vpop.f32.mrb[0].mxu0
      %v2308 = vpop.f32.mrb[0].mxu0
      %v2309 = vadd.f32 0.0, %v2308
      %v2310 = vpop.f32.mrb[0].mxu0
      %2311 = vmatprep.mubr.bf16.mxu0 0
      %2312 = vmatmul.mubr.bf16.gmra.mrb[0].mxu0 %v2204
      %v2313 = vpop.f32.mrb[0].mxu0
      %v2314 = vadd.f32 0.0, %v2313
      %v2315 = vpop.f32.mrb[0].mxu0
      %v2316 = vpop.f32.mrb[0].mxu0
      %v2317 = vadd.f32 0.0, %v2316
      %v2318 = vpop.f32.mrb[0].mxu0
      %2319 = vmatprep.mubr.bf16.mxu0 0
      %2320 = vmatmul.mubr.bf16.gmra.mrb[0].mxu0 %v2207
      %v2321 = vpop.f32.mrb[0].mxu0
      %v2322 = vadd.f32 0.0, %v2321
      %v2323 = vpop.f32.mrb[0].mxu0
      %v2324 = vpop.f32.mrb[0].mxu0
      %v2325 = vadd.f32 0.0, %v2324
      %v2326 = vpop.f32.mrb[0].mxu0
      %2327 = vmatprep.mubr.bf16.mxu0 0
      %2328 = vmatmul.mubr.bf16.gmra.mrb[0].mxu0 %v2210
      %v2329 = vpop.f32.mrb[0].mxu0
      %v2330 = vadd.f32 0.0, %v2329
      %v2331 = vpop.f32.mrb[0].mxu0
      %v2332 = vpop.f32.mrb[0].mxu0
      %v2333 = vadd.f32 0.0, %v2332
      %v2334 = vpop.f32.mrb[0].mxu0
      %2335 = vmatprep.mubr.bf16.mxu0 0
      %2336 = vmatmul.mubr.bf16.gmra.mrb[0].mxu0 %v2213
      %v2337 = vpop.f32.mrb[0].mxu0
      %v2338 = vadd.f32 0.0, %v2337
      %v2339 = vpop.f32.mrb[0].mxu0
      %v2340 = vpop.f32.mrb[0].mxu0
      %v2341 = vadd.f32 0.0, %v2340
      %v2342 = vpop.f32.mrb[0].mxu0
      %2343 = vmatprep.mubr.bf16.mxu0 0
      %2344 = vmatmul.mubr.bf16.gmra.mrb[0].mxu0 %v2216
      %v2345 = vpop.f32.mrb[0].mxu0
      %v2346 = vadd.f32 0.0, %v2345
      %v2347 = vpop.f32.mrb[0].mxu0
      %v2348 = vpop.f32.mrb[0].mxu0
      %v2349 = vadd.f32 0.0, %v2348
      %v2350 = vpop.f32.mrb[0].mxu0
      %2351 = vmatprep.mubr.bf16.mxu0 0
      %2352 = vmatmul.mubr.bf16.gmra.mrb[0].mxu0 %v2219
      %v2353 = vpop.f32.mrb[0].mxu0
      %v2354 = vadd.f32 0.0, %v2353
      %v2355 = vpop.f32.mrb[0].mxu0
      %v2356 = vpop.f32.mrb[0].mxu0
      %v2357 = vadd.f32 0.0, %v2356
      %v2358 = vpop.f32.mrb[0].mxu0
      %2359 = vmatprep.mubr.bf16.mxu0 0
      %2360 = vmatmul.mubr.bf16.gmra.mrb[0].mxu0 %v2222
      %v2361 = vpop.f32.mrb[0].mxu0
      %v2362 = vadd.f32 0.0, %v2361
      %v2363 = vpop.f32.mrb[0].mxu0
      %v2364 = vpop.f32.mrb[0].mxu0
      %v2365 = vadd.f32 0.0, %v2364
      %v2366 = vpop.f32.mrb[0].mxu0
      %2367 = vmatprep.mubr.bf16.mxu0 0
      %2368 = vmatmul.mubr.bf16.gmra.mrb[0].mxu0 %v2225
      %v2369 = vpop.f32.mrb[0].mxu0
      %v2370 = vadd.f32 0.0, %v2369
      %v2371 = vpop.f32.mrb[0].mxu0
      %v2372 = vpop.f32.mrb[0].mxu0
      %v2373 = vadd.f32 0.0, %v2372
      %v2374 = vpop.f32.mrb[0].mxu0
      %2375 = vmatprep.mubr.bf16.mxu0 0
      %2376 = vmatmul.mubr.bf16.gmra.mrb[0].mxu0 %v2228
      %v2377 = vpop.f32.mrb[0].mxu0
      %v2378 = vadd.f32 0.0, %v2377
      %v2379 = vpop.f32.mrb[0].mxu0
      %v2380 = vpop.f32.mrb[0].mxu0
      %v2381 = vadd.f32 0.0, %v2380
      %v2382 = vpop.f32.mrb[0].mxu0
      %2383 = vmatprep.mubr.bf16.mxu0 0
      %2384 = vmatmul.mubr.bf16.gmra.mrb[0].mxu0 %v2231
      %v2385 = vpop.f32.mrb[0].mxu0
      %v2386 = vadd.f32 0.0, %v2385
      %v2387 = vpop.f32.mrb[0].mxu0
      %v2388 = vpop.f32.mrb[0].mxu0
      %v2389 = vadd.f32 0.0, %v2388
      %v2390 = vpop.f32.mrb[0].mxu0
      %2391 = vmatprep.mubr.bf16.mxu0 0
      %2392 = vmatmul.mubr.bf16.gmra.mrb[0].mxu0 %v2234
      %v2393 = vpop.f32.mrb[0].mxu0
      %v2394 = vadd.f32 0.0, %v2393
      %v2395 = vpop.f32.mrb[0].mxu0
      %v2396 = vpop.f32.mrb[0].mxu0
      %v2397 = vadd.f32 0.0, %v2396
      %v2398 = vpop.f32.mrb[0].mxu0
      %2399 = vdwg.mxu0
      %v2432 = vrot.slane %v2274, 7
      %v2433 = vrot.slane %v2277, 7
      %v2434 = vsel %vm1247, %v2432, %v2433
      %v2435 = vrot.slane %v2282, 7
      %v2436 = vsel %vm1247, %v2433, %v2435
      %v2437 = vrot.slane %v2285, 7
      %v2438 = vsel %vm1247, %v2435, %v2437
      %v2439 = vrot.slane %v2290, 7
      %v2440 = vsel %vm1247, %v2437, %v2439
      %v2441 = vrot.slane %v2293, 7
      %v2442 = vsel %vm1247, %v2439, %v2441
      %v2443 = vrot.slane %v2298, 7
      %v2444 = vsel %vm1247, %v2441, %v2443
      %v2445 = vrot.slane %v2301, 7
      %v2446 = vsel %vm1247, %v2443, %v2445
      %v2447 = vrot.slane %v2306, 7
      %v2448 = vsel %vm1247, %v2445, %v2447
      %v2449 = vrot.slane %v2309, 7
      %v2450 = vsel %vm1247, %v2447, %v2449
      %v2451 = vrot.slane %v2314, 7
      %v2452 = vsel %vm1247, %v2449, %v2451
      %v2453 = vrot.slane %v2317, 7
      %v2454 = vsel %vm1247, %v2451, %v2453
      %v2455 = vrot.slane %v2322, 7
      %v2456 = vsel %vm1247, %v2453, %v2455
      %v2457 = vrot.slane %v2325, 7
      %v2458 = vsel %vm1247, %v2455, %v2457
      %v2459 = vrot.slane %v2330, 7
      %v2460 = vsel %vm1247, %v2457, %v2459
      %v2461 = vrot.slane %v2333, 7
      %v2462 = vsel %vm1247, %v2459, %v2461
      %v2463 = vrot.slane %v2338, 7
      %v2464 = vsel %vm1247, %v2461, %v2463
      %v2465 = vrot.slane %v2341, 7
      %v2466 = vsel %vm1247, %v2463, %v2465
      %v2467 = vrot.slane %v2346, 7
      %v2468 = vsel %vm1247, %v2465, %v2467
      %v2469 = vrot.slane %v2349, 7
      %v2470 = vsel %vm1247, %v2467, %v2469
      %v2471 = vrot.slane %v2354, 7
      %v2472 = vsel %vm1247, %v2469, %v2471
      %v2473 = vrot.slane %v2357, 7
      %v2474 = vsel %vm1247, %v2471, %v2473
      %v2475 = vrot.slane %v2362, 7
      %v2476 = vsel %vm1247, %v2473, %v2475
      %v2477 = vrot.slane %v2365, 7
      %v2478 = vsel %vm1247, %v2475, %v2477
      %v2479 = vrot.slane %v2370, 7
      %v2480 = vsel %vm1247, %v2477, %v2479
      %v2481 = vrot.slane %v2373, 7
      %v2482 = vsel %vm1247, %v2479, %v2481
      %v2483 = vrot.slane %v2378, 7
      %v2484 = vsel %vm1247, %v2481, %v2483
      %v2485 = vrot.slane %v2381, 7
      %v2486 = vsel %vm1247, %v2483, %v2485
      %v2487 = vrot.slane %v2386, 7
      %v2488 = vsel %vm1247, %v2485, %v2487
      %v2489 = vrot.slane %v2389, 7
      %v2490 = vsel %vm1247, %v2487, %v2489
      %v2491 = vrot.slane %v2394, 7
      %v2492 = vsel %vm1247, %v2489, %v2491
      %v2493 = vrot.slane %v2397, 7
      %v2494 = vsel %vm1247, %v2491, %v2493
      %v2527 = vsel %vm1247, 0.0, %v2432
      %v2528 = vrot.slane %v2274, 1
      %v2529 = vrot.slane %v2277, 1
      %v2530 = vsel %vm1344, %v2528, %v2529
      %v2531 = vrot.slane %v2282, 1
      %v2532 = vsel %vm1344, %v2529, %v2531
      %v2533 = vrot.slane %v2285, 1
      %v2534 = vsel %vm1344, %v2531, %v2533
      %v2535 = vrot.slane %v2290, 1
      %v2536 = vsel %vm1344, %v2533, %v2535
      %v2537 = vrot.slane %v2293, 1
      %v2538 = vsel %vm1344, %v2535, %v2537
      %v2539 = vrot.slane %v2298, 1
      %v2540 = vsel %vm1344, %v2537, %v2539
      %v2541 = vrot.slane %v2301, 1
      %v2542 = vsel %vm1344, %v2539, %v2541
      %v2543 = vrot.slane %v2306, 1
      %v2544 = vsel %vm1344, %v2541, %v2543
      %v2545 = vrot.slane %v2309, 1
      %v2546 = vsel %vm1344, %v2543, %v2545
      %v2547 = vrot.slane %v2314, 1
      %v2548 = vsel %vm1344, %v2545, %v2547
      %v2549 = vrot.slane %v2317, 1
      %v2550 = vsel %vm1344, %v2547, %v2549
      %v2551 = vrot.slane %v2322, 1
      %v2552 = vsel %vm1344, %v2549, %v2551
      %v2553 = vrot.slane %v2325, 1
      %v2554 = vsel %vm1344, %v2551, %v2553
      %v2555 = vrot.slane %v2330, 1
      %v2556 = vsel %vm1344, %v2553, %v2555
      %v2557 = vrot.slane %v2333, 1
      %v2558 = vsel %vm1344, %v2555, %v2557
      %v2559 = vrot.slane %v2338, 1
      %v2560 = vsel %vm1344, %v2557, %v2559
      %v2561 = vrot.slane %v2341, 1
      %v2562 = vsel %vm1344, %v2559, %v2561
      %v2563 = vrot.slane %v2346, 1
      %v2564 = vsel %vm1344, %v2561, %v2563
      %v2565 = vrot.slane %v2349, 1
      %v2566 = vsel %vm1344, %v2563, %v2565
      %v2567 = vrot.slane %v2354, 1
      %v2568 = vsel %vm1344, %v2565, %v2567
      %v2569 = vrot.slane %v2357, 1
      %v2570 = vsel %vm1344, %v2567, %v2569
      %v2571 = vrot.slane %v2362, 1
      %v2572 = vsel %vm1344, %v2569, %v2571
      %v2573 = vrot.slane %v2365, 1
      %v2574 = vsel %vm1344, %v2571, %v2573
      %v2575 = vrot.slane %v2370, 1
      %v2576 = vsel %vm1344, %v2573, %v2575
      %v2577 = vrot.slane %v2373, 1
      %v2578 = vsel %vm1344, %v2575, %v2577
      %v2579 = vrot.slane %v2378, 1
      %v2580 = vsel %vm1344, %v2577, %v2579
      %v2581 = vrot.slane %v2381, 1
      %v2582 = vsel %vm1344, %v2579, %v2581
      %v2583 = vrot.slane %v2386, 1
      %v2584 = vsel %vm1344, %v2581, %v2583
      %v2585 = vrot.slane %v2389, 1
      %v2586 = vsel %vm1344, %v2583, %v2585
      %v2587 = vrot.slane %v2394, 1
      %v2588 = vsel %vm1344, %v2585, %v2587
      %v2589 = vrot.slane %v2397, 1
      %v2590 = vsel %vm1344, %v2587, %v2589
      %v2623 = vsel %vm1344, %v2589, 0.0
      %v2624 = vsel %vm1473, %v2527, 0.0
      %v2625 = vsel %vm1474, %v2434, 0.0
      %v2626 = vsel %vm1475, %v2436, 0.0
      %v2627 = vsel %vm1476, %v2438, 0.0
      %v2628 = vsel %vm1477, %v2440, 0.0
      %v2629 = vsel %vm1478, %v2442, 0.0
      %v2630 = vsel %vm1479, %v2444, 0.0
      %v2631 = vsel %vm1480, %v2446, 0.0
      %v2632 = vsel %vm1481, %v2448, 0.0
      %v2633 = vsel %vm1482, %v2450, 0.0
      %v2634 = vsel %vm1483, %v2452, 0.0
      %v2635 = vsel %vm1484, %v2454, 0.0
      %v2636 = vsel %vm1485, %v2456, 0.0
      %v2637 = vsel %vm1486, %v2458, 0.0
      %v2638 = vsel %vm1487, %v2460, 0.0
      %v2639 = vsel %vm1488, %v2462, 0.0
      %v2640 = vsel %vm1489, %v2464, 0.0
      %v2641 = vsel %vm1490, %v2466, 0.0
      %v2642 = vsel %vm1491, %v2468, 0.0
      %v2643 = vsel %vm1492, %v2470, 0.0
      %v2644 = vsel %vm1493, %v2472, 0.0
      %v2645 = vsel %vm1494, %v2474, 0.0
      %v2646 = vsel %vm1495, %v2476, 0.0
      %v2647 = vsel %vm1496, %v2478, 0.0
      %v2648 = vsel %vm1497, %v2480, 0.0
      %v2649 = vsel %vm1498, %v2482, 0.0
      %v2650 = vsel %vm1499, %v2484, 0.0
      %v2651 = vsel %vm1500, %v2486, 0.0
      %v2652 = vsel %vm1501, %v2488, 0.0
      %v2653 = vsel %vm1502, %v2490, 0.0
      %v2654 = vsel %vm1503, %v2492, 0.0
      %v2655 = vsel %vm1504, %v2494, 0.0
      %2656 = vrot.lane.b32.xlu0 %v2274, 124
      %v2657 = vpop.permute.xlu0 %2656
      %2658 = vrot.lane.b32.xlu0 %v2277, 124
      %v2659 = vpop.permute.xlu0 %2658
      %2660 = vrot.lane.b32.xlu0 %v2282, 124
      %v2661 = vpop.permute.xlu0 %2660
      %2662 = vrot.lane.b32.xlu0 %v2285, 124
      %v2663 = vpop.permute.xlu0 %2662
      %2664 = vrot.lane.b32.xlu0 %v2290, 124
      %v2665 = vpop.permute.xlu0 %2664
      %2666 = vrot.lane.b32.xlu0 %v2293, 124
      %v2667 = vpop.permute.xlu0 %2666
      %2668 = vrot.lane.b32.xlu0 %v2298, 124
      %v2669 = vpop.permute.xlu0 %2668
      %2670 = vrot.lane.b32.xlu0 %v2301, 124
      %v2671 = vpop.permute.xlu0 %2670
      %2672 = vrot.lane.b32.xlu0 %v2306, 124
      %v2673 = vpop.permute.xlu0 %2672
      %2674 = vrot.lane.b32.xlu0 %v2309, 124
      %v2675 = vpop.permute.xlu0 %2674
      %2676 = vrot.lane.b32.xlu0 %v2314, 124
      %v2677 = vpop.permute.xlu0 %2676
      %2678 = vrot.lane.b32.xlu0 %v2317, 124
      %v2679 = vpop.permute.xlu0 %2678
      %2680 = vrot.lane.b32.xlu0 %v2322, 124
      %v2681 = vpop.permute.xlu0 %2680
      %2682 = vrot.lane.b32.xlu0 %v2325, 124
      %v2683 = vpop.permute.xlu0 %2682
      %2684 = vrot.lane.b32.xlu0 %v2330, 124
      %v2685 = vpop.permute.xlu0 %2684
      %2686 = vrot.lane.b32.xlu0 %v2333, 124
      %v2687 = vpop.permute.xlu0 %2686
      %2688 = vrot.lane.b32.xlu0 %v2338, 124
      %v2689 = vpop.permute.xlu0 %2688
      %2690 = vrot.lane.b32.xlu0 %v2341, 124
      %v2691 = vpop.permute.xlu0 %2690
      %2692 = vrot.lane.b32.xlu0 %v2346, 124
      %v2693 = vpop.permute.xlu0 %2692
      %2694 = vrot.lane.b32.xlu0 %v2349, 124
      %v2695 = vpop.permute.xlu0 %2694
      %2696 = vrot.lane.b32.xlu0 %v2354, 124
      %v2697 = vpop.permute.xlu0 %2696
      %2698 = vrot.lane.b32.xlu0 %v2357, 124
      %v2699 = vpop.permute.xlu0 %2698
      %2700 = vrot.lane.b32.xlu0 %v2362, 124
      %v2701 = vpop.permute.xlu0 %2700
      %2702 = vrot.lane.b32.xlu0 %v2365, 124
      %v2703 = vpop.permute.xlu0 %2702
      %2704 = vrot.lane.b32.xlu0 %v2370, 124
      %v2705 = vpop.permute.xlu0 %2704
      %2706 = vrot.lane.b32.xlu0 %v2373, 124
      %v2707 = vpop.permute.xlu0 %2706
      %2708 = vrot.lane.b32.xlu0 %v2378, 124
      %v2709 = vpop.permute.xlu0 %2708
      %2710 = vrot.lane.b32.xlu0 %v2381, 124
      %v2711 = vpop.permute.xlu0 %2710
      %2712 = vrot.lane.b32.xlu0 %v2386, 124
      %v2713 = vpop.permute.xlu0 %2712
      %2714 = vrot.lane.b32.xlu0 %v2389, 124
      %v2715 = vpop.permute.xlu0 %2714
      %2716 = vrot.lane.b32.xlu0 %v2394, 124
      %v2717 = vpop.permute.xlu0 %2716
      %2718 = vrot.lane.b32.xlu0 %v2397, 124
      %v2719 = vpop.permute.xlu0 %2718
      %v2752 = vadd.f32 %v2624, %v2657
      %v2753 = vadd.f32 %v2625, %v2659
      %v2754 = vadd.f32 %v2626, %v2661
      %v2755 = vadd.f32 %v2627, %v2663
      %v2756 = vadd.f32 %v2628, %v2665
      %v2757 = vadd.f32 %v2629, %v2667
      %v2758 = vadd.f32 %v2630, %v2669
      %v2759 = vadd.f32 %v2631, %v2671
      %v2760 = vadd.f32 %v2632, %v2673
      %v2761 = vadd.f32 %v2633, %v2675
      %v2762 = vadd.f32 %v2634, %v2677
      %v2763 = vadd.f32 %v2635, %v2679
      %v2764 = vadd.f32 %v2636, %v2681
      %v2765 = vadd.f32 %v2637, %v2683
      %v2766 = vadd.f32 %v2638, %v2685
      %v2767 = vadd.f32 %v2639, %v2687
      %v2768 = vadd.f32 %v2640, %v2689
      %v2769 = vadd.f32 %v2641, %v2691
      %v2770 = vadd.f32 %v2642, %v2693
      %v2771 = vadd.f32 %v2643, %v2695
      %v2772 = vadd.f32 %v2644, %v2697
      %v2773 = vadd.f32 %v2645, %v2699
      %v2774 = vadd.f32 %v2646, %v2701
      %v2775 = vadd.f32 %v2647, %v2703
      %v2776 = vadd.f32 %v2648, %v2705
      %v2777 = vadd.f32 %v2649, %v2707
      %v2778 = vadd.f32 %v2650, %v2709
      %v2779 = vadd.f32 %v2651, %v2711
      %v2780 = vadd.f32 %v2652, %v2713
      %v2781 = vadd.f32 %v2653, %v2715
      %v2782 = vadd.f32 %v2654, %v2717
      %v2783 = vadd.f32 %v2655, %v2719
      %v2784 = vsel %vm1697, %v2530, 0.0
      %v2785 = vsel %vm1698, %v2532, 0.0
      %v2786 = vsel %vm1699, %v2534, 0.0
      %v2787 = vsel %vm1700, %v2536, 0.0
      %v2788 = vsel %vm1701, %v2538, 0.0
      %v2789 = vsel %vm1702, %v2540, 0.0
      %v2790 = vsel %vm1703, %v2542, 0.0
      %v2791 = vsel %vm1704, %v2544, 0.0
      %v2792 = vsel %vm1705, %v2546, 0.0
      %v2793 = vsel %vm1706, %v2548, 0.0
      %v2794 = vsel %vm1707, %v2550, 0.0
      %v2795 = vsel %vm1708, %v2552, 0.0
      %v2796 = vsel %vm1709, %v2554, 0.0
      %v2797 = vsel %vm1710, %v2556, 0.0
      %v2798 = vsel %vm1711, %v2558, 0.0
      %v2799 = vsel %vm1712, %v2560, 0.0
      %v2800 = vsel %vm1713, %v2562, 0.0
      %v2801 = vsel %vm1714, %v2564, 0.0
      %v2802 = vsel %vm1715, %v2566, 0.0
      %v2803 = vsel %vm1716, %v2568, 0.0
      %v2804 = vsel %vm1717, %v2570, 0.0
      %v2805 = vsel %vm1718, %v2572, 0.0
      %v2806 = vsel %vm1719, %v2574, 0.0
      %v2807 = vsel %vm1720, %v2576, 0.0
      %v2808 = vsel %vm1721, %v2578, 0.0
      %v2809 = vsel %vm1722, %v2580, 0.0
      %v2810 = vsel %vm1723, %v2582, 0.0
      %v2811 = vsel %vm1724, %v2584, 0.0
      %v2812 = vsel %vm1725, %v2586, 0.0
      %v2813 = vsel %vm1726, %v2588, 0.0
      %v2814 = vsel %vm1727, %v2590, 0.0
      %v2815 = vsel %vm1728, %v2623, 0.0
      %2848 = vrot.lane.b32.xlu0 %v2784, 120
      %v2849 = vpop.permute.xlu0 %2848
      %2850 = vrot.lane.b32.xlu0 %v2785, 120
      %v2851 = vpop.permute.xlu0 %2850
      %2852 = vrot.lane.b32.xlu0 %v2786, 120
      %v2853 = vpop.permute.xlu0 %2852
      %2854 = vrot.lane.b32.xlu0 %v2787, 120
      %v2855 = vpop.permute.xlu0 %2854
      %2856 = vrot.lane.b32.xlu0 %v2788, 120
      %v2857 = vpop.permute.xlu0 %2856
      %2858 = vrot.lane.b32.xlu0 %v2789, 120
      %v2859 = vpop.permute.xlu0 %2858
      %2860 = vrot.lane.b32.xlu0 %v2790, 120
      %v2861 = vpop.permute.xlu0 %2860
      %2862 = vrot.lane.b32.xlu0 %v2791, 120
      %v2863 = vpop.permute.xlu0 %2862
      %2864 = vrot.lane.b32.xlu0 %v2792, 120
      %v2865 = vpop.permute.xlu0 %2864
      %2866 = vrot.lane.b32.xlu0 %v2793, 120
      %v2867 = vpop.permute.xlu0 %2866
      %2868 = vrot.lane.b32.xlu0 %v2794, 120
      %v2869 = vpop.permute.xlu0 %2868
      %2870 = vrot.lane.b32.xlu0 %v2795, 120
      %v2871 = vpop.permute.xlu0 %2870
      %2872 = vrot.lane.b32.xlu0 %v2796, 120
      %v2873 = vpop.permute.xlu0 %2872
      %2874 = vrot.lane.b32.xlu0 %v2797, 120
      %v2875 = vpop.permute.xlu0 %2874
      %2876 = vrot.lane.b32.xlu0 %v2798, 120
      %v2877 = vpop.permute.xlu0 %2876
      %2878 = vrot.lane.b32.xlu0 %v2799, 120
      %v2879 = vpop.permute.xlu0 %2878
      %2880 = vrot.lane.b32.xlu0 %v2800, 120
      %v2881 = vpop.permute.xlu0 %2880
      %2882 = vrot.lane.b32.xlu0 %v2801, 120
      %v2883 = vpop.permute.xlu0 %2882
      %2884 = vrot.lane.b32.xlu0 %v2802, 120
      %v2885 = vpop.permute.xlu0 %2884
      %2886 = vrot.lane.b32.xlu0 %v2803, 120
      %v2887 = vpop.permute.xlu0 %2886
      %2888 = vrot.lane.b32.xlu0 %v2804, 120
      %v2889 = vpop.permute.xlu0 %2888
      %2890 = vrot.lane.b32.xlu0 %v2805, 120
      %v2891 = vpop.permute.xlu0 %2890
      %2892 = vrot.lane.b32.xlu0 %v2806, 120
      %v2893 = vpop.permute.xlu0 %2892
      %2894 = vrot.lane.b32.xlu0 %v2807, 120
      %v2895 = vpop.permute.xlu0 %2894
      %2896 = vrot.lane.b32.xlu0 %v2808, 120
      %v2897 = vpop.permute.xlu0 %2896
      %2898 = vrot.lane.b32.xlu0 %v2809, 120
      %v2899 = vpop.permute.xlu0 %2898
      %2900 = vrot.lane.b32.xlu0 %v2810, 120
      %v2901 = vpop.permute.xlu0 %2900
      %2902 = vrot.lane.b32.xlu0 %v2811, 120
      %v2903 = vpop.permute.xlu0 %2902
      %2904 = vrot.lane.b32.xlu0 %v2812, 120
      %v2905 = vpop.permute.xlu0 %2904
      %2906 = vrot.lane.b32.xlu0 %v2813, 120
      %v2907 = vpop.permute.xlu0 %2906
      %2908 = vrot.lane.b32.xlu0 %v2814, 120
      %v2909 = vpop.permute.xlu0 %2908
      %2910 = vrot.lane.b32.xlu0 %v2815, 120
      %v2911 = vpop.permute.xlu0 %2910
      %v2944 = vadd.f32 %v2752, %v2849
      %v2945 = vadd.f32 %v2753, %v2851
      %v2946 = vadd.f32 %v2754, %v2853
      %v2947 = vadd.f32 %v2755, %v2855
      %v2948 = vadd.f32 %v2756, %v2857
      %v2949 = vadd.f32 %v2757, %v2859
      %v2950 = vadd.f32 %v2758, %v2861
      %v2951 = vadd.f32 %v2759, %v2863
      %v2952 = vadd.f32 %v2760, %v2865
      %v2953 = vadd.f32 %v2761, %v2867
      %v2954 = vadd.f32 %v2762, %v2869
      %v2955 = vadd.f32 %v2763, %v2871
      %v2956 = vadd.f32 %v2764, %v2873
      %v2957 = vadd.f32 %v2765, %v2875
      %v2958 = vadd.f32 %v2766, %v2877
      %v2959 = vadd.f32 %v2767, %v2879
      %v2960 = vadd.f32 %v2768, %v2881
      %v2961 = vadd.f32 %v2769, %v2883
      %v2962 = vadd.f32 %v2770, %v2885
      %v2963 = vadd.f32 %v2771, %v2887
      %v2964 = vadd.f32 %v2772, %v2889
      %v2965 = vadd.f32 %v2773, %v2891
      %v2966 = vadd.f32 %v2774, %v2893
      %v2967 = vadd.f32 %v2775, %v2895
      %v2968 = vadd.f32 %v2776, %v2897
      %v2969 = vadd.f32 %v2777, %v2899
      %v2970 = vadd.f32 %v2778, %v2901
      %v2971 = vadd.f32 %v2779, %v2903
      %v2972 = vadd.f32 %v2780, %v2905
      %v2973 = vadd.f32 %v2781, %v2907
      %v2974 = vadd.f32 %v2782, %v2909
      %v2975 = vadd.f32 %v2783, %v2911
      %v2976 = vld [vmem:[%s4] sm:$0x1]
      %v2978 = vlaneseq
      %v2979 = vshrl.u32 %v2978, 7
      %v2980 = vsub.s32 0, %v2979
      %v2981 = vrot.slane %v2976, %v2980
      %v2983 = vadd.f32 %v2944, %v2981
      %v2984 = vadd.f32 %v2945, %v2981
      %v2985 = vadd.f32 %v2946, %v2981
      %v2986 = vadd.f32 %v2947, %v2981
      %v2987 = vadd.f32 %v2948, %v2981
      %v2988 = vadd.f32 %v2949, %v2981
      %v2989 = vadd.f32 %v2950, %v2981
      %v2990 = vadd.f32 %v2951, %v2981
      %v2991 = vadd.f32 %v2952, %v2981
      %v2992 = vadd.f32 %v2953, %v2981
      %v2993 = vadd.f32 %v2954, %v2981
      %v2994 = vadd.f32 %v2955, %v2981
      %v2995 = vadd.f32 %v2956, %v2981
      %v2996 = vadd.f32 %v2957, %v2981
      %v2997 = vadd.f32 %v2958, %v2981
      %v2998 = vadd.f32 %v2959, %v2981
      %v2999 = vadd.f32 %v2960, %v2981
      %v3000 = vadd.f32 %v2961, %v2981
      %v3001 = vadd.f32 %v2962, %v2981
      %v3002 = vadd.f32 %v2963, %v2981
      %v3003 = vadd.f32 %v2964, %v2981
      %v3004 = vadd.f32 %v2965, %v2981
      %v3005 = vadd.f32 %v2966, %v2981
      %v3006 = vadd.f32 %v2967, %v2981
      %v3007 = vadd.f32 %v2968, %v2981
      %v3008 = vadd.f32 %v2969, %v2981
      %v3009 = vadd.f32 %v2970, %v2981
      %v3010 = vadd.f32 %v2971, %v2981
      %v3011 = vadd.f32 %v2972, %v2981
      %v3012 = vadd.f32 %v2973, %v2981
      %v3013 = vadd.f32 %v2974, %v2981
      %v3014 = vadd.f32 %v2975, %v2981
      %v3015 = vunpack.c.l.bf16 %v226
      %v3016 = vunpack.c.l.bf16 %v227
      %v3017 = vunpack.c.l.bf16 %v228
      %v3018 = vunpack.c.l.bf16 %v229
      %v3019 = vunpack.c.l.bf16 %v230
      %v3020 = vunpack.c.l.bf16 %v231
      %v3021 = vunpack.c.l.bf16 %v232
      %v3022 = vunpack.c.l.bf16 %v233
      %v3023 = vunpack.c.l.bf16 %v234
      %v3024 = vunpack.c.l.bf16 %v235
      %v3025 = vunpack.c.l.bf16 %v236
      %v3026 = vunpack.c.l.bf16 %v237
      %v3027 = vunpack.c.l.bf16 %v238
      %v3028 = vunpack.c.l.bf16 %v239
      %v3029 = vunpack.c.l.bf16 %v240
      %v3030 = vunpack.c.l.bf16 %v241
      %v3031 = vunpack.c.l.bf16 %v242
      %v3032 = vunpack.c.l.bf16 %v243
      %v3033 = vunpack.c.l.bf16 %v244
      %v3034 = vunpack.c.l.bf16 %v245
      %v3035 = vunpack.c.l.bf16 %v246
      %v3036 = vunpack.c.l.bf16 %v247
      %v3037 = vunpack.c.l.bf16 %v248
      %v3038 = vunpack.c.l.bf16 %v249
      %v3039 = vunpack.c.l.bf16 %v250
      %v3040 = vunpack.c.l.bf16 %v251
      %v3041 = vunpack.c.l.bf16 %v252
      %v3042 = vunpack.c.l.bf16 %v253
      %v3043 = vunpack.c.l.bf16 %v254
      %v3044 = vunpack.c.l.bf16 %v255
      %v3045 = vunpack.c.l.bf16 %v256
      %v3046 = vunpack.c.l.bf16 %v257
      %v3047 = vadd.f32 %v2983, %v3015
      %v3048 = vadd.f32 %v2984, %v3016
      %v3049 = vadd.f32 %v2985, %v3017
      %v3050 = vadd.f32 %v2986, %v3018
      %v3051 = vadd.f32 %v2987, %v3019
      %v3052 = vadd.f32 %v2988, %v3020
      %v3053 = vadd.f32 %v2989, %v3021
      %v3054 = vadd.f32 %v2990, %v3022
      %v3055 = vadd.f32 %v2991, %v3023
      %v3056 = vadd.f32 %v2992, %v3024
      %v3057 = vadd.f32 %v2993, %v3025
      %v3058 = vadd.f32 %v2994, %v3026
      %v3059 = vadd.f32 %v2995, %v3027
      %v3060 = vadd.f32 %v2996, %v3028
      %v3061 = vadd.f32 %v2997, %v3029
      %v3062 = vadd.f32 %v2998, %v3030
      %v3063 = vadd.f32 %v2999, %v3031
      %v3064 = vadd.f32 %v3000, %v3032
      %v3065 = vadd.f32 %v3001, %v3033
      %v3066 = vadd.f32 %v3002, %v3034
      %v3067 = vadd.f32 %v3003, %v3035
      %v3068 = vadd.f32 %v3004, %v3036
      %v3069 = vadd.f32 %v3005, %v3037
      %v3070 = vadd.f32 %v3006, %v3038
      %v3071 = vadd.f32 %v3007, %v3039
      %v3072 = vadd.f32 %v3008, %v3040
      %v3073 = vadd.f32 %v3009, %v3041
      %v3074 = vadd.f32 %v3010, %v3042
      %v3075 = vadd.f32 %v3011, %v3043
      %v3076 = vadd.f32 %v3012, %v3044
      %v3077 = vadd.f32 %v3013, %v3045
      %v3078 = vadd.f32 %v3014, %v3046
      %v3079 = vmax.f32 %v3047, 0.0
      %v3080 = vmax.f32 %v3048, 0.0
      %v3081 = vmax.f32 %v3049, 0.0
      %v3082 = vmax.f32 %v3050, 0.0
      %v3083 = vmax.f32 %v3051, 0.0
      %v3084 = vmax.f32 %v3052, 0.0
      %v3085 = vmax.f32 %v3053, 0.0
      %v3086 = vmax.f32 %v3054, 0.0
      %v3087 = vmax.f32 %v3055, 0.0
      %v3088 = vmax.f32 %v3056, 0.0
      %v3089 = vmax.f32 %v3057, 0.0
      %v3090 = vmax.f32 %v3058, 0.0
      %v3091 = vmax.f32 %v3059, 0.0
      %v3092 = vmax.f32 %v3060, 0.0
      %v3093 = vmax.f32 %v3061, 0.0
      %v3094 = vmax.f32 %v3062, 0.0
      %v3095 = vmax.f32 %v3063, 0.0
      %v3096 = vmax.f32 %v3064, 0.0
      %v3097 = vmax.f32 %v3065, 0.0
      %v3098 = vmax.f32 %v3066, 0.0
      %v3099 = vmax.f32 %v3067, 0.0
      %v3100 = vmax.f32 %v3068, 0.0
      %v3101 = vmax.f32 %v3069, 0.0
      %v3102 = vmax.f32 %v3070, 0.0
      %v3103 = vmax.f32 %v3071, 0.0
      %v3104 = vmax.f32 %v3072, 0.0
      %v3105 = vmax.f32 %v3073, 0.0
      %v3106 = vmax.f32 %v3074, 0.0
      %v3107 = vmax.f32 %v3075, 0.0
      %v3108 = vmax.f32 %v3076, 0.0
      %v3109 = vmax.f32 %v3077, 0.0
      %v3110 = vmax.f32 %v3078, 0.0
      %v3111 = vpack.c.bf16 %v3080, %v3079
      %v3112 = vpack.c.bf16 %v3082, %v3081
      %v3113 = vpack.c.bf16 %v3084, %v3083
      %v3114 = vpack.c.bf16 %v3086, %v3085
      %v3115 = vpack.c.bf16 %v3088, %v3087
      %v3116 = vpack.c.bf16 %v3090, %v3089
      %v3117 = vpack.c.bf16 %v3092, %v3091
      %v3118 = vpack.c.bf16 %v3094, %v3093
      %v3119 = vpack.c.bf16 %v3096, %v3095
      %v3120 = vpack.c.bf16 %v3098, %v3097
      %v3121 = vpack.c.bf16 %v3100, %v3099
      %v3122 = vpack.c.bf16 %v3102, %v3101
      %v3123 = vpack.c.bf16 %v3104, %v3103
      %v3124 = vpack.c.bf16 %v3106, %v3105
      %v3125 = vpack.c.bf16 %v3108, %v3107
      %v3126 = vpack.c.bf16 %v3110, %v3109
      %v3143 = vunpack.c.l.b16 %v3111
      %v3144 = vunpack.c.h.b16 %v3111
      %v3145 = vunpack.c.l.b16 %v3112
      %v3146 = vunpack.c.h.b16 %v3112
      %v3147 = vunpack.c.l.b16 %v3113
      %v3148 = vunpack.c.h.b16 %v3113
      %v3149 = vunpack.c.l.b16 %v3114
      %v3150 = vunpack.c.h.b16 %v3114
      %v3151 = vunpack.c.l.b16 %v3115
      %v3152 = vunpack.c.h.b16 %v3115
      %v3153 = vunpack.c.l.b16 %v3116
      %v3154 = vunpack.c.h.b16 %v3116
      %v3155 = vunpack.c.l.b16 %v3117
      %v3156 = vunpack.c.h.b16 %v3117
      %v3157 = vunpack.c.l.b16 %v3118
      %v3158 = vunpack.c.h.b16 %v3118
      %v3159 = vunpack.c.l.b16 %v3119
      %v3160 = vunpack.c.h.b16 %v3119
      %v3161 = vunpack.c.l.b16 %v3120
      %v3162 = vunpack.c.h.b16 %v3120
      %v3163 = vunpack.c.l.b16 %v3121
      %v3164 = vunpack.c.h.b16 %v3121
      %v3165 = vunpack.c.l.b16 %v3122
      %v3166 = vunpack.c.h.b16 %v3122
      %v3167 = vunpack.c.l.b16 %v3123
      %v3168 = vunpack.c.h.b16 %v3123
      %v3169 = vunpack.c.l.b16 %v3124
      %v3170 = vunpack.c.h.b16 %v3124
      %v3171 = vunpack.c.l.b16 %v3125
      %v3172 = vunpack.c.h.b16 %v3125
      %v3173 = vunpack.c.l.b16 %v3126
      %v3174 = vunpack.c.h.b16 %v3126
      %v3175 = vpack.c.b16 %v3143, %v3143
      %v3176 = vpack.c.b16 %v3144, %v3144
      %v3177 = vpack.c.b16 %v3145, %v3145
      %v3178 = vpack.c.b16 %v3146, %v3146
      %v3179 = vpack.c.b16 %v3147, %v3147
      %v3180 = vpack.c.b16 %v3148, %v3148
      %v3181 = vpack.c.b16 %v3149, %v3149
      %v3182 = vpack.c.b16 %v3150, %v3150
      %v3183 = vpack.c.b16 %v3151, %v3151
      %v3184 = vpack.c.b16 %v3152, %v3152
      %v3185 = vpack.c.b16 %v3153, %v3153
      %v3186 = vpack.c.b16 %v3154, %v3154
      %v3187 = vpack.c.b16 %v3155, %v3155
      %v3188 = vpack.c.b16 %v3156, %v3156
      %v3189 = vpack.c.b16 %v3157, %v3157
      %v3190 = vpack.c.b16 %v3158, %v3158
      %v3191 = vpack.c.b16 %v3159, %v3159
      %v3192 = vpack.c.b16 %v3160, %v3160
      %v3193 = vpack.c.b16 %v3161, %v3161
      %v3194 = vpack.c.b16 %v3162, %v3162
      %v3195 = vpack.c.b16 %v3163, %v3163
      %v3196 = vpack.c.b16 %v3164, %v3164
      %v3197 = vpack.c.b16 %v3165, %v3165
      %v3198 = vpack.c.b16 %v3166, %v3166
      %v3199 = vpack.c.b16 %v3167, %v3167
      %v3200 = vpack.c.b16 %v3168, %v3168
      %v3201 = vpack.c.b16 %v3169, %v3169
      %v3202 = vpack.c.b16 %v3170, %v3170
      %v3203 = vpack.c.b16 %v3171, %v3171
      %v3204 = vpack.c.b16 %v3172, %v3172
      %v3205 = vpack.c.b16 %v3173, %v3173
      %v3206 = vpack.c.b16 %v3174, %v3174
      %vm3239 = vcmask 27648
      %3240 = vst.msk [vmem:[%s224] sm:$0xf] %vm3239, %v3175
      %3241 = vst.msk [vmem:[%s224 + $0x4] sm:$0xf] %vm3239, %v3176
      %3242 = vst.msk [vmem:[%s224 + $0x8] sm:$0xf] %vm3239, %v3177
      %3243 = vst.msk [vmem:[%s224 + $0xc] sm:$0xf] %vm3239, %v3178
      %3244 = vst.msk [vmem:[%s224 + $0x10] sm:$0xf] %vm3239, %v3179
      %3245 = vst.msk [vmem:[%s224 + $0x14] sm:$0xf] %vm3239, %v3180
      %3246 = vst.msk [vmem:[%s224 + $0x18] sm:$0xf] %vm3239, %v3181
      %3247 = vst.msk [vmem:[%s224 + $0x1c] sm:$0xf] %vm3239, %v3182
      %3248 = vst.msk [vmem:[%s224 + $0x20] sm:$0xf] %vm3239, %v3183
      %3249 = vst.msk [vmem:[%s224 + $0x24] sm:$0xf] %vm3239, %v3184
      %3250 = vst.msk [vmem:[%s224 + $0x28] sm:$0xf] %vm3239, %v3185
      %3251 = vst.msk [vmem:[%s224 + $0x2c] sm:$0xf] %vm3239, %v3186
      %3252 = vst.msk [vmem:[%s224 + $0x30] sm:$0xf] %vm3239, %v3187
      %3253 = vst.msk [vmem:[%s224 + $0x34] sm:$0xf] %vm3239, %v3188
      %3254 = vst.msk [vmem:[%s224 + $0x38] sm:$0xf] %vm3239, %v3189
      %3255 = vst.msk [vmem:[%s224 + $0x3c] sm:$0xf] %vm3239, %v3190
      %3256 = vst.msk [vmem:[%s224 + $0x40] sm:$0xf] %vm3239, %v3191
      %3257 = vst.msk [vmem:[%s224 + $0x44] sm:$0xf] %vm3239, %v3192
      %3258 = vst.msk [vmem:[%s224 + $0x48] sm:$0xf] %vm3239, %v3193
      %3259 = vst.msk [vmem:[%s224 + $0x4c] sm:$0xf] %vm3239, %v3194
      %3260 = vst.msk [vmem:[%s224 + $0x50] sm:$0xf] %vm3239, %v3195
      %3261 = vst.msk [vmem:[%s224 + $0x54] sm:$0xf] %vm3239, %v3196
      %3262 = vst.msk [vmem:[%s224 + $0x58] sm:$0xf] %vm3239, %v3197
      %3263 = vst.msk [vmem:[%s224 + $0x5c] sm:$0xf] %vm3239, %v3198
      %3264 = vst.msk [vmem:[%s224 + $0x60] sm:$0xf] %vm3239, %v3199
      %3265 = vst.msk [vmem:[%s224 + $0x64] sm:$0xf] %vm3239, %v3200
      %3266 = vst.msk [vmem:[%s224 + $0x68] sm:$0xf] %vm3239, %v3201
      %3267 = vst.msk [vmem:[%s224 + $0x6c] sm:$0xf] %vm3239, %v3202
      %3268 = vst.msk [vmem:[%s224 + $0x70] sm:$0xf] %vm3239, %v3203
      %3269 = vst.msk [vmem:[%s224 + $0x74] sm:$0xf] %vm3239, %v3204
      %3270 = vst.msk [vmem:[%s224 + $0x78] sm:$0xf] %vm3239, %v3205
      %3271 = vst.msk [vmem:[%s224 + $0x7c] sm:$0xf] %vm3239, %v3206
      %p3272 = scmp.lt.s32.totalorder %s16, 1
      %s3273 = scalar_select %p3272, %s16, 1
      %s3274 = smul.addr %s3273, 32
      %s3275 = smul.addr %s3274, 4
      %s3276 = scalar_lea.vmem %s5, %s3275
      // Predicated region
      $region41: #{tpu_custom_call.1} parent=39 // pred_check
        %p3277 = pneg %p144
      $region42: #{tpu_custom_call.1} parent=39 // pred_check_branch
        %3279 = sbr.rel (%p3277) target = $region44
      $region43: #{tpu_custom_call.1} parent=39 // pred_region
        _
      $region44: #{tpu_custom_call.1} parent=39 // pred_fallthru
        _
    $region40: #{tpu_custom_call.1} parent=5 // pred_fallthru
      _
    %p3280 = scmp.le.s32.totalorder 2, %s11
    // Predicated region
    $region45: #{tpu_custom_call.1} parent=5 // pred_check
      %p3281 = pneg %p3280
    $region46: #{tpu_custom_call.1} parent=5 // pred_check_branch
      %3283 = sbr.rel (%p3281) target = $region48
    $region47: #{tpu_custom_call.1} parent=5 // pred_region
      %s3284 = ssub.s32 %s11, 2
      // Predicated region
      $region49: #{tpu_custom_call.1} parent=47 // pred_check
        %p3285 = pneg %p150
      $region50: #{tpu_custom_call.1} parent=47 // pred_check_branch
        %3287 = sbr.rel (%p3285) target = $region52
      $region51: #{tpu_custom_call.1} parent=47 // pred_region
        %p3288 = scmp.lt.s32.totalorder %s17, 1
        %s3289 = scalar_select %p3288, %s17, 1
        %s3290 = smul.addr %s3289, 32
        %s3291 = smul.addr %s3290, 4
        %s3292 = scalar_lea.vmem %s5, %s3291
      $region52: #{tpu_custom_call.1} parent=47 // pred_fallthru
        _
    $region48: #{tpu_custom_call.1} parent=5 // pred_fallthru
      _
  $region6: #{tpu_custom_call.1} parent=0 // loop_footer
    %s15 = sadd.s32 1, %s11
  $region7: #{tpu_custom_call.1} parent=0 // loop_footer_branch
    %10 = sbr.rel target = $region3
  $region8: #{tpu_custom_call.1} parent=0 // loop_exit
    _

</llo_original>
